<compile_context>
chip_gen: v7x
topology: tpu7x:2x2x1
jax: 0.10.0
libtpu: 0.0.40
codegen_flags: <defaults>
</compile_context>

<pallas_src>
import math
import functools

import jax
import jax.numpy as jnp
from jax.experimental import pallas as pl
from jax.experimental.pallas import tpu as pltpu

# Fits v7x (64 MiB physical); can be raised to ~96 MiB on v5e/v6e (128 MiB).
_VMEM_LIMIT = 48 * 1024 * 1024


# ----------------------------- helpers -------------------------------------

def _sigmoid(v):
    return 1.0 / (1.0 + jnp.exp(-v))


def _softplus(v):
    # clamp before exp so the discarded branch never produces inf
    return jnp.where(v > 20.0, v, jnp.log(1.0 + jnp.exp(jnp.minimum(v, 20.0))))


def _largest_divisor(n, candidates):
    for c in candidates:
        if n % c == 0:
            return c
    return n


def _choose_tl(L):
    # sequence-chunk length: multiple of 8 (clean in-kernel reshapes), bounded
    # so per-chunk scan scratch (tl * d_state * di_tile) stays small.
    return _largest_divisor(L, (256, 128, 64, 32, 16, 8))


def _choose_bb(B, tl):
    # batch rows per grid step so the matmul M dim approaches the MXU tile
    # (128 on v5e, 256 on v6e/v7x) instead of M = tl.
    best = 1
    for cand in range(1, B + 1):
        if B % cand == 0 and cand * tl <= 512:
            best = cand
    return best


def _choose_di_tile(d_inner):
    # d_inner tile for the scan: keeps the fori_loop carry h
    # (d_state x di_tile, f32) in a handful of vregs instead of spilling.
    return _largest_divisor(d_inner, (512, 256, 128, 64, 32, 16, 8))


def _row_tile(m):
    for t in (256, 128, 64, 32, 16, 8):
        if m % t == 0 and m // t >= 2:     # prefer >=2 tiles (megacore)
            return t
    return _largest_divisor(m, (256, 128, 64, 32, 16, 8))


# ------------------- fused per-layer Mamba block kernel ---------------------

def _mamba_layer_kernel(hid_ref, res_ref, nw_ref, ipw_ref, cw_ref, cb_ref,
                        xpw_ref, dtw_ref, dtb_ref, At_ref, D_ref, opw_ref,
                        new_hid_ref, new_res_ref,
                        xpad_ref, xs_ref, y_ref, dA_ref, dBx_ref,
                        h_ref, tail_ref,
                        *, Bb, tl, d_model, d_inner, d_state, d_conv,
                        dt_rank, di_tile):
    """Grid step = (batch block bi, sequence chunk li). Everything in VMEM.

    hid/res/new_hid/new_res : (Bb, tl, d_model) f32
    weights : bf16 for matmul operands, f32 for elementwise parameters.
    carried scratch across the L axis: h_ref (Bb, d_state, d_inner),
    tail_ref (Bb, d_conv-1, d_inner).
    """
    M2 = Bb * tl
    li = pl.program_id(1)

    # ---- carried state (scan h, conv tail) reset at the first L-chunk ------
    @pl.when(li == 0)
    def _():
        h_ref[...] = jnp.zeros_like(h_ref)
        tail_ref[...] = jnp.zeros_like(tail_ref)

    # ---- residual add + RMSNorm --------------------------------------------
    resid = hid_ref[...] + res_ref[...]                    # (Bb, tl, d_model)
    new_res_ref[...] = resid
    res2 = resid.reshape(M2, d_model)
    var = jnp.mean(res2 * res2, axis=-1, keepdims=True)
    normed = res2 * jax.lax.rsqrt(var + 1e-5) * nw_ref[...]

    # ---- in_proj (bf16 MXU, f32 acc); split x / z in-kernel ----------------
    xz = jnp.dot(normed.astype(jnp.bfloat16), ipw_ref[...],
                 preferred_element_type=jnp.float32)       # (M2, 2*d_inner)
    x = xz[:, :d_inner]
    z = xz[:, d_inner:]

    # ---- causal depthwise conv1d + SiLU, carrying the tail across chunks ---
    for b in range(Bb):
        r0 = b * tl
        if d_conv > 1:
            xpad_ref[0:d_conv - 1, :] = tail_ref[b]
        xpad_ref[d_conv - 1:d_conv - 1 + tl, :] = x[r0:r0 + tl, :]
        xc = xpad_ref[0:tl, :] * cw_ref[0:1, :]
        for k in range(1, d_conv):                         # d_conv tiny/static
            xc = xc + xpad_ref[k:k + tl, :] * cw_ref[k:k + 1, :]
        xc = xc + cb_ref[...]
        xs_ref[r0:r0 + tl, :] = xc * _sigmoid(xc)          # SiLU
        if d_conv > 1:                                     # tail for next chunk
            tail_ref[b] = xpad_ref[tl:tl + d_conv - 1, :]
    xs = xs_ref[...]                                       # (M2, d_inner) f32

    # ---- x_proj -> (dt_low, B, C); dt_proj + softplus ----------------------
    xdb = jnp.dot(xs.astype(jnp.bfloat16), xpw_ref[...],
                  preferred_element_type=jnp.float32)
    dt_low = xdb[:, :dt_rank]
    Bm = xdb[:, dt_rank:dt_rank + d_state]                 # (M2, d_state)
    Cm = xdb[:, dt_rank + d_state:]                        # (M2, d_state)
    dt = _softplus(jnp.dot(dt_low.astype(jnp.bfloat16), dtw_ref[...],
                           preferred_element_type=jnp.float32)
                   + dtb_ref[...])                         # (M2, d_inner) f32

    At = At_ref[...]                                       # (d_state, d_inner)

    # ---- selective scan: per batch row block, per d_inner tile -------------
    for b in range(Bb):
        r0 = b * tl
        Bm_b = Bm[r0:r0 + tl, :]                           # (tl, d_state)
        Cm_b = Cm[r0:r0 + tl, :]                           # (tl, d_state)
        for di0 in range(0, d_inner, di_tile):
            dt_bt = dt[r0:r0 + tl, di0:di0 + di_tile]      # (tl, di_tile)
            dtx = dt_bt * xs[r0:r0 + tl, di0:di0 + di_tile]
            # hoist all EUP/broadcast work out of the recurrence
            dA_ref[...] = jnp.exp(
                dt_bt[:, None, :] * At[None, :, di0:di0 + di_tile])
            dBx_ref[...] = Bm_b[:, :, None] * dtx[:, None, :]

            def step(t, h):
                h = dA_ref[t] * h + dBx_ref[t]
                dBx_ref[t] = h          # dBx[t] is dead: reuse as h_t history
                return h

            h_last = jax.lax.fori_loop(
                0, tl, step, h_ref[b, :, di0:di0 + di_tile],
                unroll=8 if tl % 8 == 0 else 1)
            h_ref[b, :, di0:di0 + di_tile] = h_last        # carry across chunks
            # y_t = C_t . h_t, batched over t (VPU mult + sublane reduce)
            y_ref[r0:r0 + tl, di0:di0 + di_tile] = jnp.sum(
                Cm_b[:, :, None] * dBx_ref[...], axis=1)

    # ---- D skip, gate with SiLU(z), out_proj --------------------------------
    y = y_ref[...] + xs * D_ref[...]
    y = y * (z * _sigmoid(z))
    out = jnp.dot(y.astype(jnp.bfloat16), opw_ref[...],
                  preferred_element_type=jnp.float32)      # (M2, d_model)
    new_hid_ref[...] = out.reshape(Bb, tl, d_model)


def mamba_layer_pallas(hidden, residual, lp):
    B, L, d_model = hidden.shape
    d_inner = lp['in_proj_w'].shape[1] // 2
    d_state = lp['A_t'].shape[0]
    d_conv = lp['conv_w'].shape[0]
    dt_rank = lp['dtproj_w'].shape[0]

    tl = _choose_tl(L)
    Bb = _choose_bb(B, tl)
    di_tile = _choose_di_tile(d_inner)
    n_lchunks = L // tl
    if n_lchunks > 1:
        assert tl >= d_conv - 1, "chunk length must cover the conv tail"

    kernel = functools.partial(
        _mamba_layer_kernel, Bb=Bb, tl=tl, d_model=d_model, d_inner=d_inner,
        d_state=d_state, d_conv=d_conv, dt_rank=dt_rank, di_tile=di_tile)

    wmap = lambda bi, li: (0, 0)
    amap = lambda bi, li: (bi, li, 0)

    return pl.pallas_call(
        kernel,
        out_shape=(jax.ShapeDtypeStruct((B, L, d_model), jnp.float32),
                   jax.ShapeDtypeStruct((B, L, d_model), jnp.float32)),
        grid=(B // Bb, n_lchunks),
        in_specs=[
            pl.BlockSpec((Bb, tl, d_model), amap),                  # hidden
            pl.BlockSpec((Bb, tl, d_model), amap),                  # residual
            pl.BlockSpec((1, d_model), wmap),                       # norm_w
            pl.BlockSpec((d_model, 2 * d_inner), wmap),             # in_proj_w
            pl.BlockSpec((d_conv, d_inner), wmap),                  # conv_w
            pl.BlockSpec((1, d_inner), wmap),                       # conv_b
            pl.BlockSpec((d_inner, dt_rank + 2 * d_state), wmap),   # xproj_w
            pl.BlockSpec((dt_rank, d_inner), wmap),                 # dtproj_w
            pl.BlockSpec((1, d_inner), wmap),                       # dtproj_b
            pl.BlockSpec((d_state, d_inner), wmap),                 # A_t
            pl.BlockSpec((1, d_inner), wmap),                       # D
            pl.BlockSpec((d_inner, d_model), wmap),                 # out_proj_w
        ],
        out_specs=(pl.BlockSpec((Bb, tl, d_model), amap),
                   pl.BlockSpec((Bb, tl, d_model), amap)),
        scratch_shapes=[
            pltpu.VMEM((tl + d_conv - 1, d_inner), jnp.float32),    # conv pad
            pltpu.VMEM((Bb * tl, d_inner), jnp.float32),            # conv+SiLU
            pltpu.VMEM((Bb * tl, d_inner), jnp.float32),            # scan y
            pltpu.VMEM((tl, d_state, di_tile), jnp.float32),        # dA
            pltpu.VMEM((tl, d_state, di_tile), jnp.float32),        # dBx/h hist
            pltpu.VMEM((Bb, d_state, d_inner), jnp.float32),        # carried h
            pltpu.VMEM((Bb, max(d_conv - 1, 1), d_inner),
                       jnp.float32),                                # conv tail
        ],
        input_output_aliases={0: 0, 1: 1},      # reuse hidden/residual buffers
        compiler_params=pltpu.CompilerParams(
            dimension_semantics=("parallel", "arbitrary"),
            vmem_limit_bytes=_VMEM_LIMIT),
    )(hidden, residual, lp['norm_w'], lp['in_proj_w'], lp['conv_w'],
      lp['conv_b'], lp['xproj_w'], lp['dtproj_w'], lp['dtproj_b'],
      lp['A_t'], lp['D'], lp['out_proj_w'])


# ------------- fused final residual-add + RMSNorm + LM head -----------------

def _final_head_kernel(hid_ref, res_ref, nw_ref, w_ref, b_ref, o_ref,
                       xk_ref, acc_ref, *, tk, nk):
    k = pl.program_id(2)

    @pl.when(k == 0)
    def _():
        x = hid_ref[...] + res_ref[...]
        var = jnp.mean(x * x, axis=-1, keepdims=True)
        xn = (x * jax.lax.rsqrt(var + 1e-5) * nw_ref[...]).astype(jnp.bfloat16)
        for j in range(nk):                      # stash K-sliced normed rows
            xk_ref[j] = xn[:, j * tk:(j + 1) * tk]
        acc_ref[...] = jnp.zeros_like(acc_ref)

    acc_ref[...] += jnp.dot(xk_ref[k], w_ref[...],
                            preferred_element_type=jnp.float32)

    @pl.when(k == nk - 1)
    def _():
        o_ref[...] = acc_ref[...] + b_ref[...]


def final_head_pallas(hidden2d, residual2d, norm_f, head_w, head_b):
    M, d_model = hidden2d.shape
    n_pad = head_w.shape[1]                      # already a multiple of 128
    tm = _row_tile(M)
    tn = _largest_divisor(n_pad, (1024, 512, 256, 128))
    tk = _largest_divisor(d_model, (512, 256, 128))
    nk = d_model // tk

    kernel = functools.partial(_final_head_kernel, tk=tk, nk=nk)
    return pl.pallas_call(
        kernel,
        out_shape=jax.ShapeDtypeStruct((M, n_pad), jnp.float32),
        grid=(M // tm, n_pad // tn, nk),
        in_specs=[
            pl.BlockSpec((tm, d_model), lambda i, j, k: (i, 0)),
            pl.BlockSpec((tm, d_model), lambda i, j, k: (i, 0)),
            pl.BlockSpec((1, d_model), lambda i, j, k: (0, 0)),
            pl.BlockSpec((tk, tn), lambda i, j, k: (k, j)),          # bf16 W
            pl.BlockSpec((1, tn), lambda i, j, k: (0, j)),
        ],
        out_specs=pl.BlockSpec((tm, tn), lambda i, j, k: (i, j)),
        scratch_shapes=[
            pltpu.VMEM((nk, tm, tk), jnp.bfloat16),   # K-sliced normed rows
            pltpu.VMEM((tm, tn), jnp.float32),        # f32 accumulator
        ],
        compiler_params=pltpu.CompilerParams(
            dimension_semantics=("parallel", "parallel", "arbitrary"),
            vmem_limit_bytes=_VMEM_LIMIT),
    )(hidden2d, residual2d, norm_f, head_w, head_b)


# ----------------------------- parameters -----------------------------------

def init_params(key, vocab_in, vocab_out, d_model, d_state, n_layers,
                d_conv, expand):
    d_inner = expand * d_model
    dt_rank = math.ceil(d_model / 16)
    # FIX: 7 keys are consumed per layer (+2 global); add a spare for safety.
    keys = list(jax.random.split(key, 3 + 7 * n_layers))
    kit = iter(keys)

    def nrm(shape, scale):
        return jax.random.normal(next(kit), shape, jnp.float32) * scale

    def unif(shape, lim):
        return jax.random.uniform(next(kit), shape, jnp.float32, -lim, lim)

    # lane-pad the LM-head output dim to a multiple of 128 (lane-dense stores)
    n_pad = 128 * pl.cdiv(vocab_out, 128)
    head_w = nrm((d_model, vocab_out), 1.0 / math.sqrt(d_model))
    head_w = jnp.pad(head_w, ((0, 0), (0, n_pad - vocab_out)))
    head_b = jnp.zeros((1, n_pad), jnp.float32)

    params = {
        'embedding': nrm((vocab_in, d_model), 0.02),
        'head_w': head_w.astype(jnp.bfloat16),          # bf16 MXU operand
        'head_b': head_b,
        'norm_f': jnp.ones((1, d_model), jnp.float32),
        'layers': [],
    }

    dt_min, dt_max, dt_floor = 1e-3, 1e-1, 1e-4
    for _ in range(n_layers):
        in_proj_w = nrm((d_model, 2 * d_inner), 1.0 / math.sqrt(d_model))
        conv_w = unif((d_conv, d_inner), 1.0 / math.sqrt(d_conv))
        conv_b = unif((1, d_inner), 1.0 / math.sqrt(d_conv))
        xproj_w = nrm((d_inner, dt_rank + 2 * d_state),
                      1.0 / math.sqrt(d_inner))
        dtproj_w = unif((dt_rank, d_inner), dt_rank ** -0.5)
        # standard Mamba dt bias init (inverse softplus of log-uniform dt)
        u = jax.random.uniform(next(kit), (d_inner,), jnp.float32)
        dt = jnp.exp(u * (math.log(dt_max) - math.log(dt_min))
                     + math.log(dt_min))
        dt = jnp.maximum(dt, dt_floor)
        dtproj_b = (dt + jnp.log(-jnp.expm1(-dt))).reshape(1, d_inner)
        # A_log = log(arange(1, d_state+1)) broadcast; A = -exp(A_log)
        A = jnp.tile(jnp.arange(1, d_state + 1, dtype=jnp.float32)[None, :],
                     (d_inner, 1))
        A_t = (-A).T                                     # (d_state, d_inner)
        out_proj_w = nrm((d_inner, d_model), 1.0 / math.sqrt(d_inner))
        params['layers'].append(dict(
            norm_w=jnp.ones((1, d_model), jnp.float32),
            in_proj_w=in_proj_w.astype(jnp.bfloat16),
            conv_w=conv_w, conv_b=conv_b,
            xproj_w=xproj_w.astype(jnp.bfloat16),
            dtproj_w=dtproj_w.astype(jnp.bfloat16),
            dtproj_b=dtproj_b,
            A_t=A_t, D=jnp.ones((1, d_inner), jnp.float32),
            out_proj_w=out_proj_w.astype(jnp.bfloat16)))
    return params


# ----------------------------- forward pass ---------------------------------

@functools.partial(jax.jit, static_argnames=('vocab_out',))
def mamba_model_forward(params, input_ids, vocab_out):
    B, L = input_ids.shape
    d_model = params['embedding'].shape[1]

    # token-embedding gather kept in plain JAX (glue)
    hidden = jnp.take(params['embedding'], input_ids, axis=0)  # (B, L, d_model)
    residual = jnp.zeros_like(hidden)

    for lp in params['layers']:
        hidden, residual = mamba_layer_pallas(hidden, residual, lp)

    M = B * L
    logits = final_head_pallas(hidden.reshape(M, d_model),
                               residual.reshape(M, d_model),
                               params['norm_f'], params['head_w'],
                               params['head_b'])
    return logits[:, :vocab_out].reshape(B, L, vocab_out)


# --------------------------------- main --------------------------------------

if __name__ == "__main__":
    vocab_size_in, vocab_size_out = 16, 16
    d_channels, d_state, layers = 32, 4, 2
    d_conv, d_expand = 4, 2
    B, L = 2, 8

    key = jax.random.PRNGKey(0)
    pkey, dkey = jax.random.split(key)
    params = init_params(pkey, vocab_size_in, vocab_size_out, d_channels,
                         d_state, layers, d_conv, d_expand)
    input_ids = jax.random.randint(dkey, (B, L), 0, vocab_size_in,
                                   dtype=jnp.int32)

    out = mamba_model_forward(params, input_ids, vocab_size_out)
    out = jax.block_until_ready(out)
    assert out.shape == (B, L, vocab_size_out), out.shape
    assert bool(jnp.all(jnp.isfinite(out)))
    print("KERNEL_OK")
</pallas_src>

<mosaic_0001>
module attributes {stable_mosaic.version = 11 : i64} {
  func.func @_final_head_kernel(%arg0: i32, %arg1: i32, %arg2: i32, %arg3: memref<8x32xf32, #tpu.memory_space<vmem>>, %arg4: memref<8x32xf32, #tpu.memory_space<vmem>>, %arg5: memref<1x32xf32, #tpu.memory_space<vmem>>, %arg6: memref<32x128xbf16, #tpu.memory_space<vmem>>, %arg7: memref<1x128xf32, #tpu.memory_space<vmem>>, %arg8: memref<8x128xf32, #tpu.memory_space<vmem>>, %arg9: memref<1x8x32xbf16, #tpu.memory_space<vmem>>, %arg10: memref<8x128xf32, #tpu.memory_space<vmem>>) attributes {dimension_semantics = [#tpu.dimension_semantics<parallel>, #tpu.dimension_semantics<parallel>, #tpu.dimension_semantics<arbitrary>], iteration_bounds = array<i64: 2, 1, 1>, scalar_prefetch = 0 : i64, scratch_operands = 2 : i64, tpu.core_type = #tpu.core_type<tc>, window_params = [{transform_indices = @transform_0, window_bounds = array<i64: 8, 32>}, {transform_indices = @transform_1, window_bounds = array<i64: 8, 32>}, {pipeline_mode = #tpu.pipeline_mode<synchronous>, transform_indices = @transform_2, window_bounds = array<i64: 1, 32>}, {transform_indices = @transform_3, window_bounds = array<i64: 32, 128>}, {transform_indices = @transform_4, window_bounds = array<i64: 1, 128>}, {transform_indices = @transform_5, window_bounds = array<i64: 8, 128>}]} {
    %c0_i32 = arith.constant 0 : i32
    %0 = arith.cmpi eq, %arg2, %c0_i32 : i32
    %1 = arith.extui %0 : i1 to i32
    %c0_i32_0 = arith.constant 0 : i32
    %2 = arith.cmpi ne, %1, %c0_i32_0 : i32
    scf.if %2 {
      %c0_10 = arith.constant 0 : index
      %c0_11 = arith.constant 0 : index
      %14 = vector.load %arg3[%c0_10, %c0_11] : memref<8x32xf32, #tpu.memory_space<vmem>>, vector<8x32xf32>
      %c0_12 = arith.constant 0 : index
      %c0_13 = arith.constant 0 : index
      %15 = vector.load %arg4[%c0_12, %c0_13] : memref<8x32xf32, #tpu.memory_space<vmem>>, vector<8x32xf32>
      %16 = arith.addf %14, %15 : vector<8x32xf32>
      %17 = arith.mulf %16, %16 : vector<8x32xf32>
      %cst_14 = arith.constant dense<0.000000e+00> : vector<8xf32>
      %18 = vector.multi_reduction <add>, %17, %cst_14 [1] : vector<8x32xf32> to vector<8xf32>
      %19 = vector.shape_cast %18 : vector<8xf32> to vector<8x1xf32>
      %cst_15 = arith.constant 3.200000e+01 : f32
      %20 = vector.broadcast %cst_15 : f32 to vector<8x1xf32>
      %21 = arith.divf %19, %20 : vector<8x1xf32>
      %cst_16 = arith.constant 9.99999974E-6 : f32
      %22 = vector.broadcast %cst_16 : f32 to vector<8x1xf32>
      %23 = arith.addf %21, %22 : vector<8x1xf32>
      %24 = math.rsqrt %23 : vector<8x1xf32>
      %25 = vector.broadcast %24 : vector<8x1xf32> to vector<8x32xf32>
      %26 = arith.mulf %16, %25 : vector<8x32xf32>
      %c0_17 = arith.constant 0 : index
      %c0_18 = arith.constant 0 : index
      %27 = vector.load %arg5[%c0_17, %c0_18] : memref<1x32xf32, #tpu.memory_space<vmem>>, vector<1x32xf32>
      %28 = vector.broadcast %27 : vector<1x32xf32> to vector<8x32xf32>
      %29 = arith.mulf %26, %28 : vector<8x32xf32>
      %30 = arith.truncf %29 : vector<8x32xf32> to vector<8x32xbf16>
      %c0_19 = arith.constant 0 : index
      %c0_20 = arith.constant 0 : index
      %c0_21 = arith.constant 0 : index
      %31 = vector.load %arg9[%c0_19, %c0_20, %c0_21] : memref<1x8x32xbf16, #tpu.memory_space<vmem>>, vector<1x8x32xbf16>
      %32 = vector.shape_cast %31 : vector<1x8x32xbf16> to vector<8x32xbf16>
      %33 = vector.shape_cast %30 : vector<8x32xbf16> to vector<1x8x32xbf16>
      tpu.vector_store %arg9[%c0_19, %c0_20, %c0_21], %33 {strides = array<i32>} : memref<1x8x32xbf16, #tpu.memory_space<vmem>>, vector<1x8x32xbf16>,
      %cst_22 = arith.constant 0.000000e+00 : f32
      %34 = vector.broadcast %cst_22 : f32 to vector<8x128xf32>
      %c0_23 = arith.constant 0 : index
      %c0_24 = arith.constant 0 : index
      %35 = vector.load %arg10[%c0_23, %c0_24] : memref<8x128xf32, #tpu.memory_space<vmem>>, vector<8x128xf32>
      tpu.vector_store %arg10[%c0_23, %c0_24], %34 {strides = array<i32>} : memref<8x128xf32, #tpu.memory_space<vmem>>, vector<8x128xf32>,
    } else {
    }
    %c0 = arith.constant 0 : index
    %c0_1 = arith.constant 0 : index
    %3 = vector.load %arg10[%c0, %c0_1] : memref<8x128xf32, #tpu.memory_space<vmem>>, vector<8x128xf32>
    %4 = arith.index_cast %arg2 : i32 to index
    %c0_2 = arith.constant 0 : index
    %c0_3 = arith.constant 0 : index
    %5 = vector.load %arg9[%4, %c0_2, %c0_3] : memref<1x8x32xbf16, #tpu.memory_space<vmem>>, vector<1x8x32xbf16>
    %6 = vector.shape_cast %5 : vector<1x8x32xbf16> to vector<8x32xbf16>
    %c0_4 = arith.constant 0 : index
    %c0_5 = arith.constant 0 : index
    %7 = vector.load %arg6[%c0_4, %c0_5] : memref<32x128xbf16, #tpu.memory_space<vmem>>, vector<32x128xbf16>
    %cst = arith.constant dense<0.000000e+00> : vector<8x128xf32>
    %8 = tpu.matmul %6, %7, %cst {dimension_numbers = #tpu.dot_dimension_numbers<[1], [0], [0], [1], [0, 0, 1, 1], [], []>} : vector<8x32xbf16>, vector<32x128xbf16>, vector<8x128xf32> -> vector<8x128xf32>
    %9 = arith.addf %3, %8 : vector<8x128xf32>
    %c0_6 = arith.constant 0 : index
    %c0_7 = arith.constant 0 : index
    %10 = vector.load %arg10[%c0_6, %c0_7] : memref<8x128xf32, #tpu.memory_space<vmem>>, vector<8x128xf32>
    tpu.vector_store %arg10[%c0_6, %c0_7], %9 {strides = array<i32>} : memref<8x128xf32, #tpu.memory_space<vmem>>, vector<8x128xf32>,
    %c0_i32_8 = arith.constant 0 : i32
    %11 = arith.cmpi eq, %arg2, %c0_i32_8 : i32
    %12 = arith.extui %11 : i1 to i32
    %c0_i32_9 = arith.constant 0 : i32
    %13 = arith.cmpi ne, %12, %c0_i32_9 : i32
    scf.if %13 {
      %c0_10 = arith.constant 0 : index
      %c0_11 = arith.constant 0 : index
      %14 = vector.load %arg10[%c0_10, %c0_11] : memref<8x128xf32, #tpu.memory_space<vmem>>, vector<8x128xf32>
      %c0_12 = arith.constant 0 : index
      %c0_13 = arith.constant 0 : index
      %15 = vector.load %arg7[%c0_12, %c0_13] : memref<1x128xf32, #tpu.memory_space<vmem>>, vector<1x128xf32>
      %16 = vector.broadcast %15 : vector<1x128xf32> to vector<8x128xf32>
      %17 = arith.addf %14, %16 : vector<8x128xf32>
      %c0_14 = arith.constant 0 : index
      %c0_15 = arith.constant 0 : index
      %18 = vector.load %arg8[%c0_14, %c0_15] : memref<8x128xf32, #tpu.memory_space<vmem>>, vector<8x128xf32>
      tpu.vector_store %arg8[%c0_14, %c0_15], %17 {strides = array<i32>} : memref<8x128xf32, #tpu.memory_space<vmem>>, vector<8x128xf32>,
    } else {
    }
    return
  }
  func.func @transform_0(%arg0: i32, %arg1: i32, %arg2: i32) -> (i32, i32) {
    %c0_i32 = arith.constant 0 : i32
    %c0_i32_0 = arith.constant 0 : i32
    return %arg0, %c0_i32 : i32, i32
  }
  func.func @transform_1(%arg0: i32, %arg1: i32, %arg2: i32) -> (i32, i32) {
    %c0_i32 = arith.constant 0 : i32
    %c0_i32_0 = arith.constant 0 : i32
    return %arg0, %c0_i32 : i32, i32
  }
  func.func @transform_2(%arg0: i32, %arg1: i32, %arg2: i32) -> (i32, i32) {
    %c0_i32 = arith.constant 0 : i32
    %c0_i32_0 = arith.constant 0 : i32
    %c0_i32_1 = arith.constant 0 : i32
    return %c0_i32, %c0_i32_0 : i32, i32
  }
  func.func @transform_3(%arg0: i32, %arg1: i32, %arg2: i32) -> (i32, i32) {
    %c0_i32 = arith.constant 0 : i32
    return %arg2, %arg1 : i32, i32
  }
  func.func @transform_4(%arg0: i32, %arg1: i32, %arg2: i32) -> (i32, i32) {
    %c0_i32 = arith.constant 0 : i32
    %c0_i32_0 = arith.constant 0 : i32
    return %c0_i32, %arg1 : i32, i32
  }
  func.func @transform_5(%arg0: i32, %arg1: i32, %arg2: i32) -> (i32, i32) {
    %c0_i32 = arith.constant 0 : i32
    return %arg0, %arg1 : i32, i32
  }
}

module attributes {stable_mosaic.version = 11 : i64} {
  func.func @_mamba_layer_kernel(%arg0: i32, %arg1: i32, %arg2: memref<2x8x32xf32, #tpu.memory_space<vmem>>, %arg3: memref<2x8x32xf32, #tpu.memory_space<vmem>>, %arg4: memref<1x32xf32, #tpu.memory_space<vmem>>, %arg5: memref<32x128xbf16, #tpu.memory_space<vmem>>, %arg6: memref<4x64xf32, #tpu.memory_space<vmem>>, %arg7: memref<1x64xf32, #tpu.memory_space<vmem>>, %arg8: memref<64x10xbf16, #tpu.memory_space<vmem>>, %arg9: memref<2x64xbf16, #tpu.memory_space<vmem>>, %arg10: memref<1x64xf32, #tpu.memory_space<vmem>>, %arg11: memref<4x64xf32, #tpu.memory_space<vmem>>, %arg12: memref<1x64xf32, #tpu.memory_space<vmem>>, %arg13: memref<64x32xbf16, #tpu.memory_space<vmem>>, %arg14: memref<2x8x32xf32, #tpu.memory_space<vmem>>, %arg15: memref<2x8x32xf32, #tpu.memory_space<vmem>>, %arg16: memref<11x64xf32, #tpu.memory_space<vmem>>, %arg17: memref<16x64xf32, #tpu.memory_space<vmem>>, %arg18: memref<16x64xf32, #tpu.memory_space<vmem>>, %arg19: memref<8x4x64xf32, #tpu.memory_space<vmem>>, %arg20: memref<8x4x64xf32, #tpu.memory_space<vmem>>, %arg21: memref<2x4x64xf32, #tpu.memory_space<vmem>>, %arg22: memref<2x3x64xf32, #tpu.memory_space<vmem>>) attributes {dimension_semantics = [#tpu.dimension_semantics<parallel>, #tpu.dimension_semantics<arbitrary>], iteration_bounds = array<i64: 1, 1>, scalar_prefetch = 0 : i64, scratch_operands = 7 : i64, tpu.core_type = #tpu.core_type<tc>, window_params = [{transform_indices = @transform_0, window_bounds = array<i64: 2, 8, 32>}, {transform_indices = @transform_1, window_bounds = array<i64: 2, 8, 32>}, {pipeline_mode = #tpu.pipeline_mode<synchronous>, transform_indices = @transform_2, window_bounds = array<i64: 1, 32>}, {pipeline_mode = #tpu.pipeline_mode<synchronous>, transform_indices = @transform_3, window_bounds = array<i64: 32, 128>}, {pipeline_mode = #tpu.pipeline_mode<synchronous>, transform_indices = @transform_4, window_bounds = array<i64: 4, 64>}, {pipeline_mode = #tpu.pipeline_mode<synchronous>, transform_indices = @transform_5, window_bounds = array<i64: 1, 64>}, {pipeline_mode = #tpu.pipeline_mode<synchronous>, transform_indices = @transform_6, window_bounds = array<i64: 64, 10>}, {pipeline_mode = #tpu.pipeline_mode<synchronous>, transform_indices = @transform_7, window_bounds = array<i64: 2, 64>}, {pipeline_mode = #tpu.pipeline_mode<synchronous>, transform_indices = @transform_8, window_bounds = array<i64: 1, 64>}, {pipeline_mode = #tpu.pipeline_mode<synchronous>, transform_indices = @transform_9, window_bounds = array<i64: 4, 64>}, {pipeline_mode = #tpu.pipeline_mode<synchronous>, transform_indices = @transform_10, window_bounds = array<i64: 1, 64>}, {pipeline_mode = #tpu.pipeline_mode<synchronous>, transform_indices = @transform_11, window_bounds = array<i64: 64, 32>}, {transform_indices = @transform_12, window_bounds = array<i64: 2, 8, 32>}, {transform_indices = @transform_13, window_bounds = array<i64: 2, 8, 32>}]} {
    %c0_i32 = arith.constant 0 : i32
    %0 = arith.cmpi eq, %arg1, %c0_i32 : i32
    %1 = arith.extui %0 : i1 to i32
    %c0_i32_0 = arith.constant 0 : i32
    %2 = arith.cmpi ne, %1, %c0_i32_0 : i32
    scf.if %2 {
      %cst_252 = arith.constant 0.000000e+00 : f32
      %398 = vector.broadcast %cst_252 : f32 to vector<2x4x64xf32>
      %c0_253 = arith.constant 0 : index
      %c0_254 = arith.constant 0 : index
      %c0_255 = arith.constant 0 : index
      %399 = vector.load %arg21[%c0_253, %c0_254, %c0_255] : memref<2x4x64xf32, #tpu.memory_space<vmem>>, vector<2x4x64xf32>
      tpu.vector_store %arg21[%c0_253, %c0_254, %c0_255], %398 {strides = array<i32>} : memref<2x4x64xf32, #tpu.memory_space<vmem>>, vector<2x4x64xf32>,
      %cst_256 = arith.constant 0.000000e+00 : f32
      %400 = vector.broadcast %cst_256 : f32 to vector<2x3x64xf32>
      %c0_257 = arith.constant 0 : index
      %c0_258 = arith.constant 0 : index
      %c0_259 = arith.constant 0 : index
      %401 = vector.load %arg22[%c0_257, %c0_258, %c0_259] : memref<2x3x64xf32, #tpu.memory_space<vmem>>, vector<2x3x64xf32>
      tpu.vector_store %arg22[%c0_257, %c0_258, %c0_259], %400 {strides = array<i32>} : memref<2x3x64xf32, #tpu.memory_space<vmem>>, vector<2x3x64xf32>,
    } else {
    }
    %c0 = arith.constant 0 : index
    %c0_1 = arith.constant 0 : index
    %c0_2 = arith.constant 0 : index
    %3 = vector.load %arg2[%c0, %c0_1, %c0_2] : memref<2x8x32xf32, #tpu.memory_space<vmem>>, vector<2x8x32xf32>
    %c0_3 = arith.constant 0 : index
    %c0_4 = arith.constant 0 : index
    %c0_5 = arith.constant 0 : index
    %4 = vector.load %arg3[%c0_3, %c0_4, %c0_5] : memref<2x8x32xf32, #tpu.memory_space<vmem>>, vector<2x8x32xf32>
    %5 = arith.addf %3, %4 : vector<2x8x32xf32>
    %c0_6 = arith.constant 0 : index
    %c0_7 = arith.constant 0 : index
    %c0_8 = arith.constant 0 : index
    %6 = vector.load %arg15[%c0_6, %c0_7, %c0_8] : memref<2x8x32xf32, #tpu.memory_space<vmem>>, vector<2x8x32xf32>
    tpu.vector_store %arg15[%c0_6, %c0_7, %c0_8], %5 {strides = array<i32>} : memref<2x8x32xf32, #tpu.memory_space<vmem>>, vector<2x8x32xf32>,
    %7 = vector.shape_cast %5 : vector<2x8x32xf32> to vector<16x32xf32>
    %8 = arith.mulf %7, %7 : vector<16x32xf32>
    %cst = arith.constant dense<0.000000e+00> : vector<16xf32>
    %9 = vector.multi_reduction <add>, %8, %cst [1] : vector<16x32xf32> to vector<16xf32>
    %10 = vector.shape_cast %9 : vector<16xf32> to vector<16x1xf32>
    %cst_9 = arith.constant 3.200000e+01 : f32
    %11 = vector.broadcast %cst_9 : f32 to vector<16x1xf32>
    %12 = arith.divf %10, %11 : vector<16x1xf32>
    %cst_10 = arith.constant 9.99999974E-6 : f32
    %13 = vector.broadcast %cst_10 : f32 to vector<16x1xf32>
    %14 = arith.addf %12, %13 : vector<16x1xf32>
    %15 = math.rsqrt %14 : vector<16x1xf32>
    %16 = vector.broadcast %15 : vector<16x1xf32> to vector<16x32xf32>
    %17 = arith.mulf %7, %16 : vector<16x32xf32>
    %c0_11 = arith.constant 0 : index
    %c0_12 = arith.constant 0 : index
    %18 = vector.load %arg4[%c0_11, %c0_12] : memref<1x32xf32, #tpu.memory_space<vmem>>, vector<1x32xf32>
    %19 = vector.broadcast %18 : vector<1x32xf32> to vector<16x32xf32>
    %20 = arith.mulf %17, %19 : vector<16x32xf32>
    %21 = arith.truncf %20 : vector<16x32xf32> to vector<16x32xbf16>
    %c0_13 = arith.constant 0 : index
    %c0_14 = arith.constant 0 : index
    %22 = vector.load %arg5[%c0_13, %c0_14] : memref<32x128xbf16, #tpu.memory_space<vmem>>, vector<32x128xbf16>
    %cst_15 = arith.constant dense<0.000000e+00> : vector<16x128xf32>
    %23 = tpu.matmul %21, %22, %cst_15 {dimension_numbers = #tpu.dot_dimension_numbers<[1], [0], [0], [1], [0, 0, 1, 1], [], []>} : vector<16x32xbf16>, vector<32x128xbf16>, vector<16x128xf32> -> vector<16x128xf32>
    %24 = vector.extract_strided_slice %23 {offsets = [0, 0], sizes = [16, 64], strides = [1, 1]} : vector<16x128xf32> to vector<16x64xf32>
    %25 = vector.extract_strided_slice %23 {offsets = [0, 64], sizes = [16, 64], strides = [1, 1]} : vector<16x128xf32> to vector<16x64xf32>
    %c0_16 = arith.constant 0 : index
    %c0_17 = arith.constant 0 : index
    %c0_18 = arith.constant 0 : index
    %26 = vector.load %arg22[%c0_16, %c0_17, %c0_18] : memref<2x3x64xf32, #tpu.memory_space<vmem>>, vector<1x3x64xf32>
    %27 = vector.shape_cast %26 : vector<1x3x64xf32> to vector<3x64xf32>
    %c0_19 = arith.constant 0 : index
    %c0_20 = arith.constant 0 : index
    %28 = vector.load %arg16[%c0_19, %c0_20] : memref<11x64xf32, #tpu.memory_space<vmem>>, vector<3x64xf32>
    tpu.vector_store %arg16[%c0_19, %c0_20], %27 {strides = array<i32>} : memref<11x64xf32, #tpu.memory_space<vmem>>, vector<3x64xf32>,
    %29 = vector.extract_strided_slice %24 {offsets = [0, 0], sizes = [8, 64], strides = [1, 1]} : vector<16x64xf32> to vector<8x64xf32>
    %c3 = arith.constant 3 : index
    %c0_21 = arith.constant 0 : index
    %30 = vector.load %arg16[%c3, %c0_21] : memref<11x64xf32, #tpu.memory_space<vmem>>, vector<8x64xf32>
    tpu.vector_store %arg16[%c3, %c0_21], %29 {strides = array<i32>} : memref<11x64xf32, #tpu.memory_space<vmem>>, vector<8x64xf32>,
    %c0_22 = arith.constant 0 : index
    %c0_23 = arith.constant 0 : index
    %31 = vector.load %arg16[%c0_22, %c0_23] : memref<11x64xf32, #tpu.memory_space<vmem>>, vector<8x64xf32>
    %c0_24 = arith.constant 0 : index
    %c0_25 = arith.constant 0 : index
    %32 = vector.load %arg6[%c0_24, %c0_25] : memref<4x64xf32, #tpu.memory_space<vmem>>, vector<1x64xf32>
    %33 = vector.broadcast %32 : vector<1x64xf32> to vector<8x64xf32>
    %34 = arith.mulf %31, %33 : vector<8x64xf32>
    %c1 = arith.constant 1 : index
    %c0_26 = arith.constant 0 : index
    %35 = vector.load %arg16[%c1, %c0_26] : memref<11x64xf32, #tpu.memory_space<vmem>>, vector<8x64xf32>
    %c1_27 = arith.constant 1 : index
    %c0_28 = arith.constant 0 : index
    %36 = vector.load %arg6[%c1_27, %c0_28] : memref<4x64xf32, #tpu.memory_space<vmem>>, vector<1x64xf32>
    %37 = vector.broadcast %36 : vector<1x64xf32> to vector<8x64xf32>
    %38 = arith.mulf %35, %37 : vector<8x64xf32>
    %39 = arith.addf %34, %38 : vector<8x64xf32>
    %c2 = arith.constant 2 : index
    %c0_29 = arith.constant 0 : index
    %40 = vector.load %arg16[%c2, %c0_29] : memref<11x64xf32, #tpu.memory_space<vmem>>, vector<8x64xf32>
    %c2_30 = arith.constant 2 : index
    %c0_31 = arith.constant 0 : index
    %41 = vector.load %arg6[%c2_30, %c0_31] : memref<4x64xf32, #tpu.memory_space<vmem>>, vector<1x64xf32>
    %42 = vector.broadcast %41 : vector<1x64xf32> to vector<8x64xf32>
    %43 = arith.mulf %40, %42 : vector<8x64xf32>
    %44 = arith.addf %39, %43 : vector<8x64xf32>
    %c3_32 = arith.constant 3 : index
    %c0_33 = arith.constant 0 : index
    %45 = vector.load %arg16[%c3_32, %c0_33] : memref<11x64xf32, #tpu.memory_space<vmem>>, vector<8x64xf32>
    %c3_34 = arith.constant 3 : index
    %c0_35 = arith.constant 0 : index
    %46 = vector.load %arg6[%c3_34, %c0_35] : memref<4x64xf32, #tpu.memory_space<vmem>>, vector<1x64xf32>
    %47 = vector.broadcast %46 : vector<1x64xf32> to vector<8x64xf32>
    %48 = arith.mulf %45, %47 : vector<8x64xf32>
    %49 = arith.addf %44, %48 : vector<8x64xf32>
    %c0_36 = arith.constant 0 : index
    %c0_37 = arith.constant 0 : index
    %50 = vector.load %arg7[%c0_36, %c0_37] : memref<1x64xf32, #tpu.memory_space<vmem>>, vector<1x64xf32>
    %51 = vector.broadcast %50 : vector<1x64xf32> to vector<8x64xf32>
    %52 = arith.addf %49, %51 : vector<8x64xf32>
    %cst_38 = arith.constant 0.000000e+00 : f32
    %53 = vector.broadcast %cst_38 : f32 to vector<8x64xf32>
    %54 = arith.subf %53, %52 : vector<8x64xf32>
    %55 = math.exp %54 : vector<8x64xf32>
    %cst_39 = arith.constant 1.000000e+00 : f32
    %56 = vector.broadcast %cst_39 : f32 to vector<8x64xf32>
    %57 = arith.addf %56, %55 : vector<8x64xf32>
    %cst_40 = arith.constant 1.000000e+00 : f32
    %58 = vector.broadcast %cst_40 : f32 to vector<8x64xf32>
    %59 = arith.divf %58, %57 : vector<8x64xf32>
    %60 = arith.mulf %52, %59 : vector<8x64xf32>
    %c0_41 = arith.constant 0 : index
    %c0_42 = arith.constant 0 : index
    %61 = vector.load %arg17[%c0_41, %c0_42] : memref<16x64xf32, #tpu.memory_space<vmem>>, vector<8x64xf32>
    tpu.vector_store %arg17[%c0_41, %c0_42], %60 {strides = array<i32>} : memref<16x64xf32, #tpu.memory_space<vmem>>, vector<8x64xf32>,
    %c8 = arith.constant 8 : index
    %c0_43 = arith.constant 0 : index
    %62 = vector.load %arg16[%c8, %c0_43] : memref<11x64xf32, #tpu.memory_space<vmem>>, vector<3x64xf32>
    %c0_44 = arith.constant 0 : index
    %c0_45 = arith.constant 0 : index
    %c0_46 = arith.constant 0 : index
    %63 = vector.load %arg22[%c0_44, %c0_45, %c0_46] : memref<2x3x64xf32, #tpu.memory_space<vmem>>, vector<1x3x64xf32>
    %64 = vector.shape_cast %63 : vector<1x3x64xf32> to vector<3x64xf32>
    %65 = vector.shape_cast %62 : vector<3x64xf32> to vector<1x3x64xf32>
    tpu.vector_store %arg22[%c0_44, %c0_45, %c0_46], %65 {strides = array<i32>} : memref<2x3x64xf32, #tpu.memory_space<vmem>>, vector<1x3x64xf32>,
    %c1_47 = arith.constant 1 : index
    %c0_48 = arith.constant 0 : index
    %c0_49 = arith.constant 0 : index
    %66 = vector.load %arg22[%c1_47, %c0_48, %c0_49] : memref<2x3x64xf32, #tpu.memory_space<vmem>>, vector<1x3x64xf32>
    %67 = vector.shape_cast %66 : vector<1x3x64xf32> to vector<3x64xf32>
    %c0_50 = arith.constant 0 : index
    %c0_51 = arith.constant 0 : index
    %68 = vector.load %arg16[%c0_50, %c0_51] : memref<11x64xf32, #tpu.memory_space<vmem>>, vector<3x64xf32>
    tpu.vector_store %arg16[%c0_50, %c0_51], %67 {strides = array<i32>} : memref<11x64xf32, #tpu.memory_space<vmem>>, vector<3x64xf32>,
    %69 = vector.extract_strided_slice %24 {offsets = [8, 0], sizes = [8, 64], strides = [1, 1]} : vector<16x64xf32> to vector<8x64xf32>
    %c3_52 = arith.constant 3 : index
    %c0_53 = arith.constant 0 : index
    %70 = vector.load %arg16[%c3_52, %c0_53] : memref<11x64xf32, #tpu.memory_space<vmem>>, vector<8x64xf32>
    tpu.vector_store %arg16[%c3_52, %c0_53], %69 {strides = array<i32>} : memref<11x64xf32, #tpu.memory_space<vmem>>, vector<8x64xf32>,
    %c0_54 = arith.constant 0 : index
    %c0_55 = arith.constant 0 : index
    %71 = vector.load %arg16[%c0_54, %c0_55] : memref<11x64xf32, #tpu.memory_space<vmem>>, vector<8x64xf32>
    %c0_56 = arith.constant 0 : index
    %c0_57 = arith.constant 0 : index
    %72 = vector.load %arg6[%c0_56, %c0_57] : memref<4x64xf32, #tpu.memory_space<vmem>>, vector<1x64xf32>
    %73 = vector.broadcast %72 : vector<1x64xf32> to vector<8x64xf32>
    %74 = arith.mulf %71, %73 : vector<8x64xf32>
    %c1_58 = arith.constant 1 : index
    %c0_59 = arith.constant 0 : index
    %75 = vector.load %arg16[%c1_58, %c0_59] : memref<11x64xf32, #tpu.memory_space<vmem>>, vector<8x64xf32>
    %c1_60 = arith.constant 1 : index
    %c0_61 = arith.constant 0 : index
    %76 = vector.load %arg6[%c1_60, %c0_61] : memref<4x64xf32, #tpu.memory_space<vmem>>, vector<1x64xf32>
    %77 = vector.broadcast %76 : vector<1x64xf32> to vector<8x64xf32>
    %78 = arith.mulf %75, %77 : vector<8x64xf32>
    %79 = arith.addf %74, %78 : vector<8x64xf32>
    %c2_62 = arith.constant 2 : index
    %c0_63 = arith.constant 0 : index
    %80 = vector.load %arg16[%c2_62, %c0_63] : memref<11x64xf32, #tpu.memory_space<vmem>>, vector<8x64xf32>
    %c2_64 = arith.constant 2 : index
    %c0_65 = arith.constant 0 : index
    %81 = vector.load %arg6[%c2_64, %c0_65] : memref<4x64xf32, #tpu.memory_space<vmem>>, vector<1x64xf32>
    %82 = vector.broadcast %81 : vector<1x64xf32> to vector<8x64xf32>
    %83 = arith.mulf %80, %82 : vector<8x64xf32>
    %84 = arith.addf %79, %83 : vector<8x64xf32>
    %c3_66 = arith.constant 3 : index
    %c0_67 = arith.constant 0 : index
    %85 = vector.load %arg16[%c3_66, %c0_67] : memref<11x64xf32, #tpu.memory_space<vmem>>, vector<8x64xf32>
    %c3_68 = arith.constant 3 : index
    %c0_69 = arith.constant 0 : index
    %86 = vector.load %arg6[%c3_68, %c0_69] : memref<4x64xf32, #tpu.memory_space<vmem>>, vector<1x64xf32>
    %87 = vector.broadcast %86 : vector<1x64xf32> to vector<8x64xf32>
    %88 = arith.mulf %85, %87 : vector<8x64xf32>
    %89 = arith.addf %84, %88 : vector<8x64xf32>
    %c0_70 = arith.constant 0 : index
    %c0_71 = arith.constant 0 : index
    %90 = vector.load %arg7[%c0_70, %c0_71] : memref<1x64xf32, #tpu.memory_space<vmem>>, vector<1x64xf32>
    %91 = vector.broadcast %90 : vector<1x64xf32> to vector<8x64xf32>
    %92 = arith.addf %89, %91 : vector<8x64xf32>
    %cst_72 = arith.constant 0.000000e+00 : f32
    %93 = vector.broadcast %cst_72 : f32 to vector<8x64xf32>
    %94 = arith.subf %93, %92 : vector<8x64xf32>
    %95 = math.exp %94 : vector<8x64xf32>
    %cst_73 = arith.constant 1.000000e+00 : f32
    %96 = vector.broadcast %cst_73 : f32 to vector<8x64xf32>
    %97 = arith.addf %96, %95 : vector<8x64xf32>
    %cst_74 = arith.constant 1.000000e+00 : f32
    %98 = vector.broadcast %cst_74 : f32 to vector<8x64xf32>
    %99 = arith.divf %98, %97 : vector<8x64xf32>
    %100 = arith.mulf %92, %99 : vector<8x64xf32>
    %c8_75 = arith.constant 8 : index
    %c0_76 = arith.constant 0 : index
    %101 = vector.load %arg17[%c8_75, %c0_76] : memref<16x64xf32, #tpu.memory_space<vmem>>, vector<8x64xf32>
    tpu.vector_store %arg17[%c8_75, %c0_76], %100 {strides = array<i32>} : memref<16x64xf32, #tpu.memory_space<vmem>>, vector<8x64xf32>,
    %c8_77 = arith.constant 8 : index
    %c0_78 = arith.constant 0 : index
    %102 = vector.load %arg16[%c8_77, %c0_78] : memref<11x64xf32, #tpu.memory_space<vmem>>, vector<3x64xf32>
    %c1_79 = arith.constant 1 : index
    %c0_80 = arith.constant 0 : index
    %c0_81 = arith.constant 0 : index
    %103 = vector.load %arg22[%c1_79, %c0_80, %c0_81] : memref<2x3x64xf32, #tpu.memory_space<vmem>>, vector<1x3x64xf32>
    %104 = vector.shape_cast %103 : vector<1x3x64xf32> to vector<3x64xf32>
    %105 = vector.shape_cast %102 : vector<3x64xf32> to vector<1x3x64xf32>
    tpu.vector_store %arg22[%c1_79, %c0_80, %c0_81], %105 {strides = array<i32>} : memref<2x3x64xf32, #tpu.memory_space<vmem>>, vector<1x3x64xf32>,
    %c0_82 = arith.constant 0 : index
    %c0_83 = arith.constant 0 : index
    %106 = vector.load %arg17[%c0_82, %c0_83] : memref<16x64xf32, #tpu.memory_space<vmem>>, vector<16x64xf32>
    %107 = arith.truncf %106 : vector<16x64xf32> to vector<16x64xbf16>
    %c0_84 = arith.constant 0 : index
    %c0_85 = arith.constant 0 : index
    %108 = vector.load %arg8[%c0_84, %c0_85] : memref<64x10xbf16, #tpu.memory_space<vmem>>, vector<64x10xbf16>
    %cst_86 = arith.constant dense<0.000000e+00> : vector<16x10xf32>
    %109 = tpu.matmul %107, %108, %cst_86 {dimension_numbers = #tpu.dot_dimension_numbers<[1], [0], [0], [1], [0, 0, 1, 1], [], []>} : vector<16x64xbf16>, vector<64x10xbf16>, vector<16x10xf32> -> vector<16x10xf32>
    %110 = vector.extract_strided_slice %109 {offsets = [0, 0], sizes = [16, 2], strides = [1, 1]} : vector<16x10xf32> to vector<16x2xf32>
    %111 = vector.extract_strided_slice %109 {offsets = [0, 2], sizes = [16, 4], strides = [1, 1]} : vector<16x10xf32> to vector<16x4xf32>
    %112 = vector.extract_strided_slice %109 {offsets = [0, 6], sizes = [16, 4], strides = [1, 1]} : vector<16x10xf32> to vector<16x4xf32>
    %113 = arith.truncf %110 : vector<16x2xf32> to vector<16x2xbf16>
    %c0_87 = arith.constant 0 : index
    %c0_88 = arith.constant 0 : index
    %114 = vector.load %arg9[%c0_87, %c0_88] : memref<2x64xbf16, #tpu.memory_space<vmem>>, vector<2x64xbf16>
    %cst_89 = arith.constant dense<0.000000e+00> : vector<16x64xf32>
    %115 = tpu.matmul %113, %114, %cst_89 {dimension_numbers = #tpu.dot_dimension_numbers<[1], [0], [0], [1], [0, 0, 1, 1], [], []>} : vector<16x2xbf16>, vector<2x64xbf16>, vector<16x64xf32> -> vector<16x64xf32>
    %c0_90 = arith.constant 0 : index
    %c0_91 = arith.constant 0 : index
    %116 = vector.load %arg10[%c0_90, %c0_91] : memref<1x64xf32, #tpu.memory_space<vmem>>, vector<1x64xf32>
    %117 = vector.broadcast %116 : vector<1x64xf32> to vector<16x64xf32>
    %118 = arith.addf %115, %117 : vector<16x64xf32>
    %cst_92 = arith.constant 2.000000e+01 : f32
    %119 = vector.broadcast %cst_92 : f32 to vector<16x64xf32>
    %120 = arith.cmpf ogt, %118, %119 : vector<16x64xf32>
    %cst_93 = arith.constant 2.000000e+01 : f32
    %121 = vector.broadcast %cst_93 : f32 to vector<16x64xf32>
    %122 = arith.minimumf %118, %121 : vector<16x64xf32>
    %123 = math.exp %122 : vector<16x64xf32>
    %cst_94 = arith.constant 1.000000e+00 : f32
    %124 = vector.broadcast %cst_94 : f32 to vector<16x64xf32>
    %125 = arith.addf %124, %123 : vector<16x64xf32>
    %126 = math.log %125 : vector<16x64xf32>
    %127 = arith.select %120, %118, %126 : vector<16x64xi1>, vector<16x64xf32>
    %c0_95 = arith.constant 0 : index
    %c0_96 = arith.constant 0 : index
    %128 = vector.load %arg11[%c0_95, %c0_96] : memref<4x64xf32, #tpu.memory_space<vmem>>, vector<4x64xf32>
    %129 = vector.extract_strided_slice %111 {offsets = [0, 0], sizes = [8, 4], strides = [1, 1]} : vector<16x4xf32> to vector<8x4xf32>
    %130 = vector.extract_strided_slice %112 {offsets = [0, 0], sizes = [8, 4], strides = [1, 1]} : vector<16x4xf32> to vector<8x4xf32>
    %131 = vector.extract_strided_slice %127 {offsets = [0, 0], sizes = [8, 64], strides = [1, 1]} : vector<16x64xf32> to vector<8x64xf32>
    %132 = vector.extract_strided_slice %106 {offsets = [0, 0], sizes = [8, 64], strides = [1, 1]} : vector<16x64xf32> to vector<8x64xf32>
    %133 = arith.mulf %131, %132 : vector<8x64xf32>
    %134 = vector.shape_cast %131 : vector<8x64xf32> to vector<8x1x64xf32>
    %135 = vector.shape_cast %128 : vector<4x64xf32> to vector<1x4x64xf32>
    %136 = vector.broadcast %134 : vector<8x1x64xf32> to vector<8x4x64xf32>
    %137 = vector.broadcast %135 : vector<1x4x64xf32> to vector<8x4x64xf32>
    %138 = arith.mulf %136, %137 : vector<8x4x64xf32>
    %139 = math.exp %138 : vector<8x4x64xf32>
    %c0_97 = arith.constant 0 : index
    %c0_98 = arith.constant 0 : index
    %c0_99 = arith.constant 0 : index
    %140 = vector.load %arg19[%c0_97, %c0_98, %c0_99] : memref<8x4x64xf32, #tpu.memory_space<vmem>>, vector<8x4x64xf32>
    tpu.vector_store %arg19[%c0_97, %c0_98, %c0_99], %139 {strides = array<i32>} : memref<8x4x64xf32, #tpu.memory_space<vmem>>, vector<8x4x64xf32>,
    %141 = vector.shape_cast %129 : vector<8x4xf32> to vector<8x4x1xf32>
    %142 = vector.shape_cast %133 : vector<8x64xf32> to vector<8x1x64xf32>
    %143 = vector.broadcast %141 : vector<8x4x1xf32> to vector<8x4x64xf32>
    %144 = vector.broadcast %142 : vector<8x1x64xf32> to vector<8x4x64xf32>
    %145 = arith.mulf %143, %144 : vector<8x4x64xf32>
    %c0_100 = arith.constant 0 : index
    %c0_101 = arith.constant 0 : index
    %c0_102 = arith.constant 0 : index
    %146 = vector.load %arg20[%c0_100, %c0_101, %c0_102] : memref<8x4x64xf32, #tpu.memory_space<vmem>>, vector<8x4x64xf32>
    tpu.vector_store %arg20[%c0_100, %c0_101, %c0_102], %145 {strides = array<i32>} : memref<8x4x64xf32, #tpu.memory_space<vmem>>, vector<8x4x64xf32>,
    %c0_103 = arith.constant 0 : index
    %c0_104 = arith.constant 0 : index
    %c0_105 = arith.constant 0 : index
    %147 = vector.load %arg21[%c0_103, %c0_104, %c0_105] : memref<2x4x64xf32, #tpu.memory_space<vmem>>, vector<1x4x64xf32>
    %148 = vector.shape_cast %147 : vector<1x4x64xf32> to vector<4x64xf32>
    %c0_i32_106 = arith.constant 0 : i32
    %149 = arith.index_cast %c0_i32_106 : i32 to index
    %c0_107 = arith.constant 0 : index
    %c0_108 = arith.constant 0 : index
    %150 = vector.load %arg19[%149, %c0_107, %c0_108] : memref<8x4x64xf32, #tpu.memory_space<vmem>>, vector<1x4x64xf32>
    %151 = vector.shape_cast %150 : vector<1x4x64xf32> to vector<4x64xf32>
    %152 = arith.mulf %151, %148 : vector<4x64xf32>
    %153 = arith.index_cast %c0_i32_106 : i32 to index
    %c0_109 = arith.constant 0 : index
    %c0_110 = arith.constant 0 : index
    %154 = vector.load %arg20[%153, %c0_109, %c0_110] : memref<8x4x64xf32, #tpu.memory_space<vmem>>, vector<1x4x64xf32>
    %155 = vector.shape_cast %154 : vector<1x4x64xf32> to vector<4x64xf32>
    %156 = arith.addf %152, %155 : vector<4x64xf32>
    %157 = arith.index_cast %c0_i32_106 : i32 to index
    %c0_111 = arith.constant 0 : index
    %c0_112 = arith.constant 0 : index
    %158 = vector.load %arg20[%157, %c0_111, %c0_112] : memref<8x4x64xf32, #tpu.memory_space<vmem>>, vector<1x4x64xf32>
    %159 = vector.shape_cast %158 : vector<1x4x64xf32> to vector<4x64xf32>
    %160 = vector.shape_cast %156 : vector<4x64xf32> to vector<1x4x64xf32>
    tpu.vector_store %arg20[%157, %c0_111, %c0_112], %160 {strides = array<i32>} : memref<8x4x64xf32, #tpu.memory_space<vmem>>, vector<1x4x64xf32>,
    %c1_i32 = arith.constant 1 : i32
    %161 = arith.index_cast %c1_i32 : i32 to index
    %c0_113 = arith.constant 0 : index
    %c0_114 = arith.constant 0 : index
    %162 = vector.load %arg19[%161, %c0_113, %c0_114] : memref<8x4x64xf32, #tpu.memory_space<vmem>>, vector<1x4x64xf32>
    %163 = vector.shape_cast %162 : vector<1x4x64xf32> to vector<4x64xf32>
    %164 = arith.mulf %163, %156 : vector<4x64xf32>
    %165 = arith.index_cast %c1_i32 : i32 to index
    %c0_115 = arith.constant 0 : index
    %c0_116 = arith.constant 0 : index
    %166 = vector.load %arg20[%165, %c0_115, %c0_116] : memref<8x4x64xf32, #tpu.memory_space<vmem>>, vector<1x4x64xf32>
    %167 = vector.shape_cast %166 : vector<1x4x64xf32> to vector<4x64xf32>
    %168 = arith.addf %164, %167 : vector<4x64xf32>
    %169 = arith.index_cast %c1_i32 : i32 to index
    %c0_117 = arith.constant 0 : index
    %c0_118 = arith.constant 0 : index
    %170 = vector.load %arg20[%169, %c0_117, %c0_118] : memref<8x4x64xf32, #tpu.memory_space<vmem>>, vector<1x4x64xf32>
    %171 = vector.shape_cast %170 : vector<1x4x64xf32> to vector<4x64xf32>
    %172 = vector.shape_cast %168 : vector<4x64xf32> to vector<1x4x64xf32>
    tpu.vector_store %arg20[%169, %c0_117, %c0_118], %172 {strides = array<i32>} : memref<8x4x64xf32, #tpu.memory_space<vmem>>, vector<1x4x64xf32>,
    %c2_i32 = arith.constant 2 : i32
    %173 = arith.index_cast %c2_i32 : i32 to index
    %c0_119 = arith.constant 0 : index
    %c0_120 = arith.constant 0 : index
    %174 = vector.load %arg19[%173, %c0_119, %c0_120] : memref<8x4x64xf32, #tpu.memory_space<vmem>>, vector<1x4x64xf32>
    %175 = vector.shape_cast %174 : vector<1x4x64xf32> to vector<4x64xf32>
    %176 = arith.mulf %175, %168 : vector<4x64xf32>
    %177 = arith.index_cast %c2_i32 : i32 to index
    %c0_121 = arith.constant 0 : index
    %c0_122 = arith.constant 0 : index
    %178 = vector.load %arg20[%177, %c0_121, %c0_122] : memref<8x4x64xf32, #tpu.memory_space<vmem>>, vector<1x4x64xf32>
    %179 = vector.shape_cast %178 : vector<1x4x64xf32> to vector<4x64xf32>
    %180 = arith.addf %176, %179 : vector<4x64xf32>
    %181 = arith.index_cast %c2_i32 : i32 to index
    %c0_123 = arith.constant 0 : index
    %c0_124 = arith.constant 0 : index
    %182 = vector.load %arg20[%181, %c0_123, %c0_124] : memref<8x4x64xf32, #tpu.memory_space<vmem>>, vector<1x4x64xf32>
    %183 = vector.shape_cast %182 : vector<1x4x64xf32> to vector<4x64xf32>
    %184 = vector.shape_cast %180 : vector<4x64xf32> to vector<1x4x64xf32>
    tpu.vector_store %arg20[%181, %c0_123, %c0_124], %184 {strides = array<i32>} : memref<8x4x64xf32, #tpu.memory_space<vmem>>, vector<1x4x64xf32>,
    %c3_i32 = arith.constant 3 : i32
    %185 = arith.index_cast %c3_i32 : i32 to index
    %c0_125 = arith.constant 0 : index
    %c0_126 = arith.constant 0 : index
    %186 = vector.load %arg19[%185, %c0_125, %c0_126] : memref<8x4x64xf32, #tpu.memory_space<vmem>>, vector<1x4x64xf32>
    %187 = vector.shape_cast %186 : vector<1x4x64xf32> to vector<4x64xf32>
    %188 = arith.mulf %187, %180 : vector<4x64xf32>
    %189 = arith.index_cast %c3_i32 : i32 to index
    %c0_127 = arith.constant 0 : index
    %c0_128 = arith.constant 0 : index
    %190 = vector.load %arg20[%189, %c0_127, %c0_128] : memref<8x4x64xf32, #tpu.memory_space<vmem>>, vector<1x4x64xf32>
    %191 = vector.shape_cast %190 : vector<1x4x64xf32> to vector<4x64xf32>
    %192 = arith.addf %188, %191 : vector<4x64xf32>
    %193 = arith.index_cast %c3_i32 : i32 to index
    %c0_129 = arith.constant 0 : index
    %c0_130 = arith.constant 0 : index
    %194 = vector.load %arg20[%193, %c0_129, %c0_130] : memref<8x4x64xf32, #tpu.memory_space<vmem>>, vector<1x4x64xf32>
    %195 = vector.shape_cast %194 : vector<1x4x64xf32> to vector<4x64xf32>
    %196 = vector.shape_cast %192 : vector<4x64xf32> to vector<1x4x64xf32>
    tpu.vector_store %arg20[%193, %c0_129, %c0_130], %196 {strides = array<i32>} : memref<8x4x64xf32, #tpu.memory_space<vmem>>, vector<1x4x64xf32>,
    %c4_i32 = arith.constant 4 : i32
    %197 = arith.index_cast %c4_i32 : i32 to index
    %c0_131 = arith.constant 0 : index
    %c0_132 = arith.constant 0 : index
    %198 = vector.load %arg19[%197, %c0_131, %c0_132] : memref<8x4x64xf32, #tpu.memory_space<vmem>>, vector<1x4x64xf32>
    %199 = vector.shape_cast %198 : vector<1x4x64xf32> to vector<4x64xf32>
    %200 = arith.mulf %199, %192 : vector<4x64xf32>
    %201 = arith.index_cast %c4_i32 : i32 to index
    %c0_133 = arith.constant 0 : index
    %c0_134 = arith.constant 0 : index
    %202 = vector.load %arg20[%201, %c0_133, %c0_134] : memref<8x4x64xf32, #tpu.memory_space<vmem>>, vector<1x4x64xf32>
    %203 = vector.shape_cast %202 : vector<1x4x64xf32> to vector<4x64xf32>
    %204 = arith.addf %200, %203 : vector<4x64xf32>
    %205 = arith.index_cast %c4_i32 : i32 to index
    %c0_135 = arith.constant 0 : index
    %c0_136 = arith.constant 0 : index
    %206 = vector.load %arg20[%205, %c0_135, %c0_136] : memref<8x4x64xf32, #tpu.memory_space<vmem>>, vector<1x4x64xf32>
    %207 = vector.shape_cast %206 : vector<1x4x64xf32> to vector<4x64xf32>
    %208 = vector.shape_cast %204 : vector<4x64xf32> to vector<1x4x64xf32>
    tpu.vector_store %arg20[%205, %c0_135, %c0_136], %208 {strides = array<i32>} : memref<8x4x64xf32, #tpu.memory_space<vmem>>, vector<1x4x64xf32>,
    %c5_i32 = arith.constant 5 : i32
    %209 = arith.index_cast %c5_i32 : i32 to index
    %c0_137 = arith.constant 0 : index
    %c0_138 = arith.constant 0 : index
    %210 = vector.load %arg19[%209, %c0_137, %c0_138] : memref<8x4x64xf32, #tpu.memory_space<vmem>>, vector<1x4x64xf32>
    %211 = vector.shape_cast %210 : vector<1x4x64xf32> to vector<4x64xf32>
    %212 = arith.mulf %211, %204 : vector<4x64xf32>
    %213 = arith.index_cast %c5_i32 : i32 to index
    %c0_139 = arith.constant 0 : index
    %c0_140 = arith.constant 0 : index
    %214 = vector.load %arg20[%213, %c0_139, %c0_140] : memref<8x4x64xf32, #tpu.memory_space<vmem>>, vector<1x4x64xf32>
    %215 = vector.shape_cast %214 : vector<1x4x64xf32> to vector<4x64xf32>
    %216 = arith.addf %212, %215 : vector<4x64xf32>
    %217 = arith.index_cast %c5_i32 : i32 to index
    %c0_141 = arith.constant 0 : index
    %c0_142 = arith.constant 0 : index
    %218 = vector.load %arg20[%217, %c0_141, %c0_142] : memref<8x4x64xf32, #tpu.memory_space<vmem>>, vector<1x4x64xf32>
    %219 = vector.shape_cast %218 : vector<1x4x64xf32> to vector<4x64xf32>
    %220 = vector.shape_cast %216 : vector<4x64xf32> to vector<1x4x64xf32>
    tpu.vector_store %arg20[%217, %c0_141, %c0_142], %220 {strides = array<i32>} : memref<8x4x64xf32, #tpu.memory_space<vmem>>, vector<1x4x64xf32>,
    %c6_i32 = arith.constant 6 : i32
    %221 = arith.index_cast %c6_i32 : i32 to index
    %c0_143 = arith.constant 0 : index
    %c0_144 = arith.constant 0 : index
    %222 = vector.load %arg19[%221, %c0_143, %c0_144] : memref<8x4x64xf32, #tpu.memory_space<vmem>>, vector<1x4x64xf32>
    %223 = vector.shape_cast %222 : vector<1x4x64xf32> to vector<4x64xf32>
    %224 = arith.mulf %223, %216 : vector<4x64xf32>
    %225 = arith.index_cast %c6_i32 : i32 to index
    %c0_145 = arith.constant 0 : index
    %c0_146 = arith.constant 0 : index
    %226 = vector.load %arg20[%225, %c0_145, %c0_146] : memref<8x4x64xf32, #tpu.memory_space<vmem>>, vector<1x4x64xf32>
    %227 = vector.shape_cast %226 : vector<1x4x64xf32> to vector<4x64xf32>
    %228 = arith.addf %224, %227 : vector<4x64xf32>
    %229 = arith.index_cast %c6_i32 : i32 to index
    %c0_147 = arith.constant 0 : index
    %c0_148 = arith.constant 0 : index
    %230 = vector.load %arg20[%229, %c0_147, %c0_148] : memref<8x4x64xf32, #tpu.memory_space<vmem>>, vector<1x4x64xf32>
    %231 = vector.shape_cast %230 : vector<1x4x64xf32> to vector<4x64xf32>
    %232 = vector.shape_cast %228 : vector<4x64xf32> to vector<1x4x64xf32>
    tpu.vector_store %arg20[%229, %c0_147, %c0_148], %232 {strides = array<i32>} : memref<8x4x64xf32, #tpu.memory_space<vmem>>, vector<1x4x64xf32>,
    %c7_i32 = arith.constant 7 : i32
    %233 = arith.index_cast %c7_i32 : i32 to index
    %c0_149 = arith.constant 0 : index
    %c0_150 = arith.constant 0 : index
    %234 = vector.load %arg19[%233, %c0_149, %c0_150] : memref<8x4x64xf32, #tpu.memory_space<vmem>>, vector<1x4x64xf32>
    %235 = vector.shape_cast %234 : vector<1x4x64xf32> to vector<4x64xf32>
    %236 = arith.mulf %235, %228 : vector<4x64xf32>
    %237 = arith.index_cast %c7_i32 : i32 to index
    %c0_151 = arith.constant 0 : index
    %c0_152 = arith.constant 0 : index
    %238 = vector.load %arg20[%237, %c0_151, %c0_152] : memref<8x4x64xf32, #tpu.memory_space<vmem>>, vector<1x4x64xf32>
    %239 = vector.shape_cast %238 : vector<1x4x64xf32> to vector<4x64xf32>
    %240 = arith.addf %236, %239 : vector<4x64xf32>
    %241 = arith.index_cast %c7_i32 : i32 to index
    %c0_153 = arith.constant 0 : index
    %c0_154 = arith.constant 0 : index
    %242 = vector.load %arg20[%241, %c0_153, %c0_154] : memref<8x4x64xf32, #tpu.memory_space<vmem>>, vector<1x4x64xf32>
    %243 = vector.shape_cast %242 : vector<1x4x64xf32> to vector<4x64xf32>
    %244 = vector.shape_cast %240 : vector<4x64xf32> to vector<1x4x64xf32>
    tpu.vector_store %arg20[%241, %c0_153, %c0_154], %244 {strides = array<i32>} : memref<8x4x64xf32, #tpu.memory_space<vmem>>, vector<1x4x64xf32>,
    %c8_i32 = arith.constant 8 : i32
    %c0_155 = arith.constant 0 : index
    %c0_156 = arith.constant 0 : index
    %c0_157 = arith.constant 0 : index
    %245 = vector.load %arg21[%c0_155, %c0_156, %c0_157] : memref<2x4x64xf32, #tpu.memory_space<vmem>>, vector<1x4x64xf32>
    %246 = vector.shape_cast %245 : vector<1x4x64xf32> to vector<4x64xf32>
    %247 = vector.shape_cast %240 : vector<4x64xf32> to vector<1x4x64xf32>
    tpu.vector_store %arg21[%c0_155, %c0_156, %c0_157], %247 {strides = array<i32>} : memref<2x4x64xf32, #tpu.memory_space<vmem>>, vector<1x4x64xf32>,
    %248 = vector.shape_cast %130 : vector<8x4xf32> to vector<8x4x1xf32>
    %c0_158 = arith.constant 0 : index
    %c0_159 = arith.constant 0 : index
    %c0_160 = arith.constant 0 : index
    %249 = vector.load %arg20[%c0_158, %c0_159, %c0_160] : memref<8x4x64xf32, #tpu.memory_space<vmem>>, vector<8x4x64xf32>
    %250 = vector.broadcast %248 : vector<8x4x1xf32> to vector<8x4x64xf32>
    %251 = arith.mulf %250, %249 : vector<8x4x64xf32>
    %cst_161 = arith.constant dense<0.000000e+00> : vector<8x64xf32>
    %252 = vector.multi_reduction <add>, %251, %cst_161 [1] : vector<8x4x64xf32> to vector<8x64xf32>
    %c0_162 = arith.constant 0 : index
    %c0_163 = arith.constant 0 : index
    %253 = vector.load %arg18[%c0_162, %c0_163] : memref<16x64xf32, #tpu.memory_space<vmem>>, vector<8x64xf32>
    tpu.vector_store %arg18[%c0_162, %c0_163], %252 {strides = array<i32>} : memref<16x64xf32, #tpu.memory_space<vmem>>, vector<8x64xf32>,
    %254 = vector.extract_strided_slice %111 {offsets = [8, 0], sizes = [8, 4], strides = [1, 1]} : vector<16x4xf32> to vector<8x4xf32>
    %255 = vector.extract_strided_slice %112 {offsets = [8, 0], sizes = [8, 4], strides = [1, 1]} : vector<16x4xf32> to vector<8x4xf32>
    %256 = vector.extract_strided_slice %127 {offsets = [8, 0], sizes = [8, 64], strides = [1, 1]} : vector<16x64xf32> to vector<8x64xf32>
    %257 = vector.extract_strided_slice %106 {offsets = [8, 0], sizes = [8, 64], strides = [1, 1]} : vector<16x64xf32> to vector<8x64xf32>
    %258 = arith.mulf %256, %257 : vector<8x64xf32>
    %259 = vector.shape_cast %256 : vector<8x64xf32> to vector<8x1x64xf32>
    %260 = vector.shape_cast %128 : vector<4x64xf32> to vector<1x4x64xf32>
    %261 = vector.broadcast %259 : vector<8x1x64xf32> to vector<8x4x64xf32>
    %262 = vector.broadcast %260 : vector<1x4x64xf32> to vector<8x4x64xf32>
    %263 = arith.mulf %261, %262 : vector<8x4x64xf32>
    %264 = math.exp %263 : vector<8x4x64xf32>
    %c0_164 = arith.constant 0 : index
    %c0_165 = arith.constant 0 : index
    %c0_166 = arith.constant 0 : index
    %265 = vector.load %arg19[%c0_164, %c0_165, %c0_166] : memref<8x4x64xf32, #tpu.memory_space<vmem>>, vector<8x4x64xf32>
    tpu.vector_store %arg19[%c0_164, %c0_165, %c0_166], %264 {strides = array<i32>} : memref<8x4x64xf32, #tpu.memory_space<vmem>>, vector<8x4x64xf32>,
    %266 = vector.shape_cast %254 : vector<8x4xf32> to vector<8x4x1xf32>
    %267 = vector.shape_cast %258 : vector<8x64xf32> to vector<8x1x64xf32>
    %268 = vector.broadcast %266 : vector<8x4x1xf32> to vector<8x4x64xf32>
    %269 = vector.broadcast %267 : vector<8x1x64xf32> to vector<8x4x64xf32>
    %270 = arith.mulf %268, %269 : vector<8x4x64xf32>
    %c0_167 = arith.constant 0 : index
    %c0_168 = arith.constant 0 : index
    %c0_169 = arith.constant 0 : index
    %271 = vector.load %arg20[%c0_167, %c0_168, %c0_169] : memref<8x4x64xf32, #tpu.memory_space<vmem>>, vector<8x4x64xf32>
    tpu.vector_store %arg20[%c0_167, %c0_168, %c0_169], %270 {strides = array<i32>} : memref<8x4x64xf32, #tpu.memory_space<vmem>>, vector<8x4x64xf32>,
    %c1_170 = arith.constant 1 : index
    %c0_171 = arith.constant 0 : index
    %c0_172 = arith.constant 0 : index
    %272 = vector.load %arg21[%c1_170, %c0_171, %c0_172] : memref<2x4x64xf32, #tpu.memory_space<vmem>>, vector<1x4x64xf32>
    %273 = vector.shape_cast %272 : vector<1x4x64xf32> to vector<4x64xf32>
    %c0_i32_173 = arith.constant 0 : i32
    %274 = arith.index_cast %c0_i32_173 : i32 to index
    %c0_174 = arith.constant 0 : index
    %c0_175 = arith.constant 0 : index
    %275 = vector.load %arg19[%274, %c0_174, %c0_175] : memref<8x4x64xf32, #tpu.memory_space<vmem>>, vector<1x4x64xf32>
    %276 = vector.shape_cast %275 : vector<1x4x64xf32> to vector<4x64xf32>
    %277 = arith.mulf %276, %273 : vector<4x64xf32>
    %278 = arith.index_cast %c0_i32_173 : i32 to index
    %c0_176 = arith.constant 0 : index
    %c0_177 = arith.constant 0 : index
    %279 = vector.load %arg20[%278, %c0_176, %c0_177] : memref<8x4x64xf32, #tpu.memory_space<vmem>>, vector<1x4x64xf32>
    %280 = vector.shape_cast %279 : vector<1x4x64xf32> to vector<4x64xf32>
    %281 = arith.addf %277, %280 : vector<4x64xf32>
    %282 = arith.index_cast %c0_i32_173 : i32 to index
    %c0_178 = arith.constant 0 : index
    %c0_179 = arith.constant 0 : index
    %283 = vector.load %arg20[%282, %c0_178, %c0_179] : memref<8x4x64xf32, #tpu.memory_space<vmem>>, vector<1x4x64xf32>
    %284 = vector.shape_cast %283 : vector<1x4x64xf32> to vector<4x64xf32>
    %285 = vector.shape_cast %281 : vector<4x64xf32> to vector<1x4x64xf32>
    tpu.vector_store %arg20[%282, %c0_178, %c0_179], %285 {strides = array<i32>} : memref<8x4x64xf32, #tpu.memory_space<vmem>>, vector<1x4x64xf32>,
    %c1_i32_180 = arith.constant 1 : i32
    %286 = arith.index_cast %c1_i32_180 : i32 to index
    %c0_181 = arith.constant 0 : index
    %c0_182 = arith.constant 0 : index
    %287 = vector.load %arg19[%286, %c0_181, %c0_182] : memref<8x4x64xf32, #tpu.memory_space<vmem>>, vector<1x4x64xf32>
    %288 = vector.shape_cast %287 : vector<1x4x64xf32> to vector<4x64xf32>
    %289 = arith.mulf %288, %281 : vector<4x64xf32>
    %290 = arith.index_cast %c1_i32_180 : i32 to index
    %c0_183 = arith.constant 0 : index
    %c0_184 = arith.constant 0 : index
    %291 = vector.load %arg20[%290, %c0_183, %c0_184] : memref<8x4x64xf32, #tpu.memory_space<vmem>>, vector<1x4x64xf32>
    %292 = vector.shape_cast %291 : vector<1x4x64xf32> to vector<4x64xf32>
    %293 = arith.addf %289, %292 : vector<4x64xf32>
    %294 = arith.index_cast %c1_i32_180 : i32 to index
    %c0_185 = arith.constant 0 : index
    %c0_186 = arith.constant 0 : index
    %295 = vector.load %arg20[%294, %c0_185, %c0_186] : memref<8x4x64xf32, #tpu.memory_space<vmem>>, vector<1x4x64xf32>
    %296 = vector.shape_cast %295 : vector<1x4x64xf32> to vector<4x64xf32>
    %297 = vector.shape_cast %293 : vector<4x64xf32> to vector<1x4x64xf32>
    tpu.vector_store %arg20[%294, %c0_185, %c0_186], %297 {strides = array<i32>} : memref<8x4x64xf32, #tpu.memory_space<vmem>>, vector<1x4x64xf32>,
    %c2_i32_187 = arith.constant 2 : i32
    %298 = arith.index_cast %c2_i32_187 : i32 to index
    %c0_188 = arith.constant 0 : index
    %c0_189 = arith.constant 0 : index
    %299 = vector.load %arg19[%298, %c0_188, %c0_189] : memref<8x4x64xf32, #tpu.memory_space<vmem>>, vector<1x4x64xf32>
    %300 = vector.shape_cast %299 : vector<1x4x64xf32> to vector<4x64xf32>
    %301 = arith.mulf %300, %293 : vector<4x64xf32>
    %302 = arith.index_cast %c2_i32_187 : i32 to index
    %c0_190 = arith.constant 0 : index
    %c0_191 = arith.constant 0 : index
    %303 = vector.load %arg20[%302, %c0_190, %c0_191] : memref<8x4x64xf32, #tpu.memory_space<vmem>>, vector<1x4x64xf32>
    %304 = vector.shape_cast %303 : vector<1x4x64xf32> to vector<4x64xf32>
    %305 = arith.addf %301, %304 : vector<4x64xf32>
    %306 = arith.index_cast %c2_i32_187 : i32 to index
    %c0_192 = arith.constant 0 : index
    %c0_193 = arith.constant 0 : index
    %307 = vector.load %arg20[%306, %c0_192, %c0_193] : memref<8x4x64xf32, #tpu.memory_space<vmem>>, vector<1x4x64xf32>
    %308 = vector.shape_cast %307 : vector<1x4x64xf32> to vector<4x64xf32>
    %309 = vector.shape_cast %305 : vector<4x64xf32> to vector<1x4x64xf32>
    tpu.vector_store %arg20[%306, %c0_192, %c0_193], %309 {strides = array<i32>} : memref<8x4x64xf32, #tpu.memory_space<vmem>>, vector<1x4x64xf32>,
    %c3_i32_194 = arith.constant 3 : i32
    %310 = arith.index_cast %c3_i32_194 : i32 to index
    %c0_195 = arith.constant 0 : index
    %c0_196 = arith.constant 0 : index
    %311 = vector.load %arg19[%310, %c0_195, %c0_196] : memref<8x4x64xf32, #tpu.memory_space<vmem>>, vector<1x4x64xf32>
    %312 = vector.shape_cast %311 : vector<1x4x64xf32> to vector<4x64xf32>
    %313 = arith.mulf %312, %305 : vector<4x64xf32>
    %314 = arith.index_cast %c3_i32_194 : i32 to index
    %c0_197 = arith.constant 0 : index
    %c0_198 = arith.constant 0 : index
    %315 = vector.load %arg20[%314, %c0_197, %c0_198] : memref<8x4x64xf32, #tpu.memory_space<vmem>>, vector<1x4x64xf32>
    %316 = vector.shape_cast %315 : vector<1x4x64xf32> to vector<4x64xf32>
    %317 = arith.addf %313, %316 : vector<4x64xf32>
    %318 = arith.index_cast %c3_i32_194 : i32 to index
    %c0_199 = arith.constant 0 : index
    %c0_200 = arith.constant 0 : index
    %319 = vector.load %arg20[%318, %c0_199, %c0_200] : memref<8x4x64xf32, #tpu.memory_space<vmem>>, vector<1x4x64xf32>
    %320 = vector.shape_cast %319 : vector<1x4x64xf32> to vector<4x64xf32>
    %321 = vector.shape_cast %317 : vector<4x64xf32> to vector<1x4x64xf32>
    tpu.vector_store %arg20[%318, %c0_199, %c0_200], %321 {strides = array<i32>} : memref<8x4x64xf32, #tpu.memory_space<vmem>>, vector<1x4x64xf32>,
    %c4_i32_201 = arith.constant 4 : i32
    %322 = arith.index_cast %c4_i32_201 : i32 to index
    %c0_202 = arith.constant 0 : index
    %c0_203 = arith.constant 0 : index
    %323 = vector.load %arg19[%322, %c0_202, %c0_203] : memref<8x4x64xf32, #tpu.memory_space<vmem>>, vector<1x4x64xf32>
    %324 = vector.shape_cast %323 : vector<1x4x64xf32> to vector<4x64xf32>
    %325 = arith.mulf %324, %317 : vector<4x64xf32>
    %326 = arith.index_cast %c4_i32_201 : i32 to index
    %c0_204 = arith.constant 0 : index
    %c0_205 = arith.constant 0 : index
    %327 = vector.load %arg20[%326, %c0_204, %c0_205] : memref<8x4x64xf32, #tpu.memory_space<vmem>>, vector<1x4x64xf32>
    %328 = vector.shape_cast %327 : vector<1x4x64xf32> to vector<4x64xf32>
    %329 = arith.addf %325, %328 : vector<4x64xf32>
    %330 = arith.index_cast %c4_i32_201 : i32 to index
    %c0_206 = arith.constant 0 : index
    %c0_207 = arith.constant 0 : index
    %331 = vector.load %arg20[%330, %c0_206, %c0_207] : memref<8x4x64xf32, #tpu.memory_space<vmem>>, vector<1x4x64xf32>
    %332 = vector.shape_cast %331 : vector<1x4x64xf32> to vector<4x64xf32>
    %333 = vector.shape_cast %329 : vector<4x64xf32> to vector<1x4x64xf32>
    tpu.vector_store %arg20[%330, %c0_206, %c0_207], %333 {strides = array<i32>} : memref<8x4x64xf32, #tpu.memory_space<vmem>>, vector<1x4x64xf32>,
    %c5_i32_208 = arith.constant 5 : i32
    %334 = arith.index_cast %c5_i32_208 : i32 to index
    %c0_209 = arith.constant 0 : index
    %c0_210 = arith.constant 0 : index
    %335 = vector.load %arg19[%334, %c0_209, %c0_210] : memref<8x4x64xf32, #tpu.memory_space<vmem>>, vector<1x4x64xf32>
    %336 = vector.shape_cast %335 : vector<1x4x64xf32> to vector<4x64xf32>
    %337 = arith.mulf %336, %329 : vector<4x64xf32>
    %338 = arith.index_cast %c5_i32_208 : i32 to index
    %c0_211 = arith.constant 0 : index
    %c0_212 = arith.constant 0 : index
    %339 = vector.load %arg20[%338, %c0_211, %c0_212] : memref<8x4x64xf32, #tpu.memory_space<vmem>>, vector<1x4x64xf32>
    %340 = vector.shape_cast %339 : vector<1x4x64xf32> to vector<4x64xf32>
    %341 = arith.addf %337, %340 : vector<4x64xf32>
    %342 = arith.index_cast %c5_i32_208 : i32 to index
    %c0_213 = arith.constant 0 : index
    %c0_214 = arith.constant 0 : index
    %343 = vector.load %arg20[%342, %c0_213, %c0_214] : memref<8x4x64xf32, #tpu.memory_space<vmem>>, vector<1x4x64xf32>
    %344 = vector.shape_cast %343 : vector<1x4x64xf32> to vector<4x64xf32>
    %345 = vector.shape_cast %341 : vector<4x64xf32> to vector<1x4x64xf32>
    tpu.vector_store %arg20[%342, %c0_213, %c0_214], %345 {strides = array<i32>} : memref<8x4x64xf32, #tpu.memory_space<vmem>>, vector<1x4x64xf32>,
    %c6_i32_215 = arith.constant 6 : i32
    %346 = arith.index_cast %c6_i32_215 : i32 to index
    %c0_216 = arith.constant 0 : index
    %c0_217 = arith.constant 0 : index
    %347 = vector.load %arg19[%346, %c0_216, %c0_217] : memref<8x4x64xf32, #tpu.memory_space<vmem>>, vector<1x4x64xf32>
    %348 = vector.shape_cast %347 : vector<1x4x64xf32> to vector<4x64xf32>
    %349 = arith.mulf %348, %341 : vector<4x64xf32>
    %350 = arith.index_cast %c6_i32_215 : i32 to index
    %c0_218 = arith.constant 0 : index
    %c0_219 = arith.constant 0 : index
    %351 = vector.load %arg20[%350, %c0_218, %c0_219] : memref<8x4x64xf32, #tpu.memory_space<vmem>>, vector<1x4x64xf32>
    %352 = vector.shape_cast %351 : vector<1x4x64xf32> to vector<4x64xf32>
    %353 = arith.addf %349, %352 : vector<4x64xf32>
    %354 = arith.index_cast %c6_i32_215 : i32 to index
    %c0_220 = arith.constant 0 : index
    %c0_221 = arith.constant 0 : index
    %355 = vector.load %arg20[%354, %c0_220, %c0_221] : memref<8x4x64xf32, #tpu.memory_space<vmem>>, vector<1x4x64xf32>
    %356 = vector.shape_cast %355 : vector<1x4x64xf32> to vector<4x64xf32>
    %357 = vector.shape_cast %353 : vector<4x64xf32> to vector<1x4x64xf32>
    tpu.vector_store %arg20[%354, %c0_220, %c0_221], %357 {strides = array<i32>} : memref<8x4x64xf32, #tpu.memory_space<vmem>>, vector<1x4x64xf32>,
    %c7_i32_222 = arith.constant 7 : i32
    %358 = arith.index_cast %c7_i32_222 : i32 to index
    %c0_223 = arith.constant 0 : index
    %c0_224 = arith.constant 0 : index
    %359 = vector.load %arg19[%358, %c0_223, %c0_224] : memref<8x4x64xf32, #tpu.memory_space<vmem>>, vector<1x4x64xf32>
    %360 = vector.shape_cast %359 : vector<1x4x64xf32> to vector<4x64xf32>
    %361 = arith.mulf %360, %353 : vector<4x64xf32>
    %362 = arith.index_cast %c7_i32_222 : i32 to index
    %c0_225 = arith.constant 0 : index
    %c0_226 = arith.constant 0 : index
    %363 = vector.load %arg20[%362, %c0_225, %c0_226] : memref<8x4x64xf32, #tpu.memory_space<vmem>>, vector<1x4x64xf32>
    %364 = vector.shape_cast %363 : vector<1x4x64xf32> to vector<4x64xf32>
    %365 = arith.addf %361, %364 : vector<4x64xf32>
    %366 = arith.index_cast %c7_i32_222 : i32 to index
    %c0_227 = arith.constant 0 : index
    %c0_228 = arith.constant 0 : index
    %367 = vector.load %arg20[%366, %c0_227, %c0_228] : memref<8x4x64xf32, #tpu.memory_space<vmem>>, vector<1x4x64xf32>
    %368 = vector.shape_cast %367 : vector<1x4x64xf32> to vector<4x64xf32>
    %369 = vector.shape_cast %365 : vector<4x64xf32> to vector<1x4x64xf32>
    tpu.vector_store %arg20[%366, %c0_227, %c0_228], %369 {strides = array<i32>} : memref<8x4x64xf32, #tpu.memory_space<vmem>>, vector<1x4x64xf32>,
    %c8_i32_229 = arith.constant 8 : i32
    %c1_230 = arith.constant 1 : index
    %c0_231 = arith.constant 0 : index
    %c0_232 = arith.constant 0 : index
    %370 = vector.load %arg21[%c1_230, %c0_231, %c0_232] : memref<2x4x64xf32, #tpu.memory_space<vmem>>, vector<1x4x64xf32>
    %371 = vector.shape_cast %370 : vector<1x4x64xf32> to vector<4x64xf32>
    %372 = vector.shape_cast %365 : vector<4x64xf32> to vector<1x4x64xf32>
    tpu.vector_store %arg21[%c1_230, %c0_231, %c0_232], %372 {strides = array<i32>} : memref<2x4x64xf32, #tpu.memory_space<vmem>>, vector<1x4x64xf32>,
    %373 = vector.shape_cast %255 : vector<8x4xf32> to vector<8x4x1xf32>
    %c0_233 = arith.constant 0 : index
    %c0_234 = arith.constant 0 : index
    %c0_235 = arith.constant 0 : index
    %374 = vector.load %arg20[%c0_233, %c0_234, %c0_235] : memref<8x4x64xf32, #tpu.memory_space<vmem>>, vector<8x4x64xf32>
    %375 = vector.broadcast %373 : vector<8x4x1xf32> to vector<8x4x64xf32>
    %376 = arith.mulf %375, %374 : vector<8x4x64xf32>
    %cst_236 = arith.constant dense<0.000000e+00> : vector<8x64xf32>
    %377 = vector.multi_reduction <add>, %376, %cst_236 [1] : vector<8x4x64xf32> to vector<8x64xf32>
    %c8_237 = arith.constant 8 : index
    %c0_238 = arith.constant 0 : index
    %378 = vector.load %arg18[%c8_237, %c0_238] : memref<16x64xf32, #tpu.memory_space<vmem>>, vector<8x64xf32>
    tpu.vector_store %arg18[%c8_237, %c0_238], %377 {strides = array<i32>} : memref<16x64xf32, #tpu.memory_space<vmem>>, vector<8x64xf32>,
    %c0_239 = arith.constant 0 : index
    %c0_240 = arith.constant 0 : index
    %379 = vector.load %arg18[%c0_239, %c0_240] : memref<16x64xf32, #tpu.memory_space<vmem>>, vector<16x64xf32>
    %c0_241 = arith.constant 0 : index
    %c0_242 = arith.constant 0 : index
    %380 = vector.load %arg12[%c0_241, %c0_242] : memref<1x64xf32, #tpu.memory_space<vmem>>, vector<1x64xf32>
    %381 = vector.broadcast %380 : vector<1x64xf32> to vector<16x64xf32>
    %382 = arith.mulf %106, %381 : vector<16x64xf32>
    %383 = arith.addf %379, %382 : vector<16x64xf32>
    %cst_243 = arith.constant 0.000000e+00 : f32
    %384 = vector.broadcast %cst_243 : f32 to vector<16x64xf32>
    %385 = arith.subf %384, %25 : vector<16x64xf32>
    %386 = math.exp %385 : vector<16x64xf32>
    %cst_244 = arith.constant 1.000000e+00 : f32
    %387 = vector.broadcast %cst_244 : f32 to vector<16x64xf32>
    %388 = arith.addf %387, %386 : vector<16x64xf32>
    %cst_245 = arith.constant 1.000000e+00 : f32
    %389 = vector.broadcast %cst_245 : f32 to vector<16x64xf32>
    %390 = arith.divf %389, %388 : vector<16x64xf32>
    %391 = arith.mulf %25, %390 : vector<16x64xf32>
    %392 = arith.mulf %383, %391 : vector<16x64xf32>
    %393 = arith.truncf %392 : vector<16x64xf32> to vector<16x64xbf16>
    %c0_246 = arith.constant 0 : index
    %c0_247 = arith.constant 0 : index
    %394 = vector.load %arg13[%c0_246, %c0_247] : memref<64x32xbf16, #tpu.memory_space<vmem>>, vector<64x32xbf16>
    %cst_248 = arith.constant dense<0.000000e+00> : vector<16x32xf32>
    %395 = tpu.matmul %393, %394, %cst_248 {dimension_numbers = #tpu.dot_dimension_numbers<[1], [0], [0], [1], [0, 0, 1, 1], [], []>} : vector<16x64xbf16>, vector<64x32xbf16>, vector<16x32xf32> -> vector<16x32xf32>
    %396 = vector.shape_cast %395 : vector<16x32xf32> to vector<2x8x32xf32>
    %c0_249 = arith.constant 0 : index
    %c0_250 = arith.constant 0 : index
    %c0_251 = arith.constant 0 : index
    %397 = vector.load %arg14[%c0_249, %c0_250, %c0_251] : memref<2x8x32xf32, #tpu.memory_space<vmem>>, vector<2x8x32xf32>
    tpu.vector_store %arg14[%c0_249, %c0_250, %c0_251], %396 {strides = array<i32>} : memref<2x8x32xf32, #tpu.memory_space<vmem>>, vector<2x8x32xf32>,
    return
  }
  func.func @transform_0(%arg0: i32, %arg1: i32) -> (i32, i32, i32) {
    %c0_i32 = arith.constant 0 : i32
    %c0_i32_0 = arith.constant 0 : i32
    return %arg0, %arg1, %c0_i32 : i32, i32, i32
  }
  func.func @transform_1(%arg0: i32, %arg1: i32) -> (i32, i32, i32) {
    %c0_i32 = arith.constant 0 : i32
    %c0_i32_0 = arith.constant 0 : i32
    return %arg0, %arg1, %c0_i32 : i32, i32, i32
  }
  func.func @transform_2(%arg0: i32, %arg1: i32) -> (i32, i32) {
    %c0_i32 = arith.constant 0 : i32
    %c0_i32_0 = arith.constant 0 : i32
    %c0_i32_1 = arith.constant 0 : i32
    return %c0_i32, %c0_i32_0 : i32, i32
  }
  func.func @transform_3(%arg0: i32, %arg1: i32) -> (i32, i32) {
    %c0_i32 = arith.constant 0 : i32
    %c0_i32_0 = arith.constant 0 : i32
    %c0_i32_1 = arith.constant 0 : i32
    return %c0_i32, %c0_i32_0 : i32, i32
  }
  func.func @transform_4(%arg0: i32, %arg1: i32) -> (i32, i32) {
    %c0_i32 = arith.constant 0 : i32
    %c0_i32_0 = arith.constant 0 : i32
    %c0_i32_1 = arith.constant 0 : i32
    return %c0_i32, %c0_i32_0 : i32, i32
  }
  func.func @transform_5(%arg0: i32, %arg1: i32) -> (i32, i32) {
    %c0_i32 = arith.constant 0 : i32
    %c0_i32_0 = arith.constant 0 : i32
    %c0_i32_1 = arith.constant 0 : i32
    return %c0_i32, %c0_i32_0 : i32, i32
  }
  func.func @transform_6(%arg0: i32, %arg1: i32) -> (i32, i32) {
    %c0_i32 = arith.constant 0 : i32
    %c0_i32_0 = arith.constant 0 : i32
    %c0_i32_1 = arith.constant 0 : i32
    return %c0_i32, %c0_i32_0 : i32, i32
  }
  func.func @transform_7(%arg0: i32, %arg1: i32) -> (i32, i32) {
    %c0_i32 = arith.constant 0 : i32
    %c0_i32_0 = arith.constant 0 : i32
    %c0_i32_1 = arith.constant 0 : i32
    return %c0_i32, %c0_i32_0 : i32, i32
  }
  func.func @transform_8(%arg0: i32, %arg1: i32) -> (i32, i32) {
    %c0_i32 = arith.constant 0 : i32
    %c0_i32_0 = arith.constant 0 : i32
    %c0_i32_1 = arith.constant 0 : i32
    return %c0_i32, %c0_i32_0 : i32, i32
  }
  func.func @transform_9(%arg0: i32, %arg1: i32) -> (i32, i32) {
    %c0_i32 = arith.constant 0 : i32
    %c0_i32_0 = arith.constant 0 : i32
    %c0_i32_1 = arith.constant 0 : i32
    return %c0_i32, %c0_i32_0 : i32, i32
  }
  func.func @transform_10(%arg0: i32, %arg1: i32) -> (i32, i32) {
    %c0_i32 = arith.constant 0 : i32
    %c0_i32_0 = arith.constant 0 : i32
    %c0_i32_1 = arith.constant 0 : i32
    return %c0_i32, %c0_i32_0 : i32, i32
  }
  func.func @transform_11(%arg0: i32, %arg1: i32) -> (i32, i32) {
    %c0_i32 = arith.constant 0 : i32
    %c0_i32_0 = arith.constant 0 : i32
    %c0_i32_1 = arith.constant 0 : i32
    return %c0_i32, %c0_i32_0 : i32, i32
  }
  func.func @transform_12(%arg0: i32, %arg1: i32) -> (i32, i32, i32) {
    %c0_i32 = arith.constant 0 : i32
    %c0_i32_0 = arith.constant 0 : i32
    return %arg0, %arg1, %c0_i32 : i32, i32, i32
  }
  func.func @transform_13(%arg0: i32, %arg1: i32) -> (i32, i32, i32) {
    %c0_i32 = arith.constant 0 : i32
    %c0_i32_0 = arith.constant 0 : i32
    return %arg0, %arg1, %c0_i32 : i32, i32, i32
  }
}

</mosaic_0001>

<llo_original>
// kernel: mamba_model_forward.5
$region0: #{mamba_model_forward.5}
  #allocation0 [shape = 'u32[]', space=smem, size = 0x4, offset = 0x4, fixed_abs, tag = 'smem constant byte address 0x4 - core index']
  #allocation1 [shape = 'u32[144,128]{1,0:T(1,128)}', space=vmem, size = 0x12000, scoped, tag = 'internal scratch']
  #allocation2 [shape = 'bf16[1,8,32]{2,1,0:T(8,128)(2,1)}', space=vmem, size = 0x800, scoped, tag = 'scratch operand']
  #allocation3 [shape = 'f32[8,128]{1,0:T(8,128)}', space=vmem, size = 0x1000, scoped, tag = 'scratch operand']
  %s0 = inlined_call_operand.vmem [shape: f32[16,32], index: 0, kind: input, shape index: {}]
  %s1 = inlined_call_operand.vmem [shape: f32[16,32], index: 1, kind: input, shape index: {}]
  %s2 = inlined_call_operand.vmem [shape: f32[1,32], index: 2, kind: input, shape index: {}]
  %s3 = inlined_call_operand.vmem [shape: bf16[32,128], index: 3, kind: input, shape index: {}]
  %s4 = inlined_call_operand.vmem [shape: f32[1,128], index: 4, kind: input, shape index: {}]
  %s5 = inlined_call_operand.vmem [shape: f32[16,128], index: 5, kind: output, shape index: {}]
  %s6 = sld [smem:[#allocation0]]
  $region61: #{mamba_model_forward.5} parent=0
    _
  %s8 = ssub.s32 1, %s6
  %s9 = scalar_select 0, %s8, %s6
  loop: start=0, step=1, limit=4
  $region2: #{mamba_model_forward.5} parent=0 // loop_pre_header
    _
  $region3: #{mamba_model_forward.5} parent=0 // loop_header
    %s11 = sphi 0, %s15
    %p12 = scmp.ge.s32.totalorder %s11, 4
    %s18 = sphi 0, %s37
    %s19 = sphi 0, %s33
    %s20 = sphi 0, %s29
    %s21 = sphi 0, %s18
    %s22 = sphi 0, %s19
    %s23 = sphi 0, %s20
    %s24 = sphi 0, %s21
    %s25 = sphi 0, %s22
    %s26 = sphi 0, %s23
    %s40 = sphi 0, %s42
    %s43 = sphi 0, %s40
    %s44 = sphi 0, %s43
    %s60 = sphi 0, %s44
    %s66 = sphi 0, %s68
    %s69 = sphi 0, %s66
    %s70 = sphi 0, %s69
    %s86 = sphi 0, %s70
    %s90 = sphi 0, %s90
    %s92 = sphi 0, %s90
    %s93 = sphi 0, %s92
    %s107 = sphi 0, %s93
    %s115 = sphi 0, %s117
    %s118 = sphi 0, %s115
    %s119 = sphi 0, %s118
    %s135 = sphi 0, %s119
    %s141 = sphi 0, %s143
    %s144 = sphi 0, %s141
    %s145 = sphi 0, %s144
    %s161 = sphi 0, %s145
    %s169 = sphi 0, %s171
    %s172 = sphi 0, %s169
    %s173 = sphi 0, %s172
    %s189 = sphi 0, %s173
  $region4: #{mamba_model_forward.5} parent=0 // loop_header_branch
    %14 = sbr.rel (%p12) target = $region8
  $region5: #{mamba_model_forward.5} parent=0 // loop_body
    %s16 = ssub.s32 %s11, 1
    %s17 = ssub.s32 %s11, 2
    %s27 = sadd.s32 1, %s20
    %p28 = scmp.ge.s32.totalorder %s27, 1
    %s29 = scalar_select %p28, 0, %s27
    %s30 = sadd.s32 1, %s19
    %s31 = scalar_select %p28, %s30, %s19
    %p32 = scmp.ge.s32.totalorder %s31, 1
    %s33 = scalar_select %p32, 0, %s31
    %s34 = sadd.s32 1, %s18
    %s35 = scalar_select %p32, %s34, %s18
    %p36 = scmp.ge.s32.totalorder %s35, 2
    %s37 = scalar_select %p36, 0, %s35
    %s38 = ssub.s32 %s18, %s37
    %p39 = scmp.eq.s32.totalorder %s38, 0
    %s41 = sadd.s32 %s40, 1
    %s42 = scalar_select %p39, %s40, %s41
    %p45 = pneg %p39
    %p46 = scmp.eq.s32.totalorder %s11, 1
    %p47 = por %p45, %p46
    %p48 = scmp.ne.s32.totalorder %s40, %s43
    %p49 = scmp.eq.s32.totalorder %s11, 0
    %p50 = por %p48, %p49
    %p51 = scmp.ne.s32.totalorder %s40, %s43
    %p52 = scmp.eq.s32.totalorder %s16, 1
    %p53 = por %p51, %p52
    %p54 = scmp.ne.s32.totalorder %s43, %s44
    %p55 = scmp.eq.s32.totalorder %s16, 0
    %p56 = por %p54, %p55
    %p57 = scmp.ne.s32.totalorder %s43, %s44
    %p58 = scmp.eq.s32.totalorder %s17, 1
    %p59 = por %p57, %p58
    %p61 = scmp.ne.s32.totalorder %s44, %s60
    %p62 = scmp.eq.s32.totalorder %s17, 0
    %p63 = por %p61, %p62
    %s64 = ssub.s32 %s18, %s37
    %p65 = scmp.eq.s32.totalorder %s64, 0
    %s67 = sadd.s32 %s66, 1
    %s68 = scalar_select %p65, %s66, %s67
    %p71 = pneg %p65
    %p72 = scmp.eq.s32.totalorder %s11, 1
    %p73 = por %p71, %p72
    %p74 = scmp.ne.s32.totalorder %s66, %s69
    %p75 = scmp.eq.s32.totalorder %s11, 0
    %p76 = por %p74, %p75
    %p77 = scmp.ne.s32.totalorder %s66, %s69
    %p78 = scmp.eq.s32.totalorder %s16, 1
    %p79 = por %p77, %p78
    %p80 = scmp.ne.s32.totalorder %s69, %s70
    %p81 = scmp.eq.s32.totalorder %s16, 0
    %p82 = por %p80, %p81
    %p83 = scmp.ne.s32.totalorder %s69, %s70
    %p84 = scmp.eq.s32.totalorder %s17, 1
    %p85 = por %p83, %p84
    %p87 = scmp.ne.s32.totalorder %s70, %s86
    %p88 = scmp.eq.s32.totalorder %s17, 0
    %p89 = por %p87, %p88
    %s91 = sadd.s32 %s90, 1
    %p94 = scmp.eq.s32.totalorder %s11, 1
    %p95 = scmp.ne.s32.totalorder %s90, %s92
    %p96 = scmp.eq.s32.totalorder %s11, 0
    %p97 = por %p95, %p96
    %p98 = scmp.ne.s32.totalorder %s90, %s92
    %p99 = scmp.eq.s32.totalorder %s16, 1
    %p100 = por %p98, %p99
    %p101 = scmp.ne.s32.totalorder %s92, %s93
    %p102 = scmp.eq.s32.totalorder %s16, 0
    %p103 = por %p101, %p102
    %p104 = scmp.ne.s32.totalorder %s92, %s93
    %p105 = scmp.eq.s32.totalorder %s17, 1
    %p106 = por %p104, %p105
    %p108 = scmp.ne.s32.totalorder %s93, %s107
    %p109 = scmp.eq.s32.totalorder %s17, 0
    %p110 = por %p108, %p109
    %s111 = ssub.s32 %s20, %s29
    %s112 = ssub.s32 %s19, %s33
    %s113 = sor.u32 %s111, %s112
    %p114 = scmp.eq.s32.totalorder %s113, 0
    %s116 = sadd.s32 %s115, 1
    %s117 = scalar_select %p114, %s115, %s116
    %p120 = pneg %p114
    %p121 = scmp.eq.s32.totalorder %s11, 1
    %p122 = por %p120, %p121
    %p123 = scmp.ne.s32.totalorder %s115, %s118
    %p124 = scmp.eq.s32.totalorder %s11, 0
    %p125 = por %p123, %p124
    %p126 = scmp.ne.s32.totalorder %s115, %s118
    %p127 = scmp.eq.s32.totalorder %s16, 1
    %p128 = por %p126, %p127
    %p129 = scmp.ne.s32.totalorder %s118, %s119
    %p130 = scmp.eq.s32.totalorder %s16, 0
    %p131 = por %p129, %p130
    %p132 = scmp.ne.s32.totalorder %s118, %s119
    %p133 = scmp.eq.s32.totalorder %s17, 1
    %p134 = por %p132, %p133
    %p136 = scmp.ne.s32.totalorder %s119, %s135
    %p137 = scmp.eq.s32.totalorder %s17, 0
    %p138 = por %p136, %p137
    %s139 = ssub.s32 %s19, %s33
    %p140 = scmp.eq.s32.totalorder %s139, 0
    %s142 = sadd.s32 %s141, 1
    %s143 = scalar_select %p140, %s141, %s142
    %p146 = pneg %p140
    %p147 = scmp.eq.s32.totalorder %s11, 1
    %p148 = por %p146, %p147
    %p149 = scmp.ne.s32.totalorder %s141, %s144
    %p150 = scmp.eq.s32.totalorder %s11, 0
    %p151 = por %p149, %p150
    %p152 = scmp.ne.s32.totalorder %s141, %s144
    %p153 = scmp.eq.s32.totalorder %s16, 1
    %p154 = por %p152, %p153
    %p155 = scmp.ne.s32.totalorder %s144, %s145
    %p156 = scmp.eq.s32.totalorder %s16, 0
    %p157 = por %p155, %p156
    %p158 = scmp.ne.s32.totalorder %s144, %s145
    %p159 = scmp.eq.s32.totalorder %s17, 1
    %p160 = por %p158, %p159
    %p162 = scmp.ne.s32.totalorder %s145, %s161
    %p163 = scmp.eq.s32.totalorder %s17, 0
    %p164 = por %p162, %p163
    %s165 = ssub.s32 %s18, %s37
    %s166 = ssub.s32 %s19, %s33
    %s167 = sor.u32 %s165, %s166
    %p168 = scmp.eq.s32.totalorder %s167, 0
    %s170 = sadd.s32 %s169, 1
    %s171 = scalar_select %p168, %s169, %s170
    %p174 = pneg %p168
    %p175 = scmp.eq.s32.totalorder %s11, 1
    %p176 = por %p174, %p175
    %p177 = scmp.ne.s32.totalorder %s169, %s172
    %p178 = scmp.eq.s32.totalorder %s11, 0
    %p179 = por %p177, %p178
    %p180 = scmp.ne.s32.totalorder %s169, %s172
    %p181 = scmp.eq.s32.totalorder %s16, 1
    %p182 = por %p180, %p181
    %p183 = scmp.ne.s32.totalorder %s172, %s173
    %p184 = scmp.eq.s32.totalorder %s16, 0
    %p185 = por %p183, %p184
    %p186 = scmp.ne.s32.totalorder %s172, %s173
    %p187 = scmp.eq.s32.totalorder %s17, 1
    %p188 = por %p186, %p187
    %p190 = scmp.ne.s32.totalorder %s173, %s189
    %p191 = scmp.eq.s32.totalorder %s17, 0
    %p192 = por %p190, %p191
    %p193 = scmp.le.s32.totalorder 1, %s11
    %p194 = scmp.lt.s32.totalorder %s11, 3
    %p195 = pnand %p193, %p194
    %p196 = pneg %p195
    // Predicated region
    $region9: #{mamba_model_forward.5} parent=5 // pred_check
      _
    $region10: #{mamba_model_forward.5} parent=5 // pred_check_branch
      %198 = sbr.rel (%p195) target = $region12
    $region11: #{mamba_model_forward.5} parent=5 // pred_region
      %s199 = ssub.s32 %s11, 1
      // Predicated region
      $region13: #{mamba_model_forward.5} parent=11 // pred_check
        %p200 = pneg %p103
      $region14: #{mamba_model_forward.5} parent=11 // pred_check_branch
        %202 = sbr.rel (%p200) target = $region16
      $region15: #{mamba_model_forward.5} parent=11 // pred_region
        _
      $region16: #{mamba_model_forward.5} parent=11 // pred_fallthru
        _
      // Predicated region
      $region17: #{mamba_model_forward.5} parent=11 // pred_check
        %p203 = pneg %p131
      $region18: #{mamba_model_forward.5} parent=11 // pred_check_branch
        %205 = sbr.rel (%p203) target = $region20
      $region19: #{mamba_model_forward.5} parent=11 // pred_region
        %s206 = smul.u32 4, %s23
        %p207 = scmp.lt.s32.totalorder %s206, 3
        %s208 = scalar_select %p207, %s206, 3
        %p209 = scmp.lt.s32.totalorder %s22, 0
        %s210 = scalar_select %p209, %s22, 0
        %s211 = sadd.s32 %s210, %s208
        %s212 = smul.addr %s211, 4
        %s213 = scalar_lea.vmem %s3, %s212
        %s214 = smul.u32 4, %s23
      $region20: #{mamba_model_forward.5} parent=11 // pred_fallthru
        _
      // Predicated region
      $region21: #{mamba_model_forward.5} parent=11 // pred_check
        %p215 = pneg %p157
      $region22: #{mamba_model_forward.5} parent=11 // pred_check_branch
        %217 = sbr.rel (%p215) target = $region24
      $region23: #{mamba_model_forward.5} parent=11 // pred_region
        %p218 = scmp.lt.s32.totalorder %s22, 0
        %s219 = scalar_select %p218, %s22, 0
        %s220 = scalar_lea.vmem %s4, %s219
      $region24: #{mamba_model_forward.5} parent=11 // pred_fallthru
        _
    $region12: #{mamba_model_forward.5} parent=5 // pred_fallthru
      _
    %p221 = scmp.lt.s32.totalorder %s11, 2
    // Predicated region
    $region25: #{mamba_model_forward.5} parent=5 // pred_check
      %p222 = pneg %p221
    $region26: #{mamba_model_forward.5} parent=5 // pred_check_branch
      %224 = sbr.rel (%p222) target = $region28
    $region27: #{mamba_model_forward.5} parent=5 // pred_region
      // Predicated region
      $region29: #{mamba_model_forward.5} parent=27 // pred_check
        %p225 = pneg %p50
      $region30: #{mamba_model_forward.5} parent=27 // pred_check_branch
        %227 = sbr.rel (%p225) target = $region32
      $region31: #{mamba_model_forward.5} parent=27 // pred_region
        %p228 = scmp.lt.s32.totalorder %s18, 1
        %s229 = scalar_select %p228, %s18, 1
        %s230 = smul.addr %s229, 8
        %s231 = scalar_lea.vmem %s0, %s230
      $region32: #{mamba_model_forward.5} parent=27 // pred_fallthru
        _
      // Predicated region
      $region33: #{mamba_model_forward.5} parent=27 // pred_check
        %p232 = pneg %p76
      $region34: #{mamba_model_forward.5} parent=27 // pred_check_branch
        %234 = sbr.rel (%p232) target = $region36
      $region35: #{mamba_model_forward.5} parent=27 // pred_region
        %p235 = scmp.lt.s32.totalorder %s18, 1
        %s236 = scalar_select %p235, %s18, 1
        %s237 = smul.addr %s236, 8
        %s238 = scalar_lea.vmem %s1, %s237
      $region36: #{mamba_model_forward.5} parent=27 // pred_fallthru
        _
    $region28: #{mamba_model_forward.5} parent=5 // pred_fallthru
      _
    %p239 = scmp.le.s32.totalorder 1, %s11
    %p240 = scmp.lt.s32.totalorder %s11, 3
    %p241 = pnand %p239, %p240
    %p242 = pneg %p241
    // Predicated region
    $region37: #{mamba_model_forward.5} parent=5 // pred_check
      _
    $region38: #{mamba_model_forward.5} parent=5 // pred_check_branch
      %244 = sbr.rel (%p241) target = $region40
    $region39: #{mamba_model_forward.5} parent=5 // pred_region
      %s245 = ssub.s32 %s11, 1
      %p246 = scmp.lt.s32.totalorder %s21, 1
      %s247 = scalar_select %p246, %s21, 1
      %s248 = smul.addr %s247, 8
      %s249 = scalar_lea.vmem %s0, %s248
      %p250 = pneg %p56
      %p251 = pneg %p53
      %p252 = scmp.lt.s32.totalorder %s21, 1
      %s253 = scalar_select %p252, %s21, 1
      %s254 = smul.addr %s253, 8
      %s255 = scalar_lea.vmem %s1, %s254
      %p256 = pneg %p82
      %p257 = pneg %p79
      %p258 = pneg %p103
      %p259 = pneg %p100
      %s260 = smul.u32 4, %s23
      %p261 = scmp.lt.s32.totalorder %s260, 3
      %s262 = scalar_select %p261, %s260, 3
      %p263 = scmp.lt.s32.totalorder %s22, 0
      %s264 = scalar_select %p263, %s22, 0
      %s265 = sadd.s32 %s264, %s262
      %s266 = smul.addr %s265, 4
      %s267 = scalar_lea.vmem %s3, %s266
      %p268 = pneg %p131
      %p269 = pneg %p128
      %p270 = scmp.lt.s32.totalorder %s22, 0
      %s271 = scalar_select %p270, %s22, 0
      %s272 = scalar_lea.vmem %s4, %s271
      %p273 = pneg %p157
      %p274 = pneg %p154
      %p275 = pneg %p185
      %p276 = pneg %p182
      %p277 = scmp.lt.s32.totalorder %s21, 1
      %s278 = scalar_select %p277, %s21, 1
      %p279 = scmp.lt.s32.totalorder %s22, 0
      %s280 = scalar_select %p279, %s22, 0
      %s281 = sadd.s32 %s280, %s278
      %s282 = smul.addr %s281, 8
      %s283 = scalar_lea.vmem %s5, %s282
      %p284 = scmp.lt.s32.totalorder %s21, 1
      %s285 = scalar_select %p284, %s21, 1
      %s286 = smul.addr %s285, 8
      %s287 = scalar_lea.vmem %s0, %s286
      %p288 = scmp.lt.s32.totalorder %s21, 1
      %s289 = scalar_select %p288, %s21, 1
      %s290 = smul.addr %s289, 8
      %s291 = scalar_lea.vmem %s1, %s290
      %s292 = smul.u32 4, %s23
      %p293 = scmp.lt.s32.totalorder %s292, 3
      %s294 = scalar_select %p293, %s292, 3
      %p295 = scmp.lt.s32.totalorder %s22, 0
      %s296 = scalar_select %p295, %s22, 0
      %s297 = sadd.s32 %s296, %s294
      %s298 = smul.addr %s297, 4
      %s299 = scalar_lea.vmem %s3, %s298
      %s300 = smul.u32 4, %s23
      %p301 = scmp.lt.s32.totalorder %s22, 0
      %s302 = scalar_select %p301, %s22, 0
      %s303 = scalar_lea.vmem %s4, %s302
      %p304 = scmp.lt.s32.totalorder %s21, 1
      %s305 = scalar_select %p304, %s21, 1
      %p306 = scmp.lt.s32.totalorder %s22, 0
      %s307 = scalar_select %p306, %s22, 0
      %s308 = sadd.s32 %s307, %s305
      %s309 = smul.addr %s308, 8
      %s310 = scalar_lea.vmem %s5, %s309
      %p312 = scmp.eq.s32.totalorder %s23, 0
      // Predicated region
      $region41: #{mamba_model_forward.5} parent=39 // pred_check
        %p313 = pneg %p312
      $region42: #{mamba_model_forward.5} parent=39 // pred_check_branch
        %315 = sbr.rel (%p313) target = $region44
      $region43: #{mamba_model_forward.5} parent=39 // pred_region
        %v316 = vld [vmem:[%s287] sm:$0xff]
        %v317 = vld [vmem:[%s291] sm:$0xff]
        %v318 = vadd.f32 %v316, %v317
        %v319 = vmul.f32 %v318, %v318
        %vm320 = vcmask 261120
        %v321 = vsel %vm320, %v319, 0.0
        %322 = vadd.xlane.f32.xlu0 %v321
        %v323 = vpop.xlane.xlu0 %322
        %v324 = vrcp.pop 32.0
        %v325 = vmul.f32 %v323, %v324
        %v326 = vadd.f32 %v325, 1e-05
        %v327 = vrsqrt.pop %v326
        %v328 = vmul.f32 %v318, %v327
        %v329 = vld [vmem:[%s2] sm:$0x1]
        %v331 = vlaneseq
        %v332 = vshrl.u32 %v331, 7
        %v333 = vsub.s32 0, %v332
        %v334 = vrot.slane %v329, %v333
        %v336 = vmul.f32 %v328, %v334
        %v337 = vpack.c.bf16 %v336, %v336
        %vm338 = vcmask 257024
        %339 = vst.msk [vmem:[#allocation2] sm:$0xf] %vm338, %v337
        %340 = vst [vmem:[#allocation3] sm:$0xff] 0.0
      $region44: #{mamba_model_forward.5} parent=39 // pred_fallthru
        _
      %v341 = vld [vmem:[#allocation3] sm:$0xff]
      %s342 = smul.addr %s23, 4
      %s343 = scalar_lea.vmem [#allocation2], %s342
      %v344 = vld [vmem:[%s343] sm:$0xf]
      %v345 = vld [vmem:[%s299] sm:$0xf]
      %v346 = vld [vmem:[%s299 + $0x4] sm:$0xf]
      %v347 = vld [vmem:[%s299 + $0x8] sm:$0xf]
      %v348 = vld [vmem:[%s299 + $0xc] sm:$0xf]
      %v353 = vunpack.c.l.b16 %v345
      %v354 = vunpack.c.l.b16 %v346
      %v355 = vunpack.c.l.b16 %v347
      %v356 = vunpack.c.l.b16 %v348
      %v357 = vpack.c.b16 %v354, %v353
      %v358 = vpack.c.b16 %v356, %v355
      %vm361 = vcmask 261120
      %v363 = vsel %vm361, %v344, 0
      %365 = vmatprep.subr.bf16.mxu0 0
      %366 = vmatpush1.bf16.msra.mxu0 %v357
      %367 = vmatprep.subr.bf16.mxu0 0
      %368 = vmatpush1.bf16.msra.mxu0 %v358
      %369 = vmatprep.subr.bf16.mxu0 0
      %370 = vmatpush1.bf16.msra.mxu0 0
      %371 = vmatprep.subr.bf16.mxu0 0
      %372 = vmatpush1.bf16.msra.mxu0 0
      %373 = vmatprep.subr.bf16.mxu0 0
      %374 = vmatpush1.bf16.msra.mxu0 0
      %375 = vmatprep.subr.bf16.mxu0 0
      %376 = vmatpush1.bf16.msra.mxu0 0
      %377 = vmatprep.subr.bf16.mxu0 0
      %378 = vmatpush1.bf16.msra.mxu0 0
      %379 = vmatprep.subr.bf16.mxu0 0
      %380 = vmatpush1.bf16.msra.mxu0 0
      %381 = vmatprep.subr.bf16.mxu0 0
      %382 = vmatpush1.bf16.msra.mxu0 0
      %383 = vmatprep.subr.bf16.mxu0 0
      %384 = vmatpush1.bf16.msra.mxu0 0
      %385 = vmatprep.subr.bf16.mxu0 0
      %386 = vmatpush1.bf16.msra.mxu0 0
      %387 = vmatprep.subr.bf16.mxu0 0
      %388 = vmatpush1.bf16.msra.mxu0 0
      %389 = vmatprep.subr.bf16.mxu0 0
      %390 = vmatpush1.bf16.msra.mxu0 0
      %391 = vmatprep.subr.bf16.mxu0 0
      %392 = vmatpush1.bf16.msra.mxu0 0
      %393 = vmatprep.subr.bf16.mxu0 0
      %394 = vmatpush1.bf16.msra.mxu0 0
      %395 = vmatprep.subr.bf16.mxu0 0
      %396 = vmatpush1.bf16.msra.mxu0 0
      %397 = vmatprep.mubr.bf16.mxu0 0
      %398 = vmatmul.mubr.bf16.gmra.mrb[0].mxu0 %v363
      %v399 = vpop.f32.mrb[0].mxu0
      %v400 = vadd.f32 0.0, %v399
      %v401 = vpop.f32.mrb[0].mxu0
      %v402 = vpop.f32.mrb[0].mxu0
      %v403 = vpop.f32.mrb[0].mxu0
      %404 = vdwg.mxu0
      %v405 = vadd.f32 %v341, %v400
      %406 = vst [vmem:[#allocation3] sm:$0xff] %v405
      // Predicated region
      $region45: #{mamba_model_forward.5} parent=39 // pred_check
        %p407 = pneg %p312
      $region46: #{mamba_model_forward.5} parent=39 // pred_check_branch
        %409 = sbr.rel (%p407) target = $region48
      $region47: #{mamba_model_forward.5} parent=39 // pred_region
        %v410 = vld [vmem:[#allocation3] sm:$0xff]
        %v411 = vld [vmem:[%s303] sm:$0x1]
        %v413 = vlaneseq
        %v414 = vshrl.u32 %v413, 7
        %v415 = vsub.s32 0, %v414
        %v416 = vrot.slane %v411, %v415
        %v418 = vadd.f32 %v410, %v416
        %419 = vst [vmem:[%s310] sm:$0xff] %v418
      $region48: #{mamba_model_forward.5} parent=39 // pred_fallthru
        _
      %p420 = scmp.lt.s32.totalorder %s21, 1
      %s421 = scalar_select %p420, %s21, 1
      %p422 = scmp.lt.s32.totalorder %s22, 0
      %s423 = scalar_select %p422, %s22, 0
      %s424 = sadd.s32 %s423, %s421
      %s425 = smul.addr %s424, 8
      %s426 = scalar_lea.vmem %s5, %s425
      // Predicated region
      $region49: #{mamba_model_forward.5} parent=39 // pred_check
        %p427 = pneg %p182
      $region50: #{mamba_model_forward.5} parent=39 // pred_check_branch
        %429 = sbr.rel (%p427) target = $region52
      $region51: #{mamba_model_forward.5} parent=39 // pred_region
        _
      $region52: #{mamba_model_forward.5} parent=39 // pred_fallthru
        _
    $region40: #{mamba_model_forward.5} parent=5 // pred_fallthru
      _
    %p430 = scmp.le.s32.totalorder 2, %s11
    // Predicated region
    $region53: #{mamba_model_forward.5} parent=5 // pred_check
      %p431 = pneg %p430
    $region54: #{mamba_model_forward.5} parent=5 // pred_check_branch
      %433 = sbr.rel (%p431) target = $region56
    $region55: #{mamba_model_forward.5} parent=5 // pred_region
      %s434 = ssub.s32 %s11, 2
      // Predicated region
      $region57: #{mamba_model_forward.5} parent=55 // pred_check
        %p435 = pneg %p188
      $region58: #{mamba_model_forward.5} parent=55 // pred_check_branch
        %437 = sbr.rel (%p435) target = $region60
      $region59: #{mamba_model_forward.5} parent=55 // pred_region
        %p438 = scmp.lt.s32.totalorder %s24, 1
        %s439 = scalar_select %p438, %s24, 1
        %p440 = scmp.lt.s32.totalorder %s25, 0
        %s441 = scalar_select %p440, %s25, 0
        %s442 = sadd.s32 %s441, %s439
        %s443 = smul.addr %s442, 8
        %s444 = scalar_lea.vmem %s5, %s443
      $region60: #{mamba_model_forward.5} parent=55 // pred_fallthru
        _
    $region56: #{mamba_model_forward.5} parent=5 // pred_fallthru
      _
  $region6: #{mamba_model_forward.5} parent=0 // loop_footer
    %s15 = sadd.s32 1, %s11
  $region7: #{mamba_model_forward.5} parent=0 // loop_footer_branch
    %10 = sbr.rel target = $region3
  $region8: #{mamba_model_forward.5} parent=0 // loop_exit
    _

// kernel: mamba_model_forward.3
$region0: #{mamba_model_forward.3}
  #allocation0 [shape = 'u32[]', space=smem, size = 0x4, offset = 0x4, fixed_abs, tag = 'smem constant byte address 0x4 - core index']
  #allocation1 [shape = 'u32[144,128]{1,0:T(1,128)}', space=vmem, size = 0x12000, scoped, tag = 'internal scratch']
  #allocation2 [shape = 'f32[11,64]{1,0:T(8,128)}', space=vmem, size = 0x2000, scoped, tag = 'scratch operand']
  #allocation3 [shape = 'f32[16,64]{1,0:T(8,128)}', space=vmem, size = 0x2000, scoped, tag = 'scratch operand']
  #allocation4 [shape = 'f32[16,64]{1,0:T(8,128)}', space=vmem, size = 0x2000, scoped, tag = 'scratch operand']
  #allocation5 [shape = 'f32[8,4,64]{2,1,0:T(4,128)}', space=vmem, size = 0x4000, scoped, tag = 'scratch operand']
  #allocation6 [shape = 'f32[8,4,64]{2,1,0:T(4,128)}', space=vmem, size = 0x4000, scoped, tag = 'scratch operand']
  #allocation7 [shape = 'f32[2,4,64]{2,1,0:T(4,128)}', space=vmem, size = 0x1000, scoped, tag = 'scratch operand']
  #allocation8 [shape = 'f32[2,3,64]{2,1,0:T(4,128)}', space=vmem, size = 0x1000, scoped, tag = 'scratch operand']
  %s0 = inlined_call_operand.vmem [shape: f32[2,8,32], index: 0, kind: input, shape index: {}, may-alias: {0,12}]
  %s1 = inlined_call_operand.vmem [shape: f32[2,8,32], index: 1, kind: input, shape index: {}, may-alias: {1,13}]
  %s2 = inlined_call_operand.vmem [shape: f32[1,32], index: 2, kind: input, shape index: {}]
  %s3 = inlined_call_operand.vmem [shape: bf16[32,128], index: 3, kind: input, shape index: {}]
  %s4 = inlined_call_operand.vmem [shape: f32[4,64], index: 4, kind: input, shape index: {}]
  %s5 = inlined_call_operand.vmem [shape: f32[1,64], index: 5, kind: input, shape index: {}]
  %s6 = inlined_call_operand.vmem [shape: bf16[64,10], index: 6, kind: input, shape index: {}]
  %s7 = inlined_call_operand.vmem [shape: bf16[2,64], index: 7, kind: input, shape index: {}]
  %s8 = inlined_call_operand.vmem [shape: f32[1,64], index: 8, kind: input, shape index: {}]
  %s9 = inlined_call_operand.vmem [shape: f32[4,64], index: 9, kind: input, shape index: {}]
  %s10 = inlined_call_operand.vmem [shape: f32[1,64], index: 10, kind: input, shape index: {}]
  %s11 = inlined_call_operand.vmem [shape: bf16[64,32], index: 11, kind: input, shape index: {}]
  %s12 = inlined_call_operand.vmem [shape: f32[2,8,32], index: 12, kind: output, shape index: {0}, may-alias: {0,12}]
  %s13 = inlined_call_operand.vmem [shape: f32[2,8,32], index: 13, kind: output, shape index: {1}, may-alias: {1,13}]
  %14 = xla_tuple %s12, %s13
  %s15 = sld [smem:[#allocation0]]
  $region70: #{mamba_model_forward.3} parent=0
    _
  %s17 = ssub.s32 1, %s15
  %s18 = scalar_select 0, %s17, %s15
  // Predicated region
  $region2: #{mamba_model_forward.3} parent=0 // pred_check
    _
  $region3: #{mamba_model_forward.3} parent=0 // pred_check_branch
    %20 = sbr.rel (0) target = $region5
  $region4: #{mamba_model_forward.3} parent=0 // pred_region
    _
  $region5: #{mamba_model_forward.3} parent=0 // pred_fallthru
    _
  // Predicated region
  $region6: #{mamba_model_forward.3} parent=0 // pred_check
    _
  $region7: #{mamba_model_forward.3} parent=0 // pred_check_branch
    %22 = sbr.rel (0) target = $region9
  $region8: #{mamba_model_forward.3} parent=0 // pred_region
    _
  $region9: #{mamba_model_forward.3} parent=0 // pred_fallthru
    _
  // Predicated region
  $region10: #{mamba_model_forward.3} parent=0 // pred_check
    _
  $region11: #{mamba_model_forward.3} parent=0 // pred_check_branch
    %24 = sbr.rel (0) target = $region13
  $region12: #{mamba_model_forward.3} parent=0 // pred_region
    _
  $region13: #{mamba_model_forward.3} parent=0 // pred_fallthru
    _
  // Predicated region
  $region14: #{mamba_model_forward.3} parent=0 // pred_check
    _
  $region15: #{mamba_model_forward.3} parent=0 // pred_check_branch
    %26 = sbr.rel (0) target = $region17
  $region16: #{mamba_model_forward.3} parent=0 // pred_region
    _
  $region17: #{mamba_model_forward.3} parent=0 // pred_fallthru
    _
  // Predicated region
  $region18: #{mamba_model_forward.3} parent=0 // pred_check
    _
  $region19: #{mamba_model_forward.3} parent=0 // pred_check_branch
    %28 = sbr.rel (0) target = $region21
  $region20: #{mamba_model_forward.3} parent=0 // pred_region
    _
  $region21: #{mamba_model_forward.3} parent=0 // pred_fallthru
    _
  // Predicated region
  $region22: #{mamba_model_forward.3} parent=0 // pred_check
    _
  $region23: #{mamba_model_forward.3} parent=0 // pred_check_branch
    %30 = sbr.rel (0) target = $region25
  $region24: #{mamba_model_forward.3} parent=0 // pred_region
    _
  $region25: #{mamba_model_forward.3} parent=0 // pred_fallthru
    _
  // Predicated region
  $region26: #{mamba_model_forward.3} parent=0 // pred_check
    _
  $region27: #{mamba_model_forward.3} parent=0 // pred_check_branch
    %32 = sbr.rel (0) target = $region29
  $region28: #{mamba_model_forward.3} parent=0 // pred_region
    _
  $region29: #{mamba_model_forward.3} parent=0 // pred_fallthru
    _
  // Predicated region
  $region30: #{mamba_model_forward.3} parent=0 // pred_check
    _
  $region31: #{mamba_model_forward.3} parent=0 // pred_check_branch
    %34 = sbr.rel (0) target = $region33
  $region32: #{mamba_model_forward.3} parent=0 // pred_region
    _
  $region33: #{mamba_model_forward.3} parent=0 // pred_fallthru
    _
  // Predicated region
  $region34: #{mamba_model_forward.3} parent=0 // pred_check
    _
  $region35: #{mamba_model_forward.3} parent=0 // pred_check_branch
    %36 = sbr.rel (0) target = $region37
  $region36: #{mamba_model_forward.3} parent=0 // pred_region
    _
  $region37: #{mamba_model_forward.3} parent=0 // pred_fallthru
    _
  // Predicated region
  $region38: #{mamba_model_forward.3} parent=0 // pred_check
    _
  $region39: #{mamba_model_forward.3} parent=0 // pred_check_branch
    %38 = sbr.rel (0) target = $region41
  $region40: #{mamba_model_forward.3} parent=0 // pred_region
    _
  $region41: #{mamba_model_forward.3} parent=0 // pred_fallthru
    _
  // Predicated region
  $region42: #{mamba_model_forward.3} parent=0 // pred_check
    _
  $region43: #{mamba_model_forward.3} parent=0 // pred_check_branch
    %40 = sbr.rel (0) target = $region45
  $region44: #{mamba_model_forward.3} parent=0 // pred_region
    _
  $region45: #{mamba_model_forward.3} parent=0 // pred_fallthru
    _
  // Predicated region
  $region46: #{mamba_model_forward.3} parent=0 // pred_check
    _
  $region47: #{mamba_model_forward.3} parent=0 // pred_check_branch
    %42 = sbr.rel (0) target = $region49
  $region48: #{mamba_model_forward.3} parent=0 // pred_region
    _
  $region49: #{mamba_model_forward.3} parent=0 // pred_fallthru
    _
  %p44 = scmp.eq.s32.totalorder 0, 0
  // Predicated region
  $region50: #{mamba_model_forward.3} parent=0 // pred_check
    %p45 = pneg %p44
  $region51: #{mamba_model_forward.3} parent=0 // pred_check_branch
    %47 = sbr.rel (%p45) target = $region53
  $region52: #{mamba_model_forward.3} parent=0 // pred_region
    %vm48 = vcmask 519168
    %49 = vst.msk [vmem:[#allocation7] sm:$0xf] %vm48, 0.0
    %50 = vst.msk [vmem:[#allocation7 + $0x4] sm:$0xf] %vm48, 0.0
    %vm51 = vcmask 518144
    %52 = vst.msk [vmem:[#allocation8] sm:$0x7] %vm51, 0.0
    %53 = vst.msk [vmem:[#allocation8 + $0x4] sm:$0x7] %vm51, 0.0
  $region53: #{mamba_model_forward.3} parent=0 // pred_fallthru
    _
  %v54 = vld [vmem:[%s0] sm:$0xff]
  %v55 = vld [vmem:[%s0 + $0x8] sm:$0xff]
  %v56 = vld [vmem:[%s1] sm:$0xff]
  %v57 = vld [vmem:[%s1 + $0x8] sm:$0xff]
  %v58 = vadd.f32 %v54, %v56
  %v59 = vadd.f32 %v55, %v57
  %vm60 = vcmask 261120
  %61 = vst.msk [vmem:[%s13] sm:$0xff] %vm60, %v58
  %62 = vst.msk [vmem:[%s13 + $0x8] sm:$0xff] %vm60, %v59
  %v63 = vmul.f32 %v58, %v58
  %v64 = vmul.f32 %v59, %v59
  %v65 = vsel %vm60, %v63, 0.0
  %66 = vadd.xlane.f32.xlu0 %v65
  %v67 = vpop.xlane.xlu0 %66
  %v68 = vsel %vm60, %v64, 0.0
  %69 = vadd.xlane.f32.xlu0 %v68
  %v70 = vpop.xlane.xlu0 %69
  %v71 = vrcp.pop 32.0
  %v72 = vmul.f32 %v67, %v71
  %v73 = vmul.f32 %v70, %v71
  %v74 = vadd.f32 %v72, 1e-05
  %v75 = vadd.f32 %v73, 1e-05
  %v76 = vrsqrt.pop %v74
  %v77 = vrsqrt.pop %v75
  %v78 = vmul.f32 %v58, %v76
  %v79 = vmul.f32 %v59, %v77
  %v80 = vld [vmem:[%s2] sm:$0x1]
  %v82 = vlaneseq
  %v83 = vshrl.u32 %v82, 7
  %v84 = vsub.s32 0, %v83
  %v85 = vrot.slane %v80, %v84
  %v87 = vmul.f32 %v78, %v85
  %v88 = vmul.f32 %v79, %v85
  %v89 = vpack.c.bf16 %v88, %v87
  %v90 = vld [vmem:[%s3] sm:$0xf]
  %v91 = vld [vmem:[%s3 + $0x4] sm:$0xf]
  %v92 = vld [vmem:[%s3 + $0x8] sm:$0xf]
  %v93 = vld [vmem:[%s3 + $0xc] sm:$0xf]
  %v98 = vunpack.c.l.b16 %v90
  %v99 = vunpack.c.l.b16 %v91
  %v100 = vunpack.c.l.b16 %v92
  %v101 = vunpack.c.l.b16 %v93
  %v102 = vpack.c.b16 %v99, %v98
  %v103 = vpack.c.b16 %v101, %v100
  %v107 = vsel %vm60, %v89, 0
  %109 = vmatprep.subr.bf16.mxu0 0
  %110 = vmatpush1.bf16.msra.mxu0 %v102
  %111 = vmatprep.subr.bf16.mxu0 0
  %112 = vmatpush1.bf16.msra.mxu0 %v103
  %113 = vmatprep.subr.bf16.mxu0 0
  %114 = vmatpush1.bf16.msra.mxu0 0
  %115 = vmatprep.subr.bf16.mxu0 0
  %116 = vmatpush1.bf16.msra.mxu0 0
  %117 = vmatprep.subr.bf16.mxu0 0
  %118 = vmatpush1.bf16.msra.mxu0 0
  %119 = vmatprep.subr.bf16.mxu0 0
  %120 = vmatpush1.bf16.msra.mxu0 0
  %121 = vmatprep.subr.bf16.mxu0 0
  %122 = vmatpush1.bf16.msra.mxu0 0
  %123 = vmatprep.subr.bf16.mxu0 0
  %124 = vmatpush1.bf16.msra.mxu0 0
  %125 = vmatprep.subr.bf16.mxu0 0
  %126 = vmatpush1.bf16.msra.mxu0 0
  %127 = vmatprep.subr.bf16.mxu0 0
  %128 = vmatpush1.bf16.msra.mxu0 0
  %129 = vmatprep.subr.bf16.mxu0 0
  %130 = vmatpush1.bf16.msra.mxu0 0
  %131 = vmatprep.subr.bf16.mxu0 0
  %132 = vmatpush1.bf16.msra.mxu0 0
  %133 = vmatprep.subr.bf16.mxu0 0
  %134 = vmatpush1.bf16.msra.mxu0 0
  %135 = vmatprep.subr.bf16.mxu0 0
  %136 = vmatpush1.bf16.msra.mxu0 0
  %137 = vmatprep.subr.bf16.mxu0 0
  %138 = vmatpush1.bf16.msra.mxu0 0
  %139 = vmatprep.subr.bf16.mxu0 0
  %140 = vmatpush1.bf16.msra.mxu0 0
  %141 = vmatprep.mubr.bf16.mxu0 0
  %142 = vmatmul.mubr.bf16.gmra.mrb[0].mxu0 %v107
  %v143 = vpop.f32.mrb[0].mxu0
  %v144 = vadd.f32 0.0, %v143
  %v145 = vpop.f32.mrb[0].mxu0
  %v146 = vpop.f32.mrb[0].mxu0
  %v147 = vadd.f32 0.0, %v146
  %v148 = vpop.f32.mrb[0].mxu0
  %149 = vdwg.mxu0
  %v150 = vld [vmem:[#allocation8] sm:$0x7]
  %vm151 = vcmask 518144
  %152 = vst.msk [vmem:[#allocation2] sm:$0x7] %vm151, %v150
  %vm153 = vcmask 523264
  %154 = vst.msk [vmem:[#allocation2 + $0x3] sm:$0xff] %vm153, %v144
  %v155 = vld [vmem:[#allocation2] sm:$0xff]
  %v156 = vld [vmem:[%s4] sm:$0x1]
  %v157 = vlaneseq
  %v158 = vshrl.u32 %v157, 7
  %v159 = vsub.s32 0, %v158
  %v160 = vrot.slane %v156, %v159
  %v161 = vmul.f32 %v155, %v160
  %v162 = vld [vmem:[#allocation2 + $0x1] sm:$0xff]
  %v163 = vld [vmem:[%s4 + $0x1] sm:$0x1]
  %v164 = vlaneseq
  %v165 = vshrl.u32 %v164, 7
  %v166 = vsub.s32 0, %v165
  %v167 = vrot.slane %v163, %v166
  %v168 = vmul.f32 %v162, %v167
  %v169 = vadd.f32 %v161, %v168
  %v170 = vld [vmem:[#allocation2 + $0x2] sm:$0xff]
  %v171 = vld [vmem:[%s4 + $0x2] sm:$0x1]
  %v172 = vlaneseq
  %v173 = vshrl.u32 %v172, 7
  %v174 = vsub.s32 0, %v173
  %v175 = vrot.slane %v171, %v174
  %v176 = vmul.f32 %v170, %v175
  %v177 = vadd.f32 %v169, %v176
  %v178 = vld [vmem:[#allocation2 + $0x3] sm:$0xff]
  %v179 = vld [vmem:[%s4 + $0x3] sm:$0x1]
  %v180 = vlaneseq
  %v181 = vshrl.u32 %v180, 7
  %v182 = vsub.s32 0, %v181
  %v183 = vrot.slane %v179, %v182
  %v184 = vmul.f32 %v178, %v183
  %v185 = vadd.f32 %v177, %v184
  %v186 = vld [vmem:[%s5] sm:$0x1]
  %v188 = vlaneseq
  %v189 = vshrl.u32 %v188, 7
  %v190 = vsub.s32 0, %v189
  %v191 = vrot.slane %v186, %v190
  %v193 = vadd.f32 %v185, %v191
  %v194 = vsub.f32 0.0, %v193
  %v195 = vmul.f32 %v194, 1.442695
  %v196 = vpow.pop %v195
  %v197 = vadd.f32 %v196, 1.0
  %v198 = vrcp.pop %v197
  %v199 = vmul.f32 1.0, %v198
  %v200 = vmul.f32 %v193, %v199
  %201 = vst.msk [vmem:[#allocation3] sm:$0xff] %vm153, %v200
  %v202 = vld [vmem:[#allocation2 + $0x8] sm:$0x7]
  %203 = vst.msk [vmem:[#allocation8] sm:$0x7] %vm151, %v202
  %s204 = scalar_lea.vmem [#allocation8], 4
  %v205 = vld [vmem:[%s204] sm:$0x7]
  %206 = vst.msk [vmem:[#allocation2] sm:$0x7] %vm151, %v205
  %207 = vst.msk [vmem:[#allocation2 + $0x3] sm:$0xff] %vm153, %v147
  %v208 = vld [vmem:[#allocation2] sm:$0xff]
  %v209 = vld [vmem:[%s4] sm:$0x1]
  %v210 = vlaneseq
  %v211 = vshrl.u32 %v210, 7
  %v212 = vsub.s32 0, %v211
  %v213 = vrot.slane %v209, %v212
  %v214 = vmul.f32 %v208, %v213
  %v215 = vld [vmem:[#allocation2 + $0x1] sm:$0xff]
  %v216 = vld [vmem:[%s4 + $0x1] sm:$0x1]
  %v217 = vlaneseq
  %v218 = vshrl.u32 %v217, 7
  %v219 = vsub.s32 0, %v218
  %v220 = vrot.slane %v216, %v219
  %v221 = vmul.f32 %v215, %v220
  %v222 = vadd.f32 %v214, %v221
  %v223 = vld [vmem:[#allocation2 + $0x2] sm:$0xff]
  %v224 = vld [vmem:[%s4 + $0x2] sm:$0x1]
  %v225 = vlaneseq
  %v226 = vshrl.u32 %v225, 7
  %v227 = vsub.s32 0, %v226
  %v228 = vrot.slane %v224, %v227
  %v229 = vmul.f32 %v223, %v228
  %v230 = vadd.f32 %v222, %v229
  %v231 = vld [vmem:[#allocation2 + $0x3] sm:$0xff]
  %v232 = vld [vmem:[%s4 + $0x3] sm:$0x1]
  %v233 = vlaneseq
  %v234 = vshrl.u32 %v233, 7
  %v235 = vsub.s32 0, %v234
  %v236 = vrot.slane %v232, %v235
  %v237 = vmul.f32 %v231, %v236
  %v238 = vadd.f32 %v230, %v237
  %v239 = vld [vmem:[%s5] sm:$0x1]
  %v241 = vlaneseq
  %v242 = vshrl.u32 %v241, 7
  %v243 = vsub.s32 0, %v242
  %v244 = vrot.slane %v239, %v243
  %v246 = vadd.f32 %v238, %v244
  %v247 = vsub.f32 0.0, %v246
  %v248 = vmul.f32 %v247, 1.442695
  %v249 = vpow.pop %v248
  %v250 = vadd.f32 %v249, 1.0
  %v251 = vrcp.pop %v250
  %v252 = vmul.f32 1.0, %v251
  %v253 = vmul.f32 %v246, %v252
  %254 = vst.msk [vmem:[#allocation3 + $0x8] sm:$0xff] %vm153, %v253
  %v255 = vld [vmem:[#allocation2 + $0x8] sm:$0x7]
  %256 = vst.msk [vmem:[%s204] sm:$0x7] %vm151, %v255
  %v257 = vld [vmem:[#allocation3] sm:$0xff]
  %v258 = vld [vmem:[#allocation3 + $0x8] sm:$0xff]
  %v259 = vpack.c.bf16 %v258, %v257
  %v260 = vld [vmem:[%s6] sm:$0xf]
  %v261 = vld [vmem:[%s6 + $0x4] sm:$0xf]
  %v262 = vld [vmem:[%s6 + $0x8] sm:$0xf]
  %v263 = vld [vmem:[%s6 + $0xc] sm:$0xf]
  %v264 = vld [vmem:[%s6 + $0x10] sm:$0xf]
  %v265 = vld [vmem:[%s6 + $0x14] sm:$0xf]
  %v266 = vld [vmem:[%s6 + $0x18] sm:$0xf]
  %v267 = vld [vmem:[%s6 + $0x1c] sm:$0xf]
  %v276 = vunpack.c.l.b16 %v260
  %v277 = vunpack.c.l.b16 %v261
  %v278 = vunpack.c.l.b16 %v262
  %v279 = vunpack.c.l.b16 %v263
  %v280 = vunpack.c.l.b16 %v264
  %v281 = vunpack.c.l.b16 %v265
  %v282 = vunpack.c.l.b16 %v266
  %v283 = vunpack.c.l.b16 %v267
  %v284 = vpack.c.b16 %v277, %v276
  %v285 = vpack.c.b16 %v279, %v278
  %v286 = vpack.c.b16 %v281, %v280
  %v287 = vpack.c.b16 %v283, %v282
  %v293 = vsel %vm153, %v259, 0
  %295 = vmatprep.subr.bf16.mxu0 0
  %296 = vmatpush1.bf16.msra.mxu0 %v284
  %297 = vmatprep.subr.bf16.mxu0 0
  %298 = vmatpush1.bf16.msra.mxu0 %v285
  %299 = vmatprep.subr.bf16.mxu0 0
  %300 = vmatpush1.bf16.msra.mxu0 %v286
  %301 = vmatprep.subr.bf16.mxu0 0
  %302 = vmatpush1.bf16.msra.mxu0 %v287
  %303 = vmatprep.subr.bf16.mxu0 0
  %304 = vmatpush1.bf16.msra.mxu0 0
  %305 = vmatprep.subr.bf16.mxu0 0
  %306 = vmatpush1.bf16.msra.mxu0 0
  %307 = vmatprep.subr.bf16.mxu0 0
  %308 = vmatpush1.bf16.msra.mxu0 0
  %309 = vmatprep.subr.bf16.mxu0 0
  %310 = vmatpush1.bf16.msra.mxu0 0
  %311 = vmatprep.subr.bf16.mxu0 0
  %312 = vmatpush1.bf16.msra.mxu0 0
  %313 = vmatprep.subr.bf16.mxu0 0
  %314 = vmatpush1.bf16.msra.mxu0 0
  %315 = vmatprep.subr.bf16.mxu0 0
  %316 = vmatpush1.bf16.msra.mxu0 0
  %317 = vmatprep.subr.bf16.mxu0 0
  %318 = vmatpush1.bf16.msra.mxu0 0
  %319 = vmatprep.subr.bf16.mxu0 0
  %320 = vmatpush1.bf16.msra.mxu0 0
  %321 = vmatprep.subr.bf16.mxu0 0
  %322 = vmatpush1.bf16.msra.mxu0 0
  %323 = vmatprep.subr.bf16.mxu0 0
  %324 = vmatpush1.bf16.msra.mxu0 0
  %325 = vmatprep.subr.bf16.mxu0 0
  %326 = vmatpush1.bf16.msra.mxu0 0
  %327 = vmatprep.mubr.bf16.mxu0 0
  %328 = vmatmul.mubr.bf16.gmra.mrb[0].mxu0 %v293
  %v329 = vpop.f32.mrb[0].mxu0
  %v330 = vadd.f32 0.0, %v329
  %v331 = vpop.f32.mrb[0].mxu0
  %v332 = vpop.f32.mrb[0].mxu0
  %v333 = vadd.f32 0.0, %v332
  %v334 = vpop.f32.mrb[0].mxu0
  %335 = vdwg.mxu0
  %v336 = vpack.c.bf16 %v333, %v330
  %v337 = vld [vmem:[%s7] sm:$0x1]
  %v338 = vld [vmem:[%s8] sm:$0x1]
  %v340 = vlaneseq
  %v341 = vshrl.u32 %v340, 7
  %v342 = vsub.s32 0, %v341
  %v343 = vrot.slane %v338, %v342
  %vm345 = vcmask 15360
  %v347 = vsel %vm345, %v336, 0
  %vm349 = vcmask 1040384
  %v351 = vsel %vm349, %v337, 0
  %353 = vmatprep.subr.bf16.mxu0 0
  %354 = vmatpush1.bf16.msra.mxu0 %v351
  %355 = vmatprep.subr.bf16.mxu0 0
  %356 = vmatpush1.bf16.msra.mxu0 0
  %357 = vmatprep.subr.bf16.mxu0 0
  %358 = vmatpush1.bf16.msra.mxu0 0
  %359 = vmatprep.subr.bf16.mxu0 0
  %360 = vmatpush1.bf16.msra.mxu0 0
  %361 = vmatprep.subr.bf16.mxu0 0
  %362 = vmatpush1.bf16.msra.mxu0 0
  %363 = vmatprep.subr.bf16.mxu0 0
  %364 = vmatpush1.bf16.msra.mxu0 0
  %365 = vmatprep.subr.bf16.mxu0 0
  %366 = vmatpush1.bf16.msra.mxu0 0
  %367 = vmatprep.subr.bf16.mxu0 0
  %368 = vmatpush1.bf16.msra.mxu0 0
  %369 = vmatprep.subr.bf16.mxu0 0
  %370 = vmatpush1.bf16.msra.mxu0 0
  %371 = vmatprep.subr.bf16.mxu0 0
  %372 = vmatpush1.bf16.msra.mxu0 0
  %373 = vmatprep.subr.bf16.mxu0 0
  %374 = vmatpush1.bf16.msra.mxu0 0
  %375 = vmatprep.subr.bf16.mxu0 0
  %376 = vmatpush1.bf16.msra.mxu0 0
  %377 = vmatprep.subr.bf16.mxu0 0
  %378 = vmatpush1.bf16.msra.mxu0 0
  %379 = vmatprep.subr.bf16.mxu0 0
  %380 = vmatpush1.bf16.msra.mxu0 0
  %381 = vmatprep.subr.bf16.mxu0 0
  %382 = vmatpush1.bf16.msra.mxu0 0
  %383 = vmatprep.subr.bf16.mxu0 0
  %384 = vmatpush1.bf16.msra.mxu0 0
  %385 = vmatprep.mubr.bf16.mxu0 0
  %386 = vmatmul.mubr.bf16.gmra.mrb[0].mxu0 %v347
  %v387 = vpop.f32.mrb[0].mxu0
  %v388 = vadd.f32 %v343, %v387
  %v389 = vpop.f32.mrb[0].mxu0
  %v390 = vpop.f32.mrb[0].mxu0
  %v391 = vadd.f32 %v343, %v390
  %v392 = vpop.f32.mrb[0].mxu0
  %393 = vdwg.mxu0
  %vm394 = vcmp.gt.f32.partialorder %v388, 20.0
  %vm395 = vcmp.gt.f32.partialorder %v391, 20.0
  %v396 = vmin.f32 %v388, 20.0
  %v397 = vmin.f32 %v391, 20.0
  %v398 = vmul.f32 %v396, 1.442695
  %v399 = vpow.pop %v398
  %v400 = vmul.f32 %v397, 1.442695
  %v401 = vpow.pop %v400
  %v402 = vadd.f32 %v399, 1.0
  %v403 = vadd.f32 %v401, 1.0
  %v404 = vlog2.pop %v402
  %v405 = vmul.f32 %v404, 0.6931472
  %v406 = vlog2.pop %v403
  %v407 = vmul.f32 %v406, 0.6931472
  %v408 = vsel %vm394, %v388, %v405
  %v409 = vsel %vm395, %v391, %v407
  %v410 = vld [vmem:[%s9] sm:$0xf]
  %v411 = vmul.f32 %v408, %v257
  %v413 = vcombine.high %v408, %v408
  %v415 = vunpack.c.l.s4 1966171168
  %v416 = vunpack.c.0.s8 %v415
  %v417 = vlaneseq
  %v418 = vshrl.u32 %v417, 7
  %v419 = vsub.s32 %v416, %v418
  %v420 = vrot.slane %v408, %v419
  %v422 = vunpack.c.l.s4 1966171168
  %v423 = vunpack.c.0.s8 %v422
  %v424 = vlaneseq
  %v425 = vshrl.u32 %v424, 7
  %v426 = vsub.s32 %v423, %v425
  %v427 = vrot.slane %v413, %v426
  %v428 = vcombine.high %v420, %v420
  %v429 = vcombine.high %v427, %v427
  %v431 = vunpack.c.l.s4 1966171168
  %v432 = vunpack.c.0.s8 %v431
  %v433 = vlaneseq
  %v434 = vshrl.u32 %v433, 7
  %v435 = vsub.s32 %v432, %v434
  %v436 = vrot.slane %v420, %v435
  %v438 = vunpack.c.l.s4 1966171168
  %v439 = vunpack.c.0.s8 %v438
  %v440 = vlaneseq
  %v441 = vshrl.u32 %v440, 7
  %v442 = vsub.s32 %v439, %v441
  %v443 = vrot.slane %v427, %v442
  %v445 = vunpack.c.l.s4 1966171168
  %v446 = vunpack.c.0.s8 %v445
  %v447 = vlaneseq
  %v448 = vshrl.u32 %v447, 7
  %v449 = vsub.s32 %v446, %v448
  %v450 = vrot.slane %v428, %v449
  %v452 = vunpack.c.l.s4 1966171168
  %v453 = vunpack.c.0.s8 %v452
  %v454 = vlaneseq
  %v455 = vshrl.u32 %v454, 7
  %v456 = vsub.s32 %v453, %v455
  %v457 = vrot.slane %v429, %v456
  %v458 = vcombine.high %v436, %v436
  %v459 = vcombine.high %v443, %v443
  %v460 = vcombine.high %v450, %v450
  %v461 = vcombine.high %v457, %v457
  %v462 = vlaneseq
  %v463 = vshrl.u32 %v462, 7
  %v464 = vsub.s32 0, %v463
  %v465 = vrot.slane %v436, %v464
  %v466 = vlaneseq
  %v467 = vshrl.u32 %v466, 7
  %v468 = vsub.s32 0, %v467
  %v469 = vrot.slane %v450, %v468
  %v470 = vlaneseq
  %v471 = vshrl.u32 %v470, 7
  %v472 = vsub.s32 0, %v471
  %v473 = vrot.slane %v458, %v472
  %v474 = vlaneseq
  %v475 = vshrl.u32 %v474, 7
  %v476 = vsub.s32 0, %v475
  %v477 = vrot.slane %v460, %v476
  %v478 = vlaneseq
  %v479 = vshrl.u32 %v478, 7
  %v480 = vsub.s32 0, %v479
  %v481 = vrot.slane %v443, %v480
  %v482 = vlaneseq
  %v483 = vshrl.u32 %v482, 7
  %v484 = vsub.s32 0, %v483
  %v485 = vrot.slane %v457, %v484
  %v486 = vlaneseq
  %v487 = vshrl.u32 %v486, 7
  %v488 = vsub.s32 0, %v487
  %v489 = vrot.slane %v459, %v488
  %v490 = vlaneseq
  %v491 = vshrl.u32 %v490, 7
  %v492 = vsub.s32 0, %v491
  %v493 = vrot.slane %v461, %v492
  %v502 = vmul.f32 %v465, %v410
  %v503 = vmul.f32 %v469, %v410
  %v504 = vmul.f32 %v473, %v410
  %v505 = vmul.f32 %v477, %v410
  %v506 = vmul.f32 %v481, %v410
  %v507 = vmul.f32 %v485, %v410
  %v508 = vmul.f32 %v489, %v410
  %v509 = vmul.f32 %v493, %v410
  %v510 = vmul.f32 %v502, 1.442695
  %v511 = vpow.pop %v510
  %v512 = vmul.f32 %v503, 1.442695
  %v513 = vpow.pop %v512
  %v514 = vmul.f32 %v504, 1.442695
  %v515 = vpow.pop %v514
  %v516 = vmul.f32 %v505, 1.442695
  %v517 = vpow.pop %v516
  %v518 = vmul.f32 %v506, 1.442695
  %v519 = vpow.pop %v518
  %v520 = vmul.f32 %v507, 1.442695
  %v521 = vpow.pop %v520
  %v522 = vmul.f32 %v508, 1.442695
  %v523 = vpow.pop %v522
  %v524 = vmul.f32 %v509, 1.442695
  %v525 = vpow.pop %v524
  %vm526 = vcmask 519168
  %527 = vst.msk [vmem:[#allocation5] sm:$0xf] %vm526, %v511
  %528 = vst.msk [vmem:[#allocation5 + $0x4] sm:$0xf] %vm526, %v513
  %529 = vst.msk [vmem:[#allocation5 + $0x8] sm:$0xf] %vm526, %v515
  %530 = vst.msk [vmem:[#allocation5 + $0xc] sm:$0xf] %vm526, %v517
  %531 = vst.msk [vmem:[#allocation5 + $0x10] sm:$0xf] %vm526, %v519
  %532 = vst.msk [vmem:[#allocation5 + $0x14] sm:$0xf] %vm526, %v521
  %533 = vst.msk [vmem:[#allocation5 + $0x18] sm:$0xf] %vm526, %v523
  %534 = vst.msk [vmem:[#allocation5 + $0x1c] sm:$0xf] %vm526, %v525
  %v535 = vlaneseq
  %v536 = vshrl.u32 %v535, 7
  %v537 = vsub.s32 0, %v536
  %v538 = vrot.slane %v330, %v537
  %s540 = sor.u32 256, 2
  %541 = vbcast.lane.b32.xlu0 %v538, %s540
  %v542 = vpop.permute.xlu0 %541
  %v543 = vlaneseq
  %v544 = vshrl.u32 %v543, 7
  %v545 = vsub.s32 1, %v544
  %v546 = vrot.slane %v330, %v545
  %s548 = sor.u32 256, 2
  %549 = vbcast.lane.b32.xlu0 %v546, %s548
  %v550 = vpop.permute.xlu0 %549
  %v551 = vlaneseq
  %v552 = vshrl.u32 %v551, 7
  %v553 = vsub.s32 2, %v552
  %v554 = vrot.slane %v330, %v553
  %s556 = sor.u32 256, 2
  %557 = vbcast.lane.b32.xlu0 %v554, %s556
  %v558 = vpop.permute.xlu0 %557
  %v559 = vlaneseq
  %v560 = vshrl.u32 %v559, 7
  %v561 = vsub.s32 3, %v560
  %v562 = vrot.slane %v330, %v561
  %s564 = sor.u32 256, 2
  %565 = vbcast.lane.b32.xlu0 %v562, %s564
  %v566 = vpop.permute.xlu0 %565
  %v567 = vlaneseq
  %v568 = vshrl.u32 %v567, 7
  %v569 = vsub.s32 4, %v568
  %v570 = vrot.slane %v330, %v569
  %s572 = sor.u32 256, 2
  %573 = vbcast.lane.b32.xlu0 %v570, %s572
  %v574 = vpop.permute.xlu0 %573
  %v575 = vlaneseq
  %v576 = vshrl.u32 %v575, 7
  %v577 = vsub.s32 5, %v576
  %v578 = vrot.slane %v330, %v577
  %s580 = sor.u32 256, 2
  %581 = vbcast.lane.b32.xlu0 %v578, %s580
  %v582 = vpop.permute.xlu0 %581
  %v583 = vlaneseq
  %v584 = vshrl.u32 %v583, 7
  %v585 = vsub.s32 6, %v584
  %v586 = vrot.slane %v330, %v585
  %s588 = sor.u32 256, 2
  %589 = vbcast.lane.b32.xlu0 %v586, %s588
  %v590 = vpop.permute.xlu0 %589
  %v591 = vlaneseq
  %v592 = vshrl.u32 %v591, 7
  %v593 = vsub.s32 7, %v592
  %v594 = vrot.slane %v330, %v593
  %s596 = sor.u32 256, 2
  %597 = vbcast.lane.b32.xlu0 %v594, %s596
  %v598 = vpop.permute.xlu0 %597
  %v600 = vcombine.high %v411, %v411
  %v602 = vunpack.c.l.s4 1966171168
  %v603 = vunpack.c.0.s8 %v602
  %v604 = vlaneseq
  %v605 = vshrl.u32 %v604, 7
  %v606 = vsub.s32 %v603, %v605
  %v607 = vrot.slane %v411, %v606
  %v609 = vunpack.c.l.s4 1966171168
  %v610 = vunpack.c.0.s8 %v609
  %v611 = vlaneseq
  %v612 = vshrl.u32 %v611, 7
  %v613 = vsub.s32 %v610, %v612
  %v614 = vrot.slane %v600, %v613
  %v615 = vcombine.high %v607, %v607
  %v616 = vcombine.high %v614, %v614
  %v618 = vunpack.c.l.s4 1966171168
  %v619 = vunpack.c.0.s8 %v618
  %v620 = vlaneseq
  %v621 = vshrl.u32 %v620, 7
  %v622 = vsub.s32 %v619, %v621
  %v623 = vrot.slane %v607, %v622
  %v625 = vunpack.c.l.s4 1966171168
  %v626 = vunpack.c.0.s8 %v625
  %v627 = vlaneseq
  %v628 = vshrl.u32 %v627, 7
  %v629 = vsub.s32 %v626, %v628
  %v630 = vrot.slane %v614, %v629
  %v632 = vunpack.c.l.s4 1966171168
  %v633 = vunpack.c.0.s8 %v632
  %v634 = vlaneseq
  %v635 = vshrl.u32 %v634, 7
  %v636 = vsub.s32 %v633, %v635
  %v637 = vrot.slane %v615, %v636
  %v639 = vunpack.c.l.s4 1966171168
  %v640 = vunpack.c.0.s8 %v639
  %v641 = vlaneseq
  %v642 = vshrl.u32 %v641, 7
  %v643 = vsub.s32 %v640, %v642
  %v644 = vrot.slane %v616, %v643
  %v645 = vcombine.high %v623, %v623
  %v646 = vcombine.high %v630, %v630
  %v647 = vcombine.high %v637, %v637
  %v648 = vcombine.high %v644, %v644
  %v649 = vlaneseq
  %v650 = vshrl.u32 %v649, 7
  %v651 = vsub.s32 0, %v650
  %v652 = vrot.slane %v623, %v651
  %v653 = vlaneseq
  %v654 = vshrl.u32 %v653, 7
  %v655 = vsub.s32 0, %v654
  %v656 = vrot.slane %v637, %v655
  %v657 = vlaneseq
  %v658 = vshrl.u32 %v657, 7
  %v659 = vsub.s32 0, %v658
  %v660 = vrot.slane %v645, %v659
  %v661 = vlaneseq
  %v662 = vshrl.u32 %v661, 7
  %v663 = vsub.s32 0, %v662
  %v664 = vrot.slane %v647, %v663
  %v665 = vlaneseq
  %v666 = vshrl.u32 %v665, 7
  %v667 = vsub.s32 0, %v666
  %v668 = vrot.slane %v630, %v667
  %v669 = vlaneseq
  %v670 = vshrl.u32 %v669, 7
  %v671 = vsub.s32 0, %v670
  %v672 = vrot.slane %v644, %v671
  %v673 = vlaneseq
  %v674 = vshrl.u32 %v673, 7
  %v675 = vsub.s32 0, %v674
  %v676 = vrot.slane %v646, %v675
  %v677 = vlaneseq
  %v678 = vshrl.u32 %v677, 7
  %v679 = vsub.s32 0, %v678
  %v680 = vrot.slane %v648, %v679
  %v689 = vmul.f32 %v542, %v652
  %v690 = vmul.f32 %v550, %v656
  %v691 = vmul.f32 %v558, %v660
  %v692 = vmul.f32 %v566, %v664
  %v693 = vmul.f32 %v574, %v668
  %v694 = vmul.f32 %v582, %v672
  %v695 = vmul.f32 %v590, %v676
  %v696 = vmul.f32 %v598, %v680
  %697 = vst.msk [vmem:[#allocation6] sm:$0xf] %vm526, %v689
  %698 = vst.msk [vmem:[#allocation6 + $0x4] sm:$0xf] %vm526, %v690
  %699 = vst.msk [vmem:[#allocation6 + $0x8] sm:$0xf] %vm526, %v691
  %700 = vst.msk [vmem:[#allocation6 + $0xc] sm:$0xf] %vm526, %v692
  %701 = vst.msk [vmem:[#allocation6 + $0x10] sm:$0xf] %vm526, %v693
  %702 = vst.msk [vmem:[#allocation6 + $0x14] sm:$0xf] %vm526, %v694
  %703 = vst.msk [vmem:[#allocation6 + $0x18] sm:$0xf] %vm526, %v695
  %704 = vst.msk [vmem:[#allocation6 + $0x1c] sm:$0xf] %vm526, %v696
  %v705 = vld [vmem:[#allocation7] sm:$0xf]
  %v706 = vld [vmem:[#allocation5] sm:$0xf]
  %v707 = vmul.f32 %v706, %v705
  %v708 = vld [vmem:[#allocation6] sm:$0xf]
  %v709 = vadd.f32 %v707, %v708
  %710 = vst.msk [vmem:[#allocation6] sm:$0xf] %vm526, %v709
  %s711 = scalar_lea.vmem [#allocation5], 4
  %v712 = vld [vmem:[%s711] sm:$0xf]
  %v713 = vmul.f32 %v712, %v709
  %s714 = scalar_lea.vmem [#allocation6], 4
  %v715 = vld [vmem:[%s714] sm:$0xf]
  %v716 = vadd.f32 %v713, %v715
  %717 = vst.msk [vmem:[%s714] sm:$0xf] %vm526, %v716
  %s718 = scalar_lea.vmem [#allocation5], 8
  %v719 = vld [vmem:[%s718] sm:$0xf]
  %v720 = vmul.f32 %v719, %v716
  %s721 = scalar_lea.vmem [#allocation6], 8
  %v722 = vld [vmem:[%s721] sm:$0xf]
  %v723 = vadd.f32 %v720, %v722
  %724 = vst.msk [vmem:[%s721] sm:$0xf] %vm526, %v723
  %s725 = scalar_lea.vmem [#allocation5], 12
  %v726 = vld [vmem:[%s725] sm:$0xf]
  %v727 = vmul.f32 %v726, %v723
  %s728 = scalar_lea.vmem [#allocation6], 12
  %v729 = vld [vmem:[%s728] sm:$0xf]
  %v730 = vadd.f32 %v727, %v729
  %731 = vst.msk [vmem:[%s728] sm:$0xf] %vm526, %v730
  %s732 = scalar_lea.vmem [#allocation5], 16
  %v733 = vld [vmem:[%s732] sm:$0xf]
  %v734 = vmul.f32 %v733, %v730
  %s735 = scalar_lea.vmem [#allocation6], 16
  %v736 = vld [vmem:[%s735] sm:$0xf]
  %v737 = vadd.f32 %v734, %v736
  %738 = vst.msk [vmem:[%s735] sm:$0xf] %vm526, %v737
  %s739 = scalar_lea.vmem [#allocation5], 20
  %v740 = vld [vmem:[%s739] sm:$0xf]
  %v741 = vmul.f32 %v740, %v737
  %s742 = scalar_lea.vmem [#allocation6], 20
  %v743 = vld [vmem:[%s742] sm:$0xf]
  %v744 = vadd.f32 %v741, %v743
  %745 = vst.msk [vmem:[%s742] sm:$0xf] %vm526, %v744
  %s746 = scalar_lea.vmem [#allocation5], 24
  %v747 = vld [vmem:[%s746] sm:$0xf]
  %v748 = vmul.f32 %v747, %v744
  %s749 = scalar_lea.vmem [#allocation6], 24
  %v750 = vld [vmem:[%s749] sm:$0xf]
  %v751 = vadd.f32 %v748, %v750
  %752 = vst.msk [vmem:[%s749] sm:$0xf] %vm526, %v751
  %s753 = scalar_lea.vmem [#allocation5], 28
  %v754 = vld [vmem:[%s753] sm:$0xf]
  %v755 = vmul.f32 %v754, %v751
  %s756 = scalar_lea.vmem [#allocation6], 28
  %v757 = vld [vmem:[%s756] sm:$0xf]
  %v758 = vadd.f32 %v755, %v757
  %759 = vst.msk [vmem:[%s756] sm:$0xf] %vm526, %v758
  %760 = vst.msk [vmem:[#allocation7] sm:$0xf] %vm526, %v758
  %s762 = sor.u32 256, 6
  %763 = vbcast.lane.b32.xlu0 %v538, %s762
  %v764 = vpop.permute.xlu0 %763
  %s766 = sor.u32 256, 6
  %767 = vbcast.lane.b32.xlu0 %v546, %s766
  %v768 = vpop.permute.xlu0 %767
  %s770 = sor.u32 256, 6
  %771 = vbcast.lane.b32.xlu0 %v554, %s770
  %v772 = vpop.permute.xlu0 %771
  %s774 = sor.u32 256, 6
  %775 = vbcast.lane.b32.xlu0 %v562, %s774
  %v776 = vpop.permute.xlu0 %775
  %s778 = sor.u32 256, 6
  %779 = vbcast.lane.b32.xlu0 %v570, %s778
  %v780 = vpop.permute.xlu0 %779
  %s782 = sor.u32 256, 6
  %783 = vbcast.lane.b32.xlu0 %v578, %s782
  %v784 = vpop.permute.xlu0 %783
  %s786 = sor.u32 256, 6
  %787 = vbcast.lane.b32.xlu0 %v586, %s786
  %v788 = vpop.permute.xlu0 %787
  %s790 = sor.u32 256, 6
  %791 = vbcast.lane.b32.xlu0 %v594, %s790
  %v792 = vpop.permute.xlu0 %791
  %v793 = vld [vmem:[#allocation6] sm:$0xf]
  %v794 = vld [vmem:[#allocation6 + $0x4] sm:$0xf]
  %v795 = vld [vmem:[#allocation6 + $0x8] sm:$0xf]
  %v796 = vld [vmem:[#allocation6 + $0xc] sm:$0xf]
  %v797 = vld [vmem:[#allocation6 + $0x10] sm:$0xf]
  %v798 = vld [vmem:[#allocation6 + $0x14] sm:$0xf]
  %v799 = vld [vmem:[#allocation6 + $0x18] sm:$0xf]
  %v800 = vld [vmem:[#allocation6 + $0x1c] sm:$0xf]
  %v801 = vmul.f32 %v764, %v793
  %v802 = vmul.f32 %v768, %v794
  %v803 = vmul.f32 %v772, %v795
  %v804 = vmul.f32 %v776, %v796
  %v805 = vmul.f32 %v780, %v797
  %v806 = vmul.f32 %v784, %v798
  %v807 = vmul.f32 %v788, %v799
  %v808 = vmul.f32 %v792, %v800
  %v809 = vsel %vm526, %v801, 0.0
  %v810 = vrot.slane %v809, 4
  %v811 = vadd.f32 %v809, %v810
  %v812 = vrot.slane %v811, 2
  %v813 = vadd.f32 %v811, %v812
  %v814 = vrot.slane %v813, 1
  %v815 = vadd.f32 %v813, %v814
  %v816 = vsel %vm526, %v802, 0.0
  %v817 = vrot.slane %v816, 4
  %v818 = vadd.f32 %v816, %v817
  %v819 = vrot.slane %v818, 2
  %v820 = vadd.f32 %v818, %v819
  %v821 = vrot.slane %v820, 1
  %v822 = vadd.f32 %v820, %v821
  %v823 = vsel %vm526, %v803, 0.0
  %v824 = vrot.slane %v823, 4
  %v825 = vadd.f32 %v823, %v824
  %v826 = vrot.slane %v825, 2
  %v827 = vadd.f32 %v825, %v826
  %v828 = vrot.slane %v827, 1
  %v829 = vadd.f32 %v827, %v828
  %v830 = vsel %vm526, %v804, 0.0
  %v831 = vrot.slane %v830, 4
  %v832 = vadd.f32 %v830, %v831
  %v833 = vrot.slane %v832, 2
  %v834 = vadd.f32 %v832, %v833
  %v835 = vrot.slane %v834, 1
  %v836 = vadd.f32 %v834, %v835
  %v837 = vsel %vm526, %v805, 0.0
  %v838 = vrot.slane %v837, 4
  %v839 = vadd.f32 %v837, %v838
  %v840 = vrot.slane %v839, 2
  %v841 = vadd.f32 %v839, %v840
  %v842 = vrot.slane %v841, 1
  %v843 = vadd.f32 %v841, %v842
  %v844 = vsel %vm526, %v806, 0.0
  %v845 = vrot.slane %v844, 4
  %v846 = vadd.f32 %v844, %v845
  %v847 = vrot.slane %v846, 2
  %v848 = vadd.f32 %v846, %v847
  %v849 = vrot.slane %v848, 1
  %v850 = vadd.f32 %v848, %v849
  %v851 = vsel %vm526, %v807, 0.0
  %v852 = vrot.slane %v851, 4
  %v853 = vadd.f32 %v851, %v852
  %v854 = vrot.slane %v853, 2
  %v855 = vadd.f32 %v853, %v854
  %v856 = vrot.slane %v855, 1
  %v857 = vadd.f32 %v855, %v856
  %v858 = vsel %vm526, %v808, 0.0
  %v859 = vrot.slane %v858, 4
  %v860 = vadd.f32 %v858, %v859
  %v861 = vrot.slane %v860, 2
  %v862 = vadd.f32 %v860, %v861
  %v863 = vrot.slane %v862, 1
  %v864 = vadd.f32 %v862, %v863
  %vm873 = vcmask 1041409
  %v874 = vsel %vm873, %v822, %v815
  %vm875 = vcmask 1042434
  %v876 = vsel %vm875, %v829, %v874
  %vm877 = vcmask 1043459
  %v878 = vsel %vm877, %v836, %v876
  %vm879 = vcmask 1044484
  %v880 = vsel %vm879, %v843, %v878
  %vm881 = vcmask 1045509
  %v882 = vsel %vm881, %v850, %v880
  %vm883 = vcmask 1046534
  %v884 = vsel %vm883, %v857, %v882
  %vm885 = vcmask 1047559
  %v886 = vsel %vm885, %v864, %v884
  %888 = vst.msk [vmem:[#allocation4] sm:$0xff] %vm153, %v886
  %v889 = vmul.f32 %v409, %v258
  %v891 = vcombine.high %v409, %v409
  %v893 = vunpack.c.l.s4 1966171168
  %v894 = vunpack.c.0.s8 %v893
  %v895 = vlaneseq
  %v896 = vshrl.u32 %v895, 7
  %v897 = vsub.s32 %v894, %v896
  %v898 = vrot.slane %v409, %v897
  %v900 = vunpack.c.l.s4 1966171168
  %v901 = vunpack.c.0.s8 %v900
  %v902 = vlaneseq
  %v903 = vshrl.u32 %v902, 7
  %v904 = vsub.s32 %v901, %v903
  %v905 = vrot.slane %v891, %v904
  %v906 = vcombine.high %v898, %v898
  %v907 = vcombine.high %v905, %v905
  %v909 = vunpack.c.l.s4 1966171168
  %v910 = vunpack.c.0.s8 %v909
  %v911 = vlaneseq
  %v912 = vshrl.u32 %v911, 7
  %v913 = vsub.s32 %v910, %v912
  %v914 = vrot.slane %v898, %v913
  %v916 = vunpack.c.l.s4 1966171168
  %v917 = vunpack.c.0.s8 %v916
  %v918 = vlaneseq
  %v919 = vshrl.u32 %v918, 7
  %v920 = vsub.s32 %v917, %v919
  %v921 = vrot.slane %v905, %v920
  %v923 = vunpack.c.l.s4 1966171168
  %v924 = vunpack.c.0.s8 %v923
  %v925 = vlaneseq
  %v926 = vshrl.u32 %v925, 7
  %v927 = vsub.s32 %v924, %v926
  %v928 = vrot.slane %v906, %v927
  %v930 = vunpack.c.l.s4 1966171168
  %v931 = vunpack.c.0.s8 %v930
  %v932 = vlaneseq
  %v933 = vshrl.u32 %v932, 7
  %v934 = vsub.s32 %v931, %v933
  %v935 = vrot.slane %v907, %v934
  %v936 = vcombine.high %v914, %v914
  %v937 = vcombine.high %v921, %v921
  %v938 = vcombine.high %v928, %v928
  %v939 = vcombine.high %v935, %v935
  %v940 = vlaneseq
  %v941 = vshrl.u32 %v940, 7
  %v942 = vsub.s32 0, %v941
  %v943 = vrot.slane %v914, %v942
  %v944 = vlaneseq
  %v945 = vshrl.u32 %v944, 7
  %v946 = vsub.s32 0, %v945
  %v947 = vrot.slane %v928, %v946
  %v948 = vlaneseq
  %v949 = vshrl.u32 %v948, 7
  %v950 = vsub.s32 0, %v949
  %v951 = vrot.slane %v936, %v950
  %v952 = vlaneseq
  %v953 = vshrl.u32 %v952, 7
  %v954 = vsub.s32 0, %v953
  %v955 = vrot.slane %v938, %v954
  %v956 = vlaneseq
  %v957 = vshrl.u32 %v956, 7
  %v958 = vsub.s32 0, %v957
  %v959 = vrot.slane %v921, %v958
  %v960 = vlaneseq
  %v961 = vshrl.u32 %v960, 7
  %v962 = vsub.s32 0, %v961
  %v963 = vrot.slane %v935, %v962
  %v964 = vlaneseq
  %v965 = vshrl.u32 %v964, 7
  %v966 = vsub.s32 0, %v965
  %v967 = vrot.slane %v937, %v966
  %v968 = vlaneseq
  %v969 = vshrl.u32 %v968, 7
  %v970 = vsub.s32 0, %v969
  %v971 = vrot.slane %v939, %v970
  %v980 = vmul.f32 %v943, %v410
  %v981 = vmul.f32 %v947, %v410
  %v982 = vmul.f32 %v951, %v410
  %v983 = vmul.f32 %v955, %v410
  %v984 = vmul.f32 %v959, %v410
  %v985 = vmul.f32 %v963, %v410
  %v986 = vmul.f32 %v967, %v410
  %v987 = vmul.f32 %v971, %v410
  %v988 = vmul.f32 %v980, 1.442695
  %v989 = vpow.pop %v988
  %v990 = vmul.f32 %v981, 1.442695
  %v991 = vpow.pop %v990
  %v992 = vmul.f32 %v982, 1.442695
  %v993 = vpow.pop %v992
  %v994 = vmul.f32 %v983, 1.442695
  %v995 = vpow.pop %v994
  %v996 = vmul.f32 %v984, 1.442695
  %v997 = vpow.pop %v996
  %v998 = vmul.f32 %v985, 1.442695
  %v999 = vpow.pop %v998
  %v1000 = vmul.f32 %v986, 1.442695
  %v1001 = vpow.pop %v1000
  %v1002 = vmul.f32 %v987, 1.442695
  %v1003 = vpow.pop %v1002
  %1004 = vst.msk [vmem:[#allocation5] sm:$0xf] %vm526, %v989
  %1005 = vst.msk [vmem:[#allocation5 + $0x4] sm:$0xf] %vm526, %v991
  %1006 = vst.msk [vmem:[#allocation5 + $0x8] sm:$0xf] %vm526, %v993
  %1007 = vst.msk [vmem:[#allocation5 + $0xc] sm:$0xf] %vm526, %v995
  %1008 = vst.msk [vmem:[#allocation5 + $0x10] sm:$0xf] %vm526, %v997
  %1009 = vst.msk [vmem:[#allocation5 + $0x14] sm:$0xf] %vm526, %v999
  %1010 = vst.msk [vmem:[#allocation5 + $0x18] sm:$0xf] %vm526, %v1001
  %1011 = vst.msk [vmem:[#allocation5 + $0x1c] sm:$0xf] %vm526, %v1003
  %v1012 = vlaneseq
  %v1013 = vshrl.u32 %v1012, 7
  %v1014 = vsub.s32 0, %v1013
  %v1015 = vrot.slane %v333, %v1014
  %s1017 = sor.u32 256, 2
  %1018 = vbcast.lane.b32.xlu0 %v1015, %s1017
  %v1019 = vpop.permute.xlu0 %1018
  %v1020 = vlaneseq
  %v1021 = vshrl.u32 %v1020, 7
  %v1022 = vsub.s32 1, %v1021
  %v1023 = vrot.slane %v333, %v1022
  %s1025 = sor.u32 256, 2
  %1026 = vbcast.lane.b32.xlu0 %v1023, %s1025
  %v1027 = vpop.permute.xlu0 %1026
  %v1028 = vlaneseq
  %v1029 = vshrl.u32 %v1028, 7
  %v1030 = vsub.s32 2, %v1029
  %v1031 = vrot.slane %v333, %v1030
  %s1033 = sor.u32 256, 2
  %1034 = vbcast.lane.b32.xlu0 %v1031, %s1033
  %v1035 = vpop.permute.xlu0 %1034
  %v1036 = vlaneseq
  %v1037 = vshrl.u32 %v1036, 7
  %v1038 = vsub.s32 3, %v1037
  %v1039 = vrot.slane %v333, %v1038
  %s1041 = sor.u32 256, 2
  %1042 = vbcast.lane.b32.xlu0 %v1039, %s1041
  %v1043 = vpop.permute.xlu0 %1042
  %v1044 = vlaneseq
  %v1045 = vshrl.u32 %v1044, 7
  %v1046 = vsub.s32 4, %v1045
  %v1047 = vrot.slane %v333, %v1046
  %s1049 = sor.u32 256, 2
  %1050 = vbcast.lane.b32.xlu0 %v1047, %s1049
  %v1051 = vpop.permute.xlu0 %1050
  %v1052 = vlaneseq
  %v1053 = vshrl.u32 %v1052, 7
  %v1054 = vsub.s32 5, %v1053
  %v1055 = vrot.slane %v333, %v1054
  %s1057 = sor.u32 256, 2
  %1058 = vbcast.lane.b32.xlu0 %v1055, %s1057
  %v1059 = vpop.permute.xlu0 %1058
  %v1060 = vlaneseq
  %v1061 = vshrl.u32 %v1060, 7
  %v1062 = vsub.s32 6, %v1061
  %v1063 = vrot.slane %v333, %v1062
  %s1065 = sor.u32 256, 2
  %1066 = vbcast.lane.b32.xlu0 %v1063, %s1065
  %v1067 = vpop.permute.xlu0 %1066
  %v1068 = vlaneseq
  %v1069 = vshrl.u32 %v1068, 7
  %v1070 = vsub.s32 7, %v1069
  %v1071 = vrot.slane %v333, %v1070
  %s1073 = sor.u32 256, 2
  %1074 = vbcast.lane.b32.xlu0 %v1071, %s1073
  %v1075 = vpop.permute.xlu0 %1074
  %v1077 = vcombine.high %v889, %v889
  %v1079 = vunpack.c.l.s4 1966171168
  %v1080 = vunpack.c.0.s8 %v1079
  %v1081 = vlaneseq
  %v1082 = vshrl.u32 %v1081, 7
  %v1083 = vsub.s32 %v1080, %v1082
  %v1084 = vrot.slane %v889, %v1083
  %v1086 = vunpack.c.l.s4 1966171168
  %v1087 = vunpack.c.0.s8 %v1086
  %v1088 = vlaneseq
  %v1089 = vshrl.u32 %v1088, 7
  %v1090 = vsub.s32 %v1087, %v1089
  %v1091 = vrot.slane %v1077, %v1090
  %v1092 = vcombine.high %v1084, %v1084
  %v1093 = vcombine.high %v1091, %v1091
  %v1095 = vunpack.c.l.s4 1966171168
  %v1096 = vunpack.c.0.s8 %v1095
  %v1097 = vlaneseq
  %v1098 = vshrl.u32 %v1097, 7
  %v1099 = vsub.s32 %v1096, %v1098
  %v1100 = vrot.slane %v1084, %v1099
  %v1102 = vunpack.c.l.s4 1966171168
  %v1103 = vunpack.c.0.s8 %v1102
  %v1104 = vlaneseq
  %v1105 = vshrl.u32 %v1104, 7
  %v1106 = vsub.s32 %v1103, %v1105
  %v1107 = vrot.slane %v1091, %v1106
  %v1109 = vunpack.c.l.s4 1966171168
  %v1110 = vunpack.c.0.s8 %v1109
  %v1111 = vlaneseq
  %v1112 = vshrl.u32 %v1111, 7
  %v1113 = vsub.s32 %v1110, %v1112
  %v1114 = vrot.slane %v1092, %v1113
  %v1116 = vunpack.c.l.s4 1966171168
  %v1117 = vunpack.c.0.s8 %v1116
  %v1118 = vlaneseq
  %v1119 = vshrl.u32 %v1118, 7
  %v1120 = vsub.s32 %v1117, %v1119
  %v1121 = vrot.slane %v1093, %v1120
  %v1122 = vcombine.high %v1100, %v1100
  %v1123 = vcombine.high %v1107, %v1107
  %v1124 = vcombine.high %v1114, %v1114
  %v1125 = vcombine.high %v1121, %v1121
  %v1126 = vlaneseq
  %v1127 = vshrl.u32 %v1126, 7
  %v1128 = vsub.s32 0, %v1127
  %v1129 = vrot.slane %v1100, %v1128
  %v1130 = vlaneseq
  %v1131 = vshrl.u32 %v1130, 7
  %v1132 = vsub.s32 0, %v1131
  %v1133 = vrot.slane %v1114, %v1132
  %v1134 = vlaneseq
  %v1135 = vshrl.u32 %v1134, 7
  %v1136 = vsub.s32 0, %v1135
  %v1137 = vrot.slane %v1122, %v1136
  %v1138 = vlaneseq
  %v1139 = vshrl.u32 %v1138, 7
  %v1140 = vsub.s32 0, %v1139
  %v1141 = vrot.slane %v1124, %v1140
  %v1142 = vlaneseq
  %v1143 = vshrl.u32 %v1142, 7
  %v1144 = vsub.s32 0, %v1143
  %v1145 = vrot.slane %v1107, %v1144
  %v1146 = vlaneseq
  %v1147 = vshrl.u32 %v1146, 7
  %v1148 = vsub.s32 0, %v1147
  %v1149 = vrot.slane %v1121, %v1148
  %v1150 = vlaneseq
  %v1151 = vshrl.u32 %v1150, 7
  %v1152 = vsub.s32 0, %v1151
  %v1153 = vrot.slane %v1123, %v1152
  %v1154 = vlaneseq
  %v1155 = vshrl.u32 %v1154, 7
  %v1156 = vsub.s32 0, %v1155
  %v1157 = vrot.slane %v1125, %v1156
  %v1166 = vmul.f32 %v1019, %v1129
  %v1167 = vmul.f32 %v1027, %v1133
  %v1168 = vmul.f32 %v1035, %v1137
  %v1169 = vmul.f32 %v1043, %v1141
  %v1170 = vmul.f32 %v1051, %v1145
  %v1171 = vmul.f32 %v1059, %v1149
  %v1172 = vmul.f32 %v1067, %v1153
  %v1173 = vmul.f32 %v1075, %v1157
  %1174 = vst.msk [vmem:[#allocation6] sm:$0xf] %vm526, %v1166
  %1175 = vst.msk [vmem:[#allocation6 + $0x4] sm:$0xf] %vm526, %v1167
  %1176 = vst.msk [vmem:[#allocation6 + $0x8] sm:$0xf] %vm526, %v1168
  %1177 = vst.msk [vmem:[#allocation6 + $0xc] sm:$0xf] %vm526, %v1169
  %1178 = vst.msk [vmem:[#allocation6 + $0x10] sm:$0xf] %vm526, %v1170
  %1179 = vst.msk [vmem:[#allocation6 + $0x14] sm:$0xf] %vm526, %v1171
  %1180 = vst.msk [vmem:[#allocation6 + $0x18] sm:$0xf] %vm526, %v1172
  %1181 = vst.msk [vmem:[#allocation6 + $0x1c] sm:$0xf] %vm526, %v1173
  %s1182 = scalar_lea.vmem [#allocation7], 4
  %v1183 = vld [vmem:[%s1182] sm:$0xf]
  %v1184 = vld [vmem:[#allocation5] sm:$0xf]
  %v1185 = vmul.f32 %v1184, %v1183
  %v1186 = vld [vmem:[#allocation6] sm:$0xf]
  %v1187 = vadd.f32 %v1185, %v1186
  %1188 = vst.msk [vmem:[#allocation6] sm:$0xf] %vm526, %v1187
  %v1189 = vld [vmem:[%s711] sm:$0xf]
  %v1190 = vmul.f32 %v1189, %v1187
  %v1191 = vld [vmem:[%s714] sm:$0xf]
  %v1192 = vadd.f32 %v1190, %v1191
  %1193 = vst.msk [vmem:[%s714] sm:$0xf] %vm526, %v1192
  %v1194 = vld [vmem:[%s718] sm:$0xf]
  %v1195 = vmul.f32 %v1194, %v1192
  %v1196 = vld [vmem:[%s721] sm:$0xf]
  %v1197 = vadd.f32 %v1195, %v1196
  %1198 = vst.msk [vmem:[%s721] sm:$0xf] %vm526, %v1197
  %v1199 = vld [vmem:[%s725] sm:$0xf]
  %v1200 = vmul.f32 %v1199, %v1197
  %v1201 = vld [vmem:[%s728] sm:$0xf]
  %v1202 = vadd.f32 %v1200, %v1201
  %1203 = vst.msk [vmem:[%s728] sm:$0xf] %vm526, %v1202
  %v1204 = vld [vmem:[%s732] sm:$0xf]
  %v1205 = vmul.f32 %v1204, %v1202
  %v1206 = vld [vmem:[%s735] sm:$0xf]
  %v1207 = vadd.f32 %v1205, %v1206
  %1208 = vst.msk [vmem:[%s735] sm:$0xf] %vm526, %v1207
  %v1209 = vld [vmem:[%s739] sm:$0xf]
  %v1210 = vmul.f32 %v1209, %v1207
  %v1211 = vld [vmem:[%s742] sm:$0xf]
  %v1212 = vadd.f32 %v1210, %v1211
  %1213 = vst.msk [vmem:[%s742] sm:$0xf] %vm526, %v1212
  %v1214 = vld [vmem:[%s746] sm:$0xf]
  %v1215 = vmul.f32 %v1214, %v1212
  %v1216 = vld [vmem:[%s749] sm:$0xf]
  %v1217 = vadd.f32 %v1215, %v1216
  %1218 = vst.msk [vmem:[%s749] sm:$0xf] %vm526, %v1217
  %v1219 = vld [vmem:[%s753] sm:$0xf]
  %v1220 = vmul.f32 %v1219, %v1217
  %v1221 = vld [vmem:[%s756] sm:$0xf]
  %v1222 = vadd.f32 %v1220, %v1221
  %1223 = vst.msk [vmem:[%s756] sm:$0xf] %vm526, %v1222
  %1224 = vst.msk [vmem:[%s1182] sm:$0xf] %vm526, %v1222
  %s1226 = sor.u32 256, 6
  %1227 = vbcast.lane.b32.xlu0 %v1015, %s1226
  %v1228 = vpop.permute.xlu0 %1227
  %s1230 = sor.u32 256, 6
  %1231 = vbcast.lane.b32.xlu0 %v1023, %s1230
  %v1232 = vpop.permute.xlu0 %1231
  %s1234 = sor.u32 256, 6
  %1235 = vbcast.lane.b32.xlu0 %v1031, %s1234
  %v1236 = vpop.permute.xlu0 %1235
  %s1238 = sor.u32 256, 6
  %1239 = vbcast.lane.b32.xlu0 %v1039, %s1238
  %v1240 = vpop.permute.xlu0 %1239
  %s1242 = sor.u32 256, 6
  %1243 = vbcast.lane.b32.xlu0 %v1047, %s1242
  %v1244 = vpop.permute.xlu0 %1243
  %s1246 = sor.u32 256, 6
  %1247 = vbcast.lane.b32.xlu0 %v1055, %s1246
  %v1248 = vpop.permute.xlu0 %1247
  %s1250 = sor.u32 256, 6
  %1251 = vbcast.lane.b32.xlu0 %v1063, %s1250
  %v1252 = vpop.permute.xlu0 %1251
  %s1254 = sor.u32 256, 6
  %1255 = vbcast.lane.b32.xlu0 %v1071, %s1254
  %v1256 = vpop.permute.xlu0 %1255
  %v1257 = vld [vmem:[#allocation6] sm:$0xf]
  %v1258 = vld [vmem:[#allocation6 + $0x4] sm:$0xf]
  %v1259 = vld [vmem:[#allocation6 + $0x8] sm:$0xf]
  %v1260 = vld [vmem:[#allocation6 + $0xc] sm:$0xf]
  %v1261 = vld [vmem:[#allocation6 + $0x10] sm:$0xf]
  %v1262 = vld [vmem:[#allocation6 + $0x14] sm:$0xf]
  %v1263 = vld [vmem:[#allocation6 + $0x18] sm:$0xf]
  %v1264 = vld [vmem:[#allocation6 + $0x1c] sm:$0xf]
  %v1265 = vmul.f32 %v1228, %v1257
  %v1266 = vmul.f32 %v1232, %v1258
  %v1267 = vmul.f32 %v1236, %v1259
  %v1268 = vmul.f32 %v1240, %v1260
  %v1269 = vmul.f32 %v1244, %v1261
  %v1270 = vmul.f32 %v1248, %v1262
  %v1271 = vmul.f32 %v1252, %v1263
  %v1272 = vmul.f32 %v1256, %v1264
  %v1273 = vsel %vm526, %v1265, 0.0
  %v1274 = vrot.slane %v1273, 4
  %v1275 = vadd.f32 %v1273, %v1274
  %v1276 = vrot.slane %v1275, 2
  %v1277 = vadd.f32 %v1275, %v1276
  %v1278 = vrot.slane %v1277, 1
  %v1279 = vadd.f32 %v1277, %v1278
  %v1280 = vsel %vm526, %v1266, 0.0
  %v1281 = vrot.slane %v1280, 4
  %v1282 = vadd.f32 %v1280, %v1281
  %v1283 = vrot.slane %v1282, 2
  %v1284 = vadd.f32 %v1282, %v1283
  %v1285 = vrot.slane %v1284, 1
  %v1286 = vadd.f32 %v1284, %v1285
  %v1287 = vsel %vm526, %v1267, 0.0
  %v1288 = vrot.slane %v1287, 4
  %v1289 = vadd.f32 %v1287, %v1288
  %v1290 = vrot.slane %v1289, 2
  %v1291 = vadd.f32 %v1289, %v1290
  %v1292 = vrot.slane %v1291, 1
  %v1293 = vadd.f32 %v1291, %v1292
  %v1294 = vsel %vm526, %v1268, 0.0
  %v1295 = vrot.slane %v1294, 4
  %v1296 = vadd.f32 %v1294, %v1295
  %v1297 = vrot.slane %v1296, 2
  %v1298 = vadd.f32 %v1296, %v1297
  %v1299 = vrot.slane %v1298, 1
  %v1300 = vadd.f32 %v1298, %v1299
  %v1301 = vsel %vm526, %v1269, 0.0
  %v1302 = vrot.slane %v1301, 4
  %v1303 = vadd.f32 %v1301, %v1302
  %v1304 = vrot.slane %v1303, 2
  %v1305 = vadd.f32 %v1303, %v1304
  %v1306 = vrot.slane %v1305, 1
  %v1307 = vadd.f32 %v1305, %v1306
  %v1308 = vsel %vm526, %v1270, 0.0
  %v1309 = vrot.slane %v1308, 4
  %v1310 = vadd.f32 %v1308, %v1309
  %v1311 = vrot.slane %v1310, 2
  %v1312 = vadd.f32 %v1310, %v1311
  %v1313 = vrot.slane %v1312, 1
  %v1314 = vadd.f32 %v1312, %v1313
  %v1315 = vsel %vm526, %v1271, 0.0
  %v1316 = vrot.slane %v1315, 4
  %v1317 = vadd.f32 %v1315, %v1316
  %v1318 = vrot.slane %v1317, 2
  %v1319 = vadd.f32 %v1317, %v1318
  %v1320 = vrot.slane %v1319, 1
  %v1321 = vadd.f32 %v1319, %v1320
  %v1322 = vsel %vm526, %v1272, 0.0
  %v1323 = vrot.slane %v1322, 4
  %v1324 = vadd.f32 %v1322, %v1323
  %v1325 = vrot.slane %v1324, 2
  %v1326 = vadd.f32 %v1324, %v1325
  %v1327 = vrot.slane %v1326, 1
  %v1328 = vadd.f32 %v1326, %v1327
  %v1337 = vsel %vm873, %v1286, %v1279
  %v1338 = vsel %vm875, %v1293, %v1337
  %v1339 = vsel %vm877, %v1300, %v1338
  %v1340 = vsel %vm879, %v1307, %v1339
  %v1341 = vsel %vm881, %v1314, %v1340
  %v1342 = vsel %vm883, %v1321, %v1341
  %v1343 = vsel %vm885, %v1328, %v1342
  %1345 = vst.msk [vmem:[#allocation4 + $0x8] sm:$0xff] %vm153, %v1343
  %v1346 = vld [vmem:[#allocation4] sm:$0xff]
  %v1347 = vld [vmem:[#allocation4 + $0x8] sm:$0xff]
  %v1348 = vld [vmem:[%s10] sm:$0x1]
  %v1350 = vlaneseq
  %v1351 = vshrl.u32 %v1350, 7
  %v1352 = vsub.s32 0, %v1351
  %v1353 = vrot.slane %v1348, %v1352
  %v1355 = vmul.f32 %v257, %v1353
  %v1356 = vmul.f32 %v258, %v1353
  %v1357 = vadd.f32 %v1346, %v1355
  %v1358 = vadd.f32 %v1347, %v1356
  %v1359 = vsub.f32 0.0, %v144
  %v1360 = vsub.f32 0.0, %v147
  %v1361 = vmul.f32 %v1359, 1.442695
  %v1362 = vpow.pop %v1361
  %v1363 = vmul.f32 %v1360, 1.442695
  %v1364 = vpow.pop %v1363
  %v1365 = vadd.f32 %v1362, 1.0
  %v1366 = vadd.f32 %v1364, 1.0
  %v1367 = vrcp.pop %v1365
  %v1368 = vmul.f32 1.0, %v1367
  %v1369 = vrcp.pop %v1366
  %v1370 = vmul.f32 1.0, %v1369
  %v1371 = vmul.f32 %v144, %v1368
  %v1372 = vmul.f32 %v147, %v1370
  %1375 = vrot.lane.b32.xlu0 %v1371, 64
  %v1376 = vpop.permute.xlu0 %1375
  %1377 = vrot.lane.b32.xlu0 %v1372, 64
  %v1378 = vpop.permute.xlu0 %1377
  %v1381 = vmul.f32 %v1357, %v1376
  %v1382 = vmul.f32 %v1358, %v1378
  %v1383 = vpack.c.bf16 %v1382, %v1381
  %v1384 = vld [vmem:[%s11] sm:$0xf]
  %v1385 = vld [vmem:[%s11 + $0x4] sm:$0xf]
  %v1386 = vld [vmem:[%s11 + $0x8] sm:$0xf]
  %v1387 = vld [vmem:[%s11 + $0xc] sm:$0xf]
  %v1388 = vld [vmem:[%s11 + $0x10] sm:$0xf]
  %v1389 = vld [vmem:[%s11 + $0x14] sm:$0xf]
  %v1390 = vld [vmem:[%s11 + $0x18] sm:$0xf]
  %v1391 = vld [vmem:[%s11 + $0x1c] sm:$0xf]
  %v1400 = vunpack.c.l.b16 %v1384
  %v1401 = vunpack.c.l.b16 %v1385
  %v1402 = vunpack.c.l.b16 %v1386
  %v1403 = vunpack.c.l.b16 %v1387
  %v1404 = vunpack.c.l.b16 %v1388
  %v1405 = vunpack.c.l.b16 %v1389
  %v1406 = vunpack.c.l.b16 %v1390
  %v1407 = vunpack.c.l.b16 %v1391
  %v1408 = vpack.c.b16 %v1401, %v1400
  %v1409 = vpack.c.b16 %v1403, %v1402
  %v1410 = vpack.c.b16 %v1405, %v1404
  %v1411 = vpack.c.b16 %v1407, %v1406
  %v1417 = vsel %vm153, %v1383, 0
  %1419 = vmatprep.subr.bf16.mxu0 0
  %1420 = vmatpush1.bf16.msra.mxu0 %v1408
  %1421 = vmatprep.subr.bf16.mxu0 0
  %1422 = vmatpush1.bf16.msra.mxu0 %v1409
  %1423 = vmatprep.subr.bf16.mxu0 0
  %1424 = vmatpush1.bf16.msra.mxu0 %v1410
  %1425 = vmatprep.subr.bf16.mxu0 0
  %1426 = vmatpush1.bf16.msra.mxu0 %v1411
  %1427 = vmatprep.subr.bf16.mxu0 0
  %1428 = vmatpush1.bf16.msra.mxu0 0
  %1429 = vmatprep.subr.bf16.mxu0 0
  %1430 = vmatpush1.bf16.msra.mxu0 0
  %1431 = vmatprep.subr.bf16.mxu0 0
  %1432 = vmatpush1.bf16.msra.mxu0 0
  %1433 = vmatprep.subr.bf16.mxu0 0
  %1434 = vmatpush1.bf16.msra.mxu0 0
  %1435 = vmatprep.subr.bf16.mxu0 0
  %1436 = vmatpush1.bf16.msra.mxu0 0
  %1437 = vmatprep.subr.bf16.mxu0 0
  %1438 = vmatpush1.bf16.msra.mxu0 0
  %1439 = vmatprep.subr.bf16.mxu0 0
  %1440 = vmatpush1.bf16.msra.mxu0 0
  %1441 = vmatprep.subr.bf16.mxu0 0
  %1442 = vmatpush1.bf16.msra.mxu0 0
  %1443 = vmatprep.subr.bf16.mxu0 0
  %1444 = vmatpush1.bf16.msra.mxu0 0
  %1445 = vmatprep.subr.bf16.mxu0 0
  %1446 = vmatpush1.bf16.msra.mxu0 0
  %1447 = vmatprep.subr.bf16.mxu0 0
  %1448 = vmatpush1.bf16.msra.mxu0 0
  %1449 = vmatprep.subr.bf16.mxu0 0
  %1450 = vmatpush1.bf16.msra.mxu0 0
  %1451 = vmatprep.mubr.bf16.mxu0 0
  %1452 = vmatmul.mubr.bf16.gmra.mrb[0].mxu0 %v1417
  %v1453 = vpop.f32.mrb[0].mxu0
  %v1454 = vadd.f32 0.0, %v1453
  %v1455 = vpop.f32.mrb[0].mxu0
  %v1456 = vpop.f32.mrb[0].mxu0
  %v1457 = vadd.f32 0.0, %v1456
  %v1458 = vpop.f32.mrb[0].mxu0
  %1459 = vdwg.mxu0
  %1460 = vst.msk [vmem:[%s12] sm:$0xff] %vm60, %v1454
  %1461 = vst.msk [vmem:[%s12 + $0x8] sm:$0xff] %vm60, %v1457
  // Predicated region
  $region54: #{mamba_model_forward.3} parent=0 // pred_check
    _
  $region55: #{mamba_model_forward.3} parent=0 // pred_check_branch
    %1463 = sbr.rel (0) target = $region57
  $region56: #{mamba_model_forward.3} parent=0 // pred_region
    _
  $region57: #{mamba_model_forward.3} parent=0 // pred_fallthru
    _
  // Predicated region
  $region58: #{mamba_model_forward.3} parent=0 // pred_check
    _
  $region59: #{mamba_model_forward.3} parent=0 // pred_check_branch
    %1465 = sbr.rel (0) target = $region61
  $region60: #{mamba_model_forward.3} parent=0 // pred_region
    _
  $region61: #{mamba_model_forward.3} parent=0 // pred_fallthru
    _
  // Predicated region
  $region62: #{mamba_model_forward.3} parent=0 // pred_check
    _
  $region63: #{mamba_model_forward.3} parent=0 // pred_check_branch
    %1467 = sbr.rel (0) target = $region65
  $region64: #{mamba_model_forward.3} parent=0 // pred_region
    _
  $region65: #{mamba_model_forward.3} parent=0 // pred_fallthru
    _
  // Predicated region
  $region66: #{mamba_model_forward.3} parent=0 // pred_check
    _
  $region67: #{mamba_model_forward.3} parent=0 // pred_check_branch
    %1469 = sbr.rel (0) target = $region69
  $region68: #{mamba_model_forward.3} parent=0 // pred_region
    _
  $region69: #{mamba_model_forward.3} parent=0 // pred_fallthru
    _

</llo_original>
